<compile_context>
chip_gen: v7x
topology: tpu7x:2x2x1
jax: 0.10.0
libtpu: 0.0.40
codegen_flags: <defaults>
</compile_context>

<pallas_src>
import functools

import jax
import jax.numpy as jnp
import numpy as np
from jax.experimental import pallas as pl
from jax.experimental.pallas import tpu as pltpu


# ----------------------------------------------------------------------------
# Fused kernel: LSTM + head + MHA(mean) + concat.  Gridless (single step);
# targets small shapes whose working set fits in VMEM (the benchmark config).
# ----------------------------------------------------------------------------
def _unimodal_fused_kernel(x_ref, wih_ref, bg_ref, whh_ref,
                           wl_ref, bl_ref, wf_ref, bf_ref,
                           wq_ref, bq_ref, wk_ref, bk_ref, wv_ref, bv_ref,
                           wo_ref, bo_ref,
                           out_ref, h_ref,
                           y_sc, *, num_heads):
    f32 = jnp.float32
    B, T, E = x_ref.shape
    H = whh_ref.shape[0]
    H4 = whh_ref.shape[1]
    hd = H // num_heads
    scale = 1.0 / float(np.sqrt(hd))

    # ---- hoisted input projection: ONE GEMM for all T timesteps ----------
    wih = wih_ref[...]                                    # (E, 4H)
    whh = whh_ref[...]                                    # (H, 4H)
    xv = x_ref[...].reshape(B * T, E)                     # b-major rows
    gx = (jnp.dot(xv, wih, preferred_element_type=f32)
          + bg_ref[...]).reshape(B, T, H4)                # (B, T, 4H)

    # ---- LSTM recurrence (fully unrolled; T is small) ---------------------
    h = jnp.zeros((B, H), f32)
    c = jnp.zeros((B, H), f32)
    for t in range(T):
        gates = gx[:, t, :] + jnp.dot(h, whh, preferred_element_type=f32)
        # One sigmoid + one tanh over the full lane-dense (B, 4H) gate vreg;
        # slice afterwards (PyTorch gate order i, f, g, o).
        sg = jax.nn.sigmoid(gates)
        th = jnp.tanh(gates)
        i_g = sg[:, 0 * H:1 * H]
        f_g = sg[:, 1 * H:2 * H]
        g_g = th[:, 2 * H:3 * H]
        o_g = sg[:, 3 * H:4 * H]
        c = f_g * c + i_g * g_g
        h = o_g * jnp.tanh(c)
        # y stays VMEM-resident in (B, T, H) layout (no HBM round trip).
        y_sc[:, pl.ds(t, 1), :] = h[:, None, :]

    # ---- BiLSTM_Attention head: fc(relu(linear(dropout(h_T)))) -----------
    # TODO(synk): nn.Dropout before `linear` is stochastic in train mode;
    # implemented as identity (eval-mode semantics).
    fh = jnp.maximum(
        jnp.dot(h, wl_ref[...], preferred_element_type=f32) + bl_ref[...], 0.0)
    h_fc = jnp.dot(fh, wf_ref[...], preferred_element_type=f32) + bf_ref[...]
    h_ref[...] = h_fc.astype(h_ref.dtype)

    # ---- MultiheadAttention(y, y, y) + mean over time ---------------------
    y2 = y_sc[...].reshape(B * T, H)                      # lane-dense 2-D GEMMs
    q = (jnp.dot(y2, wq_ref[...], preferred_element_type=f32)
         + bq_ref[...]) * scale
    k = jnp.dot(y2, wk_ref[...], preferred_element_type=f32) + bk_ref[...]
    v = jnp.dot(y2, wv_ref[...], preferred_element_type=f32) + bv_ref[...]
    q3 = q.reshape(B, T, H)
    k3 = k.reshape(B, T, H)
    v3 = v.reshape(B, T, H)

    ctx = []
    for n in range(num_heads):            # heads only; B handled by batched dot
        sl = slice(n * hd, (n + 1) * hd)
        qh = q3[:, :, sl]                 # (B, T, hd)
        kh = k3[:, :, sl]
        vh = v3[:, :, sl]
        s = jnp.einsum("btd,bsd->bts", qh, kh,
                       preferred_element_type=f32)        # (B, T, T)
        s = s - jnp.max(s, axis=-1, keepdims=True)
        p = jnp.exp(s)
        p = p / jnp.sum(p, axis=-1, keepdims=True)
        # TODO(synk): attention dropout is stochastic in train mode; identity
        # here (eval semantics).
        # Fold the time-mean into the attention weights:
        #   mean_t(P @ V) == (mean_t P) @ V   (drops the full PV matmul).
        pbar = jnp.mean(p, axis=1, keepdims=True)         # (B, 1, T)
        ctx_n = jnp.einsum("bqt,btd->bqd", pbar, vh,
                           preferred_element_type=f32)    # (B, 1, hd)
        ctx.append(ctx_n[:, 0, :])                        # (B, hd)
    m = jnp.concatenate(ctx, axis=1)                      # (B, H)
    # out_proj folded AFTER the time-mean (mathematically identical).
    att_mean = (jnp.dot(m, wo_ref[...], preferred_element_type=f32)
                + bo_ref[...])                            # (B, H)

    out_ref[...] = jnp.concatenate([h_fc, att_mean],
                                   axis=1).astype(out_ref.dtype)


# ----------------------------------------------------------------------------
# Wrapper: weight prep (transposes / bias folding) + one pallas_call.
# ----------------------------------------------------------------------------
@functools.partial(jax.jit, static_argnames=("num_heads",))
def unimodal_attention_forward(x, params, num_heads=8):
    """x: (B, T, E) batch_first.  Returns (output (B, 2H), h (B, H))."""
    B, T, E = x.shape
    H = params["w_hh"].shape[1]
    assert H % num_heads == 0
    f32 = jnp.float32

    wih_t = jnp.transpose(params["w_ih"]).astype(f32)                 # (E, 4H)
    bgate = (params["b_ih"] + params["b_hh"]).reshape(1, 4 * H).astype(f32)
    whh_t = jnp.transpose(params["w_hh"]).astype(f32)                 # (H, 4H)
    wl_t = jnp.transpose(params["w_lin"]).astype(f32)                 # (H, H)
    wf_t = jnp.transpose(params["w_fc"]).astype(f32)                  # (H, H)
    ipw = params["in_proj_w"]
    ipb = params["in_proj_b"]
    wq = jnp.transpose(ipw[0 * H:1 * H]).astype(f32)                  # (H, H)
    wk = jnp.transpose(ipw[1 * H:2 * H]).astype(f32)
    wv = jnp.transpose(ipw[2 * H:3 * H]).astype(f32)
    bq = ipb[0 * H:1 * H].reshape(1, H).astype(f32)
    bk = ipb[1 * H:2 * H].reshape(1, H).astype(f32)
    bv = ipb[2 * H:3 * H].reshape(1, H).astype(f32)
    wo = jnp.transpose(params["out_proj_w"]).astype(f32)              # (H, H)
    bo = params["out_proj_b"].reshape(1, H).astype(f32)

    kernel = functools.partial(_unimodal_fused_kernel, num_heads=num_heads)
    out, h_fc = pl.pallas_call(
        kernel,
        out_shape=(jax.ShapeDtypeStruct((B, 2 * H), f32),
                   jax.ShapeDtypeStruct((B, H), f32)),
        scratch_shapes=[pltpu.VMEM((B, T, H), f32)],   # VMEM-resident y
    )(x.astype(f32), wih_t, bgate, whh_t,
      wl_t, params["b_lin"].reshape(1, H).astype(f32),
      wf_t, params["b_fc"].reshape(1, H).astype(f32),
      wq, bq, wk, bk, wv, bv, wo, bo)
    return out, h_fc


def init_params(key, embedding_dim, hidden_dim):
    ks = jax.random.split(key, 12)
    H = hidden_dim
    k = 1.0 / np.sqrt(H)

    def u(kk, shape, lim):
        return jax.random.uniform(kk, shape, dtype=jnp.float32,
                                  minval=-lim, maxval=lim)

    return {
        # LSTM (PyTorch: weight_ih_l0 (4H,E), weight_hh_l0 (4H,H), biases (4H,))
        "w_ih": u(ks[0], (4 * H, embedding_dim), k),
        "w_hh": u(ks[1], (4 * H, H), k),
        "b_ih": u(ks[2], (4 * H,), k),
        "b_hh": u(ks[3], (4 * H,), k),
        # BiLSTM_Attention head: linear (H->H), fc (H->H)
        "w_lin": u(ks[4], (H, H), k),
        "b_lin": u(ks[5], (H,), k),
        "w_fc": u(ks[6], (H, H), k),
        "b_fc": u(ks[7], (H,), k),
        # nn.MultiheadAttention: in_proj (3H,H)+(3H,), out_proj (H,H)+(H,)
        "in_proj_w": u(ks[8], (3 * H, H), k),
        "in_proj_b": u(ks[9], (3 * H,), k),
        "out_proj_w": u(ks[10], (H, H), k),
        "out_proj_b": u(ks[11], (H,), k),
    }


# ----------------------------------------------------------------------------
# Pure-JAX reference (correctness check only)
# ----------------------------------------------------------------------------
def _reference(x, p, num_heads=8):
    B, T, E = x.shape
    H = p["w_hh"].shape[1]
    h = jnp.zeros((B, H), jnp.float32)
    c = jnp.zeros((B, H), jnp.float32)
    outs = []
    for t in range(T):
        g = x[:, t] @ p["w_ih"].T + h @ p["w_hh"].T + p["b_ih"] + p["b_hh"]
        i_g = jax.nn.sigmoid(g[:, 0 * H:1 * H])
        f_g = jax.nn.sigmoid(g[:, 1 * H:2 * H])
        g_g = jnp.tanh(g[:, 2 * H:3 * H])
        o_g = jax.nn.sigmoid(g[:, 3 * H:4 * H])
        c = f_g * c + i_g * g_g
        h = o_g * jnp.tanh(c)
        outs.append(h)
    y = jnp.stack(outs, axis=0)                                # (T, B, H)
    fh = jnp.maximum(h @ p["w_lin"].T + p["b_lin"], 0.0)
    h_fc = fh @ p["w_fc"].T + p["b_fc"]
    # MultiheadAttention (eval), q = k = v = y, time-major
    hd = H // num_heads
    wq, wk, wv = (p["in_proj_w"][i * H:(i + 1) * H] for i in range(3))
    bq, bk, bv = (p["in_proj_b"][i * H:(i + 1) * H] for i in range(3))
    q = y @ wq.T + bq
    k = y @ wk.T + bk
    v = y @ wv.T + bv
    q = q.reshape(T, B, num_heads, hd).transpose(1, 2, 0, 3)   # (B,nh,T,hd)
    k = k.reshape(T, B, num_heads, hd).transpose(1, 2, 0, 3)
    v = v.reshape(T, B, num_heads, hd).transpose(1, 2, 0, 3)
    s = jnp.einsum("bntd,bnsd->bnts", q, k) / np.sqrt(hd)
    pm = jax.nn.softmax(s, axis=-1)
    ctx = jnp.einsum("bnts,bnsd->bntd", pm, v)
    ctx = ctx.transpose(2, 0, 1, 3).reshape(T, B, H)           # (T,B,H)
    att = ctx @ p["out_proj_w"].T + p["out_proj_b"]
    att_mean = jnp.mean(att, axis=0)                           # (B,H)
    return jnp.concatenate([h_fc, att_mean], axis=1), h_fc


if __name__ == "__main__":
    B, T, E, H = 2, 8, 16, 32
    NUM_HEADS = 8
    key = jax.random.PRNGKey(0)
    kx, kp = jax.random.split(key)
    x = jax.random.normal(kx, (B, T, E), dtype=jnp.float32)
    params = init_params(kp, E, H)

    output, h_fc = unimodal_attention_forward(x, params, num_heads=NUM_HEADS)
    output = jax.block_until_ready(output)
    h_fc = jax.block_until_ready(h_fc)

    ref_out, ref_h = _reference(x, params, num_heads=NUM_HEADS)
    np.testing.assert_allclose(np.asarray(output), np.asarray(ref_out),
                               rtol=2e-3, atol=2e-4)
    np.testing.assert_allclose(np.asarray(h_fc), np.asarray(ref_h),
                               rtol=2e-3, atol=2e-4)

    assert output.shape == (B, 2 * H) and h_fc.shape == (B, H)
    print("KERNEL_OK")
</pallas_src>

<mosaic_0001>
module attributes {stable_mosaic.version = 11 : i64} {
  func.func @_unimodal_fused_kernel(%arg0: memref<2x8x16xf32, #tpu.memory_space<vmem>>, %arg1: memref<16x128xf32, #tpu.memory_space<vmem>>, %arg2: memref<1x128xf32, #tpu.memory_space<vmem>>, %arg3: memref<32x128xf32, #tpu.memory_space<vmem>>, %arg4: memref<32x32xf32, #tpu.memory_space<vmem>>, %arg5: memref<1x32xf32, #tpu.memory_space<vmem>>, %arg6: memref<32x32xf32, #tpu.memory_space<vmem>>, %arg7: memref<1x32xf32, #tpu.memory_space<vmem>>, %arg8: memref<32x32xf32, #tpu.memory_space<vmem>>, %arg9: memref<1x32xf32, #tpu.memory_space<vmem>>, %arg10: memref<32x32xf32, #tpu.memory_space<vmem>>, %arg11: memref<1x32xf32, #tpu.memory_space<vmem>>, %arg12: memref<32x32xf32, #tpu.memory_space<vmem>>, %arg13: memref<1x32xf32, #tpu.memory_space<vmem>>, %arg14: memref<32x32xf32, #tpu.memory_space<vmem>>, %arg15: memref<1x32xf32, #tpu.memory_space<vmem>>, %arg16: memref<2x64xf32, #tpu.memory_space<vmem>>, %arg17: memref<2x32xf32, #tpu.memory_space<vmem>>, %arg18: memref<2x8x32xf32, #tpu.memory_space<vmem>>) attributes {dimension_semantics = [], scalar_prefetch = 0 : i64, scratch_operands = 1 : i64, tpu.core_type = #tpu.core_type<tc>} {
    %c0 = arith.constant 0 : index
    %c0_0 = arith.constant 0 : index
    %0 = vector.load %arg1[%c0, %c0_0] : memref<16x128xf32, #tpu.memory_space<vmem>>, vector<16x128xf32>
    %c0_1 = arith.constant 0 : index
    %c0_2 = arith.constant 0 : index
    %1 = vector.load %arg3[%c0_1, %c0_2] : memref<32x128xf32, #tpu.memory_space<vmem>>, vector<32x128xf32>
    %c0_3 = arith.constant 0 : index
    %c0_4 = arith.constant 0 : index
    %c0_5 = arith.constant 0 : index
    %2 = vector.load %arg0[%c0_3, %c0_4, %c0_5] : memref<2x8x16xf32, #tpu.memory_space<vmem>>, vector<2x8x16xf32>
    %3 = vector.shape_cast %2 : vector<2x8x16xf32> to vector<16x16xf32>
    %cst = arith.constant dense<0.000000e+00> : vector<16x128xf32>
    %4 = tpu.matmul %3, %0, %cst {dimension_numbers = #tpu.dot_dimension_numbers<[1], [0], [0], [1], [0, 0, 1, 1], [], []>} : vector<16x16xf32>, vector<16x128xf32>, vector<16x128xf32> -> vector<16x128xf32>
    %c0_6 = arith.constant 0 : index
    %c0_7 = arith.constant 0 : index
    %5 = vector.load %arg2[%c0_6, %c0_7] : memref<1x128xf32, #tpu.memory_space<vmem>>, vector<1x128xf32>
    %6 = vector.broadcast %5 : vector<1x128xf32> to vector<16x128xf32>
    %7 = arith.addf %4, %6 : vector<16x128xf32>
    %8 = vector.shape_cast %7 : vector<16x128xf32> to vector<2x8x128xf32>
    %cst_8 = arith.constant 0.000000e+00 : f32
    %9 = vector.broadcast %cst_8 : f32 to vector<2x32xf32>
    %cst_9 = arith.constant 0.000000e+00 : f32
    %10 = vector.broadcast %cst_9 : f32 to vector<2x32xf32>
    %11 = vector.extract_strided_slice %8 {offsets = [0, 0, 0], sizes = [2, 1, 128], strides = [1, 1, 1]} : vector<2x8x128xf32> to vector<2x1x128xf32>
    %12 = vector.shape_cast %11 : vector<2x1x128xf32> to vector<2x128xf32>
    %cst_10 = arith.constant dense<0.000000e+00> : vector<2x128xf32>
    %13 = tpu.matmul %9, %1, %cst_10 {dimension_numbers = #tpu.dot_dimension_numbers<[1], [0], [0], [1], [0, 0, 1, 1], [], []>} : vector<2x32xf32>, vector<32x128xf32>, vector<2x128xf32> -> vector<2x128xf32>
    %14 = arith.addf %12, %13 : vector<2x128xf32>
    %15 = arith.negf %14 : vector<2x128xf32>
    %16 = math.exp %15 : vector<2x128xf32>
    %cst_11 = arith.constant 1.000000e+00 : f32
    %17 = vector.broadcast %cst_11 : f32 to vector<2x128xf32>
    %18 = arith.addf %17, %16 : vector<2x128xf32>
    %19 = arith.divf %17, %18 : vector<2x128xf32>
    %20 = math.tanh %14 : vector<2x128xf32>
    %21 = vector.extract_strided_slice %19 {offsets = [0, 0], sizes = [2, 32], strides = [1, 1]} : vector<2x128xf32> to vector<2x32xf32>
    %22 = vector.extract_strided_slice %19 {offsets = [0, 32], sizes = [2, 32], strides = [1, 1]} : vector<2x128xf32> to vector<2x32xf32>
    %23 = vector.extract_strided_slice %20 {offsets = [0, 64], sizes = [2, 32], strides = [1, 1]} : vector<2x128xf32> to vector<2x32xf32>
    %24 = vector.extract_strided_slice %19 {offsets = [0, 96], sizes = [2, 32], strides = [1, 1]} : vector<2x128xf32> to vector<2x32xf32>
    %25 = arith.mulf %22, %10 : vector<2x32xf32>
    %26 = arith.mulf %21, %23 : vector<2x32xf32>
    %27 = arith.addf %25, %26 : vector<2x32xf32>
    %28 = math.tanh %27 : vector<2x32xf32>
    %29 = arith.mulf %24, %28 : vector<2x32xf32>
    %30 = vector.shape_cast %29 : vector<2x32xf32> to vector<2x1x32xf32>
    %c0_12 = arith.constant 0 : index
    %c0_13 = arith.constant 0 : index
    %c0_14 = arith.constant 0 : index
    %31 = vector.load %arg18[%c0_12, %c0_13, %c0_14] : memref<2x8x32xf32, #tpu.memory_space<vmem>>, vector<2x1x32xf32>
    tpu.vector_store %arg18[%c0_12, %c0_13, %c0_14], %30 {strides = array<i32>} : memref<2x8x32xf32, #tpu.memory_space<vmem>>, vector<2x1x32xf32>,
    %32 = vector.extract_strided_slice %8 {offsets = [0, 1, 0], sizes = [2, 1, 128], strides = [1, 1, 1]} : vector<2x8x128xf32> to vector<2x1x128xf32>
    %33 = vector.shape_cast %32 : vector<2x1x128xf32> to vector<2x128xf32>
    %cst_15 = arith.constant dense<0.000000e+00> : vector<2x128xf32>
    %34 = tpu.matmul %29, %1, %cst_15 {dimension_numbers = #tpu.dot_dimension_numbers<[1], [0], [0], [1], [0, 0, 1, 1], [], []>} : vector<2x32xf32>, vector<32x128xf32>, vector<2x128xf32> -> vector<2x128xf32>
    %35 = arith.addf %33, %34 : vector<2x128xf32>
    %36 = arith.negf %35 : vector<2x128xf32>
    %37 = math.exp %36 : vector<2x128xf32>
    %cst_16 = arith.constant 1.000000e+00 : f32
    %38 = vector.broadcast %cst_16 : f32 to vector<2x128xf32>
    %39 = arith.addf %38, %37 : vector<2x128xf32>
    %40 = arith.divf %38, %39 : vector<2x128xf32>
    %41 = math.tanh %35 : vector<2x128xf32>
    %42 = vector.extract_strided_slice %40 {offsets = [0, 0], sizes = [2, 32], strides = [1, 1]} : vector<2x128xf32> to vector<2x32xf32>
    %43 = vector.extract_strided_slice %40 {offsets = [0, 32], sizes = [2, 32], strides = [1, 1]} : vector<2x128xf32> to vector<2x32xf32>
    %44 = vector.extract_strided_slice %41 {offsets = [0, 64], sizes = [2, 32], strides = [1, 1]} : vector<2x128xf32> to vector<2x32xf32>
    %45 = vector.extract_strided_slice %40 {offsets = [0, 96], sizes = [2, 32], strides = [1, 1]} : vector<2x128xf32> to vector<2x32xf32>
    %46 = arith.mulf %43, %27 : vector<2x32xf32>
    %47 = arith.mulf %42, %44 : vector<2x32xf32>
    %48 = arith.addf %46, %47 : vector<2x32xf32>
    %49 = math.tanh %48 : vector<2x32xf32>
    %50 = arith.mulf %45, %49 : vector<2x32xf32>
    %51 = vector.shape_cast %50 : vector<2x32xf32> to vector<2x1x32xf32>
    %c0_17 = arith.constant 0 : index
    %c1 = arith.constant 1 : index
    %c0_18 = arith.constant 0 : index
    %52 = vector.load %arg18[%c0_17, %c1, %c0_18] : memref<2x8x32xf32, #tpu.memory_space<vmem>>, vector<2x1x32xf32>
    tpu.vector_store %arg18[%c0_17, %c1, %c0_18], %51 {strides = array<i32>} : memref<2x8x32xf32, #tpu.memory_space<vmem>>, vector<2x1x32xf32>,
    %53 = vector.extract_strided_slice %8 {offsets = [0, 2, 0], sizes = [2, 1, 128], strides = [1, 1, 1]} : vector<2x8x128xf32> to vector<2x1x128xf32>
    %54 = vector.shape_cast %53 : vector<2x1x128xf32> to vector<2x128xf32>
    %cst_19 = arith.constant dense<0.000000e+00> : vector<2x128xf32>
    %55 = tpu.matmul %50, %1, %cst_19 {dimension_numbers = #tpu.dot_dimension_numbers<[1], [0], [0], [1], [0, 0, 1, 1], [], []>} : vector<2x32xf32>, vector<32x128xf32>, vector<2x128xf32> -> vector<2x128xf32>
    %56 = arith.addf %54, %55 : vector<2x128xf32>
    %57 = arith.negf %56 : vector<2x128xf32>
    %58 = math.exp %57 : vector<2x128xf32>
    %cst_20 = arith.constant 1.000000e+00 : f32
    %59 = vector.broadcast %cst_20 : f32 to vector<2x128xf32>
    %60 = arith.addf %59, %58 : vector<2x128xf32>
    %61 = arith.divf %59, %60 : vector<2x128xf32>
    %62 = math.tanh %56 : vector<2x128xf32>
    %63 = vector.extract_strided_slice %61 {offsets = [0, 0], sizes = [2, 32], strides = [1, 1]} : vector<2x128xf32> to vector<2x32xf32>
    %64 = vector.extract_strided_slice %61 {offsets = [0, 32], sizes = [2, 32], strides = [1, 1]} : vector<2x128xf32> to vector<2x32xf32>
    %65 = vector.extract_strided_slice %62 {offsets = [0, 64], sizes = [2, 32], strides = [1, 1]} : vector<2x128xf32> to vector<2x32xf32>
    %66 = vector.extract_strided_slice %61 {offsets = [0, 96], sizes = [2, 32], strides = [1, 1]} : vector<2x128xf32> to vector<2x32xf32>
    %67 = arith.mulf %64, %48 : vector<2x32xf32>
    %68 = arith.mulf %63, %65 : vector<2x32xf32>
    %69 = arith.addf %67, %68 : vector<2x32xf32>
    %70 = math.tanh %69 : vector<2x32xf32>
    %71 = arith.mulf %66, %70 : vector<2x32xf32>
    %72 = vector.shape_cast %71 : vector<2x32xf32> to vector<2x1x32xf32>
    %c0_21 = arith.constant 0 : index
    %c2 = arith.constant 2 : index
    %c0_22 = arith.constant 0 : index
    %73 = vector.load %arg18[%c0_21, %c2, %c0_22] : memref<2x8x32xf32, #tpu.memory_space<vmem>>, vector<2x1x32xf32>
    tpu.vector_store %arg18[%c0_21, %c2, %c0_22], %72 {strides = array<i32>} : memref<2x8x32xf32, #tpu.memory_space<vmem>>, vector<2x1x32xf32>,
    %74 = vector.extract_strided_slice %8 {offsets = [0, 3, 0], sizes = [2, 1, 128], strides = [1, 1, 1]} : vector<2x8x128xf32> to vector<2x1x128xf32>
    %75 = vector.shape_cast %74 : vector<2x1x128xf32> to vector<2x128xf32>
    %cst_23 = arith.constant dense<0.000000e+00> : vector<2x128xf32>
    %76 = tpu.matmul %71, %1, %cst_23 {dimension_numbers = #tpu.dot_dimension_numbers<[1], [0], [0], [1], [0, 0, 1, 1], [], []>} : vector<2x32xf32>, vector<32x128xf32>, vector<2x128xf32> -> vector<2x128xf32>
    %77 = arith.addf %75, %76 : vector<2x128xf32>
    %78 = arith.negf %77 : vector<2x128xf32>
    %79 = math.exp %78 : vector<2x128xf32>
    %cst_24 = arith.constant 1.000000e+00 : f32
    %80 = vector.broadcast %cst_24 : f32 to vector<2x128xf32>
    %81 = arith.addf %80, %79 : vector<2x128xf32>
    %82 = arith.divf %80, %81 : vector<2x128xf32>
    %83 = math.tanh %77 : vector<2x128xf32>
    %84 = vector.extract_strided_slice %82 {offsets = [0, 0], sizes = [2, 32], strides = [1, 1]} : vector<2x128xf32> to vector<2x32xf32>
    %85 = vector.extract_strided_slice %82 {offsets = [0, 32], sizes = [2, 32], strides = [1, 1]} : vector<2x128xf32> to vector<2x32xf32>
    %86 = vector.extract_strided_slice %83 {offsets = [0, 64], sizes = [2, 32], strides = [1, 1]} : vector<2x128xf32> to vector<2x32xf32>
    %87 = vector.extract_strided_slice %82 {offsets = [0, 96], sizes = [2, 32], strides = [1, 1]} : vector<2x128xf32> to vector<2x32xf32>
    %88 = arith.mulf %85, %69 : vector<2x32xf32>
    %89 = arith.mulf %84, %86 : vector<2x32xf32>
    %90 = arith.addf %88, %89 : vector<2x32xf32>
    %91 = math.tanh %90 : vector<2x32xf32>
    %92 = arith.mulf %87, %91 : vector<2x32xf32>
    %93 = vector.shape_cast %92 : vector<2x32xf32> to vector<2x1x32xf32>
    %c0_25 = arith.constant 0 : index
    %c3 = arith.constant 3 : index
    %c0_26 = arith.constant 0 : index
    %94 = vector.load %arg18[%c0_25, %c3, %c0_26] : memref<2x8x32xf32, #tpu.memory_space<vmem>>, vector<2x1x32xf32>
    tpu.vector_store %arg18[%c0_25, %c3, %c0_26], %93 {strides = array<i32>} : memref<2x8x32xf32, #tpu.memory_space<vmem>>, vector<2x1x32xf32>,
    %95 = vector.extract_strided_slice %8 {offsets = [0, 4, 0], sizes = [2, 1, 128], strides = [1, 1, 1]} : vector<2x8x128xf32> to vector<2x1x128xf32>
    %96 = vector.shape_cast %95 : vector<2x1x128xf32> to vector<2x128xf32>
    %cst_27 = arith.constant dense<0.000000e+00> : vector<2x128xf32>
    %97 = tpu.matmul %92, %1, %cst_27 {dimension_numbers = #tpu.dot_dimension_numbers<[1], [0], [0], [1], [0, 0, 1, 1], [], []>} : vector<2x32xf32>, vector<32x128xf32>, vector<2x128xf32> -> vector<2x128xf32>
    %98 = arith.addf %96, %97 : vector<2x128xf32>
    %99 = arith.negf %98 : vector<2x128xf32>
    %100 = math.exp %99 : vector<2x128xf32>
    %cst_28 = arith.constant 1.000000e+00 : f32
    %101 = vector.broadcast %cst_28 : f32 to vector<2x128xf32>
    %102 = arith.addf %101, %100 : vector<2x128xf32>
    %103 = arith.divf %101, %102 : vector<2x128xf32>
    %104 = math.tanh %98 : vector<2x128xf32>
    %105 = vector.extract_strided_slice %103 {offsets = [0, 0], sizes = [2, 32], strides = [1, 1]} : vector<2x128xf32> to vector<2x32xf32>
    %106 = vector.extract_strided_slice %103 {offsets = [0, 32], sizes = [2, 32], strides = [1, 1]} : vector<2x128xf32> to vector<2x32xf32>
    %107 = vector.extract_strided_slice %104 {offsets = [0, 64], sizes = [2, 32], strides = [1, 1]} : vector<2x128xf32> to vector<2x32xf32>
    %108 = vector.extract_strided_slice %103 {offsets = [0, 96], sizes = [2, 32], strides = [1, 1]} : vector<2x128xf32> to vector<2x32xf32>
    %109 = arith.mulf %106, %90 : vector<2x32xf32>
    %110 = arith.mulf %105, %107 : vector<2x32xf32>
    %111 = arith.addf %109, %110 : vector<2x32xf32>
    %112 = math.tanh %111 : vector<2x32xf32>
    %113 = arith.mulf %108, %112 : vector<2x32xf32>
    %114 = vector.shape_cast %113 : vector<2x32xf32> to vector<2x1x32xf32>
    %c0_29 = arith.constant 0 : index
    %c4 = arith.constant 4 : index
    %c0_30 = arith.constant 0 : index
    %115 = vector.load %arg18[%c0_29, %c4, %c0_30] : memref<2x8x32xf32, #tpu.memory_space<vmem>>, vector<2x1x32xf32>
    tpu.vector_store %arg18[%c0_29, %c4, %c0_30], %114 {strides = array<i32>} : memref<2x8x32xf32, #tpu.memory_space<vmem>>, vector<2x1x32xf32>,
    %116 = vector.extract_strided_slice %8 {offsets = [0, 5, 0], sizes = [2, 1, 128], strides = [1, 1, 1]} : vector<2x8x128xf32> to vector<2x1x128xf32>
    %117 = vector.shape_cast %116 : vector<2x1x128xf32> to vector<2x128xf32>
    %cst_31 = arith.constant dense<0.000000e+00> : vector<2x128xf32>
    %118 = tpu.matmul %113, %1, %cst_31 {dimension_numbers = #tpu.dot_dimension_numbers<[1], [0], [0], [1], [0, 0, 1, 1], [], []>} : vector<2x32xf32>, vector<32x128xf32>, vector<2x128xf32> -> vector<2x128xf32>
    %119 = arith.addf %117, %118 : vector<2x128xf32>
    %120 = arith.negf %119 : vector<2x128xf32>
    %121 = math.exp %120 : vector<2x128xf32>
    %cst_32 = arith.constant 1.000000e+00 : f32
    %122 = vector.broadcast %cst_32 : f32 to vector<2x128xf32>
    %123 = arith.addf %122, %121 : vector<2x128xf32>
    %124 = arith.divf %122, %123 : vector<2x128xf32>
    %125 = math.tanh %119 : vector<2x128xf32>
    %126 = vector.extract_strided_slice %124 {offsets = [0, 0], sizes = [2, 32], strides = [1, 1]} : vector<2x128xf32> to vector<2x32xf32>
    %127 = vector.extract_strided_slice %124 {offsets = [0, 32], sizes = [2, 32], strides = [1, 1]} : vector<2x128xf32> to vector<2x32xf32>
    %128 = vector.extract_strided_slice %125 {offsets = [0, 64], sizes = [2, 32], strides = [1, 1]} : vector<2x128xf32> to vector<2x32xf32>
    %129 = vector.extract_strided_slice %124 {offsets = [0, 96], sizes = [2, 32], strides = [1, 1]} : vector<2x128xf32> to vector<2x32xf32>
    %130 = arith.mulf %127, %111 : vector<2x32xf32>
    %131 = arith.mulf %126, %128 : vector<2x32xf32>
    %132 = arith.addf %130, %131 : vector<2x32xf32>
    %133 = math.tanh %132 : vector<2x32xf32>
    %134 = arith.mulf %129, %133 : vector<2x32xf32>
    %135 = vector.shape_cast %134 : vector<2x32xf32> to vector<2x1x32xf32>
    %c0_33 = arith.constant 0 : index
    %c5 = arith.constant 5 : index
    %c0_34 = arith.constant 0 : index
    %136 = vector.load %arg18[%c0_33, %c5, %c0_34] : memref<2x8x32xf32, #tpu.memory_space<vmem>>, vector<2x1x32xf32>
    tpu.vector_store %arg18[%c0_33, %c5, %c0_34], %135 {strides = array<i32>} : memref<2x8x32xf32, #tpu.memory_space<vmem>>, vector<2x1x32xf32>,
    %137 = vector.extract_strided_slice %8 {offsets = [0, 6, 0], sizes = [2, 1, 128], strides = [1, 1, 1]} : vector<2x8x128xf32> to vector<2x1x128xf32>
    %138 = vector.shape_cast %137 : vector<2x1x128xf32> to vector<2x128xf32>
    %cst_35 = arith.constant dense<0.000000e+00> : vector<2x128xf32>
    %139 = tpu.matmul %134, %1, %cst_35 {dimension_numbers = #tpu.dot_dimension_numbers<[1], [0], [0], [1], [0, 0, 1, 1], [], []>} : vector<2x32xf32>, vector<32x128xf32>, vector<2x128xf32> -> vector<2x128xf32>
    %140 = arith.addf %138, %139 : vector<2x128xf32>
    %141 = arith.negf %140 : vector<2x128xf32>
    %142 = math.exp %141 : vector<2x128xf32>
    %cst_36 = arith.constant 1.000000e+00 : f32
    %143 = vector.broadcast %cst_36 : f32 to vector<2x128xf32>
    %144 = arith.addf %143, %142 : vector<2x128xf32>
    %145 = arith.divf %143, %144 : vector<2x128xf32>
    %146 = math.tanh %140 : vector<2x128xf32>
    %147 = vector.extract_strided_slice %145 {offsets = [0, 0], sizes = [2, 32], strides = [1, 1]} : vector<2x128xf32> to vector<2x32xf32>
    %148 = vector.extract_strided_slice %145 {offsets = [0, 32], sizes = [2, 32], strides = [1, 1]} : vector<2x128xf32> to vector<2x32xf32>
    %149 = vector.extract_strided_slice %146 {offsets = [0, 64], sizes = [2, 32], strides = [1, 1]} : vector<2x128xf32> to vector<2x32xf32>
    %150 = vector.extract_strided_slice %145 {offsets = [0, 96], sizes = [2, 32], strides = [1, 1]} : vector<2x128xf32> to vector<2x32xf32>
    %151 = arith.mulf %148, %132 : vector<2x32xf32>
    %152 = arith.mulf %147, %149 : vector<2x32xf32>
    %153 = arith.addf %151, %152 : vector<2x32xf32>
    %154 = math.tanh %153 : vector<2x32xf32>
    %155 = arith.mulf %150, %154 : vector<2x32xf32>
    %156 = vector.shape_cast %155 : vector<2x32xf32> to vector<2x1x32xf32>
    %c0_37 = arith.constant 0 : index
    %c6 = arith.constant 6 : index
    %c0_38 = arith.constant 0 : index
    %157 = vector.load %arg18[%c0_37, %c6, %c0_38] : memref<2x8x32xf32, #tpu.memory_space<vmem>>, vector<2x1x32xf32>
    tpu.vector_store %arg18[%c0_37, %c6, %c0_38], %156 {strides = array<i32>} : memref<2x8x32xf32, #tpu.memory_space<vmem>>, vector<2x1x32xf32>,
    %158 = vector.extract_strided_slice %8 {offsets = [0, 7, 0], sizes = [2, 1, 128], strides = [1, 1, 1]} : vector<2x8x128xf32> to vector<2x1x128xf32>
    %159 = vector.shape_cast %158 : vector<2x1x128xf32> to vector<2x128xf32>
    %cst_39 = arith.constant dense<0.000000e+00> : vector<2x128xf32>
    %160 = tpu.matmul %155, %1, %cst_39 {dimension_numbers = #tpu.dot_dimension_numbers<[1], [0], [0], [1], [0, 0, 1, 1], [], []>} : vector<2x32xf32>, vector<32x128xf32>, vector<2x128xf32> -> vector<2x128xf32>
    %161 = arith.addf %159, %160 : vector<2x128xf32>
    %162 = arith.negf %161 : vector<2x128xf32>
    %163 = math.exp %162 : vector<2x128xf32>
    %cst_40 = arith.constant 1.000000e+00 : f32
    %164 = vector.broadcast %cst_40 : f32 to vector<2x128xf32>
    %165 = arith.addf %164, %163 : vector<2x128xf32>
    %166 = arith.divf %164, %165 : vector<2x128xf32>
    %167 = math.tanh %161 : vector<2x128xf32>
    %168 = vector.extract_strided_slice %166 {offsets = [0, 0], sizes = [2, 32], strides = [1, 1]} : vector<2x128xf32> to vector<2x32xf32>
    %169 = vector.extract_strided_slice %166 {offsets = [0, 32], sizes = [2, 32], strides = [1, 1]} : vector<2x128xf32> to vector<2x32xf32>
    %170 = vector.extract_strided_slice %167 {offsets = [0, 64], sizes = [2, 32], strides = [1, 1]} : vector<2x128xf32> to vector<2x32xf32>
    %171 = vector.extract_strided_slice %166 {offsets = [0, 96], sizes = [2, 32], strides = [1, 1]} : vector<2x128xf32> to vector<2x32xf32>
    %172 = arith.mulf %169, %153 : vector<2x32xf32>
    %173 = arith.mulf %168, %170 : vector<2x32xf32>
    %174 = arith.addf %172, %173 : vector<2x32xf32>
    %175 = math.tanh %174 : vector<2x32xf32>
    %176 = arith.mulf %171, %175 : vector<2x32xf32>
    %177 = vector.shape_cast %176 : vector<2x32xf32> to vector<2x1x32xf32>
    %c0_41 = arith.constant 0 : index
    %c7 = arith.constant 7 : index
    %c0_42 = arith.constant 0 : index
    %178 = vector.load %arg18[%c0_41, %c7, %c0_42] : memref<2x8x32xf32, #tpu.memory_space<vmem>>, vector<2x1x32xf32>
    tpu.vector_store %arg18[%c0_41, %c7, %c0_42], %177 {strides = array<i32>} : memref<2x8x32xf32, #tpu.memory_space<vmem>>, vector<2x1x32xf32>,
    %c0_43 = arith.constant 0 : index
    %c0_44 = arith.constant 0 : index
    %179 = vector.load %arg4[%c0_43, %c0_44] : memref<32x32xf32, #tpu.memory_space<vmem>>, vector<32x32xf32>
    %cst_45 = arith.constant dense<0.000000e+00> : vector<2x32xf32>
    %180 = tpu.matmul %176, %179, %cst_45 {dimension_numbers = #tpu.dot_dimension_numbers<[1], [0], [0], [1], [0, 0, 1, 1], [], []>} : vector<2x32xf32>, vector<32x32xf32>, vector<2x32xf32> -> vector<2x32xf32>
    %c0_46 = arith.constant 0 : index
    %c0_47 = arith.constant 0 : index
    %181 = vector.load %arg5[%c0_46, %c0_47] : memref<1x32xf32, #tpu.memory_space<vmem>>, vector<1x32xf32>
    %182 = vector.broadcast %181 : vector<1x32xf32> to vector<2x32xf32>
    %183 = arith.addf %180, %182 : vector<2x32xf32>
    %cst_48 = arith.constant 0.000000e+00 : f32
    %184 = vector.broadcast %cst_48 : f32 to vector<2x32xf32>
    %185 = arith.maximumf %183, %184 : vector<2x32xf32>
    %c0_49 = arith.constant 0 : index
    %c0_50 = arith.constant 0 : index
    %186 = vector.load %arg6[%c0_49, %c0_50] : memref<32x32xf32, #tpu.memory_space<vmem>>, vector<32x32xf32>
    %cst_51 = arith.constant dense<0.000000e+00> : vector<2x32xf32>
    %187 = tpu.matmul %185, %186, %cst_51 {dimension_numbers = #tpu.dot_dimension_numbers<[1], [0], [0], [1], [0, 0, 1, 1], [], []>} : vector<2x32xf32>, vector<32x32xf32>, vector<2x32xf32> -> vector<2x32xf32>
    %c0_52 = arith.constant 0 : index
    %c0_53 = arith.constant 0 : index
    %188 = vector.load %arg7[%c0_52, %c0_53] : memref<1x32xf32, #tpu.memory_space<vmem>>, vector<1x32xf32>
    %189 = vector.broadcast %188 : vector<1x32xf32> to vector<2x32xf32>
    %190 = arith.addf %187, %189 : vector<2x32xf32>
    %c0_54 = arith.constant 0 : index
    %c0_55 = arith.constant 0 : index
    %191 = vector.load %arg17[%c0_54, %c0_55] : memref<2x32xf32, #tpu.memory_space<vmem>>, vector<2x32xf32>
    tpu.vector_store %arg17[%c0_54, %c0_55], %190 {strides = array<i32>} : memref<2x32xf32, #tpu.memory_space<vmem>>, vector<2x32xf32>,
    %c0_56 = arith.constant 0 : index
    %c0_57 = arith.constant 0 : index
    %c0_58 = arith.constant 0 : index
    %192 = vector.load %arg18[%c0_56, %c0_57, %c0_58] : memref<2x8x32xf32, #tpu.memory_space<vmem>>, vector<2x8x32xf32>
    %193 = vector.shape_cast %192 : vector<2x8x32xf32> to vector<16x32xf32>
    %c0_59 = arith.constant 0 : index
    %c0_60 = arith.constant 0 : index
    %194 = vector.load %arg8[%c0_59, %c0_60] : memref<32x32xf32, #tpu.memory_space<vmem>>, vector<32x32xf32>
    %cst_61 = arith.constant dense<0.000000e+00> : vector<16x32xf32>
    %195 = tpu.matmul %193, %194, %cst_61 {dimension_numbers = #tpu.dot_dimension_numbers<[1], [0], [0], [1], [0, 0, 1, 1], [], []>} : vector<16x32xf32>, vector<32x32xf32>, vector<16x32xf32> -> vector<16x32xf32>
    %c0_62 = arith.constant 0 : index
    %c0_63 = arith.constant 0 : index
    %196 = vector.load %arg9[%c0_62, %c0_63] : memref<1x32xf32, #tpu.memory_space<vmem>>, vector<1x32xf32>
    %197 = vector.broadcast %196 : vector<1x32xf32> to vector<16x32xf32>
    %198 = arith.addf %195, %197 : vector<16x32xf32>
    %cst_64 = arith.constant 5.000000e-01 : f32
    %199 = vector.broadcast %cst_64 : f32 to vector<16x32xf32>
    %200 = arith.mulf %198, %199 : vector<16x32xf32>
    %c0_65 = arith.constant 0 : index
    %c0_66 = arith.constant 0 : index
    %201 = vector.load %arg10[%c0_65, %c0_66] : memref<32x32xf32, #tpu.memory_space<vmem>>, vector<32x32xf32>
    %cst_67 = arith.constant dense<0.000000e+00> : vector<16x32xf32>
    %202 = tpu.matmul %193, %201, %cst_67 {dimension_numbers = #tpu.dot_dimension_numbers<[1], [0], [0], [1], [0, 0, 1, 1], [], []>} : vector<16x32xf32>, vector<32x32xf32>, vector<16x32xf32> -> vector<16x32xf32>
    %c0_68 = arith.constant 0 : index
    %c0_69 = arith.constant 0 : index
    %203 = vector.load %arg11[%c0_68, %c0_69] : memref<1x32xf32, #tpu.memory_space<vmem>>, vector<1x32xf32>
    %204 = vector.broadcast %203 : vector<1x32xf32> to vector<16x32xf32>
    %205 = arith.addf %202, %204 : vector<16x32xf32>
    %c0_70 = arith.constant 0 : index
    %c0_71 = arith.constant 0 : index
    %206 = vector.load %arg12[%c0_70, %c0_71] : memref<32x32xf32, #tpu.memory_space<vmem>>, vector<32x32xf32>
    %cst_72 = arith.constant dense<0.000000e+00> : vector<16x32xf32>
    %207 = tpu.matmul %193, %206, %cst_72 {dimension_numbers = #tpu.dot_dimension_numbers<[1], [0], [0], [1], [0, 0, 1, 1], [], []>} : vector<16x32xf32>, vector<32x32xf32>, vector<16x32xf32> -> vector<16x32xf32>
    %c0_73 = arith.constant 0 : index
    %c0_74 = arith.constant 0 : index
    %208 = vector.load %arg13[%c0_73, %c0_74] : memref<1x32xf32, #tpu.memory_space<vmem>>, vector<1x32xf32>
    %209 = vector.broadcast %208 : vector<1x32xf32> to vector<16x32xf32>
    %210 = arith.addf %207, %209 : vector<16x32xf32>
    %211 = vector.shape_cast %200 : vector<16x32xf32> to vector<2x8x32xf32>
    %212 = vector.shape_cast %205 : vector<16x32xf32> to vector<2x8x32xf32>
    %213 = vector.shape_cast %210 : vector<16x32xf32> to vector<2x8x32xf32>
    %214 = vector.extract_strided_slice %211 {offsets = [0, 0, 0], sizes = [2, 8, 4], strides = [1, 1, 1]} : vector<2x8x32xf32> to vector<2x8x4xf32>
    %215 = vector.extract_strided_slice %212 {offsets = [0, 0, 0], sizes = [2, 8, 4], strides = [1, 1, 1]} : vector<2x8x32xf32> to vector<2x8x4xf32>
    %216 = vector.extract_strided_slice %213 {offsets = [0, 0, 0], sizes = [2, 8, 4], strides = [1, 1, 1]} : vector<2x8x32xf32> to vector<2x8x4xf32>
    "tpu.trace_start"() <{level = 10 : i32, message = "btd,bsd->bts"}> : () -> ()
    %cst_75 = arith.constant dense<0.000000e+00> : vector<2x8x8xf32>
    %217 = tpu.matmul %214, %215, %cst_75 {dimension_numbers = #tpu.dot_dimension_numbers<[2], [2], [1], [1], [0, 0, 0, 1, 1, 1], [0], [0]>} : vector<2x8x4xf32>, vector<2x8x4xf32>, vector<2x8x8xf32> -> vector<2x8x8xf32>
    "tpu.trace_stop"() : () -> ()
    %cst_76 = arith.constant dense<0xFF800000> : vector<2x8xf32>
    %218 = vector.multi_reduction <maximumf>, %217, %cst_76 [2] : vector<2x8x8xf32> to vector<2x8xf32>
    %219 = vector.shape_cast %218 : vector<2x8xf32> to vector<2x8x1xf32>
    %220 = vector.broadcast %219 : vector<2x8x1xf32> to vector<2x8x8xf32>
    %221 = arith.subf %217, %220 : vector<2x8x8xf32>
    %222 = math.exp %221 : vector<2x8x8xf32>
    %cst_77 = arith.constant dense<0.000000e+00> : vector<2x8xf32>
    %223 = vector.multi_reduction <add>, %222, %cst_77 [2] : vector<2x8x8xf32> to vector<2x8xf32>
    %224 = vector.shape_cast %223 : vector<2x8xf32> to vector<2x8x1xf32>
    %225 = vector.broadcast %224 : vector<2x8x1xf32> to vector<2x8x8xf32>
    %226 = arith.divf %222, %225 : vector<2x8x8xf32>
    %cst_78 = arith.constant dense<0.000000e+00> : vector<2x8xf32>
    %227 = vector.multi_reduction <add>, %226, %cst_78 [1] : vector<2x8x8xf32> to vector<2x8xf32>
    %228 = vector.shape_cast %227 : vector<2x8xf32> to vector<2x1x8xf32>
    %cst_79 = arith.constant 8.000000e+00 : f32
    %229 = vector.broadcast %cst_79 : f32 to vector<2x1x8xf32>
    %230 = arith.divf %228, %229 : vector<2x1x8xf32>
    "tpu.trace_start"() <{level = 10 : i32, message = "bqt,btd->bqd"}> : () -> ()
    %cst_80 = arith.constant dense<0.000000e+00> : vector<2x1x4xf32>
    %231 = tpu.matmul %230, %216, %cst_80 {dimension_numbers = #tpu.dot_dimension_numbers<[2], [1], [1], [2], [0, 0, 0, 1, 1, 2], [0], [0]>} : vector<2x1x8xf32>, vector<2x8x4xf32>, vector<2x1x4xf32> -> vector<2x1x4xf32>
    "tpu.trace_stop"() : () -> ()
    %232 = vector.shape_cast %231 : vector<2x1x4xf32> to vector<2x4xf32>
    %233 = vector.extract_strided_slice %211 {offsets = [0, 0, 4], sizes = [2, 8, 4], strides = [1, 1, 1]} : vector<2x8x32xf32> to vector<2x8x4xf32>
    %234 = vector.extract_strided_slice %212 {offsets = [0, 0, 4], sizes = [2, 8, 4], strides = [1, 1, 1]} : vector<2x8x32xf32> to vector<2x8x4xf32>
    %235 = vector.extract_strided_slice %213 {offsets = [0, 0, 4], sizes = [2, 8, 4], strides = [1, 1, 1]} : vector<2x8x32xf32> to vector<2x8x4xf32>
    "tpu.trace_start"() <{level = 10 : i32, message = "btd,bsd->bts"}> : () -> ()
    %cst_81 = arith.constant dense<0.000000e+00> : vector<2x8x8xf32>
    %236 = tpu.matmul %233, %234, %cst_81 {dimension_numbers = #tpu.dot_dimension_numbers<[2], [2], [1], [1], [0, 0, 0, 1, 1, 1], [0], [0]>} : vector<2x8x4xf32>, vector<2x8x4xf32>, vector<2x8x8xf32> -> vector<2x8x8xf32>
    "tpu.trace_stop"() : () -> ()
    %cst_82 = arith.constant dense<0xFF800000> : vector<2x8xf32>
    %237 = vector.multi_reduction <maximumf>, %236, %cst_82 [2] : vector<2x8x8xf32> to vector<2x8xf32>
    %238 = vector.shape_cast %237 : vector<2x8xf32> to vector<2x8x1xf32>
    %239 = vector.broadcast %238 : vector<2x8x1xf32> to vector<2x8x8xf32>
    %240 = arith.subf %236, %239 : vector<2x8x8xf32>
    %241 = math.exp %240 : vector<2x8x8xf32>
    %cst_83 = arith.constant dense<0.000000e+00> : vector<2x8xf32>
    %242 = vector.multi_reduction <add>, %241, %cst_83 [2] : vector<2x8x8xf32> to vector<2x8xf32>
    %243 = vector.shape_cast %242 : vector<2x8xf32> to vector<2x8x1xf32>
    %244 = vector.broadcast %243 : vector<2x8x1xf32> to vector<2x8x8xf32>
    %245 = arith.divf %241, %244 : vector<2x8x8xf32>
    %cst_84 = arith.constant dense<0.000000e+00> : vector<2x8xf32>
    %246 = vector.multi_reduction <add>, %245, %cst_84 [1] : vector<2x8x8xf32> to vector<2x8xf32>
    %247 = vector.shape_cast %246 : vector<2x8xf32> to vector<2x1x8xf32>
    %cst_85 = arith.constant 8.000000e+00 : f32
    %248 = vector.broadcast %cst_85 : f32 to vector<2x1x8xf32>
    %249 = arith.divf %247, %248 : vector<2x1x8xf32>
    "tpu.trace_start"() <{level = 10 : i32, message = "bqt,btd->bqd"}> : () -> ()
    %cst_86 = arith.constant dense<0.000000e+00> : vector<2x1x4xf32>
    %250 = tpu.matmul %249, %235, %cst_86 {dimension_numbers = #tpu.dot_dimension_numbers<[2], [1], [1], [2], [0, 0, 0, 1, 1, 2], [0], [0]>} : vector<2x1x8xf32>, vector<2x8x4xf32>, vector<2x1x4xf32> -> vector<2x1x4xf32>
    "tpu.trace_stop"() : () -> ()
    %251 = vector.shape_cast %250 : vector<2x1x4xf32> to vector<2x4xf32>
    %252 = vector.extract_strided_slice %211 {offsets = [0, 0, 8], sizes = [2, 8, 4], strides = [1, 1, 1]} : vector<2x8x32xf32> to vector<2x8x4xf32>
    %253 = vector.extract_strided_slice %212 {offsets = [0, 0, 8], sizes = [2, 8, 4], strides = [1, 1, 1]} : vector<2x8x32xf32> to vector<2x8x4xf32>
    %254 = vector.extract_strided_slice %213 {offsets = [0, 0, 8], sizes = [2, 8, 4], strides = [1, 1, 1]} : vector<2x8x32xf32> to vector<2x8x4xf32>
    "tpu.trace_start"() <{level = 10 : i32, message = "btd,bsd->bts"}> : () -> ()
    %cst_87 = arith.constant dense<0.000000e+00> : vector<2x8x8xf32>
    %255 = tpu.matmul %252, %253, %cst_87 {dimension_numbers = #tpu.dot_dimension_numbers<[2], [2], [1], [1], [0, 0, 0, 1, 1, 1], [0], [0]>} : vector<2x8x4xf32>, vector<2x8x4xf32>, vector<2x8x8xf32> -> vector<2x8x8xf32>
    "tpu.trace_stop"() : () -> ()
    %cst_88 = arith.constant dense<0xFF800000> : vector<2x8xf32>
    %256 = vector.multi_reduction <maximumf>, %255, %cst_88 [2] : vector<2x8x8xf32> to vector<2x8xf32>
    %257 = vector.shape_cast %256 : vector<2x8xf32> to vector<2x8x1xf32>
    %258 = vector.broadcast %257 : vector<2x8x1xf32> to vector<2x8x8xf32>
    %259 = arith.subf %255, %258 : vector<2x8x8xf32>
    %260 = math.exp %259 : vector<2x8x8xf32>
    %cst_89 = arith.constant dense<0.000000e+00> : vector<2x8xf32>
    %261 = vector.multi_reduction <add>, %260, %cst_89 [2] : vector<2x8x8xf32> to vector<2x8xf32>
    %262 = vector.shape_cast %261 : vector<2x8xf32> to vector<2x8x1xf32>
    %263 = vector.broadcast %262 : vector<2x8x1xf32> to vector<2x8x8xf32>
    %264 = arith.divf %260, %263 : vector<2x8x8xf32>
    %cst_90 = arith.constant dense<0.000000e+00> : vector<2x8xf32>
    %265 = vector.multi_reduction <add>, %264, %cst_90 [1] : vector<2x8x8xf32> to vector<2x8xf32>
    %266 = vector.shape_cast %265 : vector<2x8xf32> to vector<2x1x8xf32>
    %cst_91 = arith.constant 8.000000e+00 : f32
    %267 = vector.broadcast %cst_91 : f32 to vector<2x1x8xf32>
    %268 = arith.divf %266, %267 : vector<2x1x8xf32>
    "tpu.trace_start"() <{level = 10 : i32, message = "bqt,btd->bqd"}> : () -> ()
    %cst_92 = arith.constant dense<0.000000e+00> : vector<2x1x4xf32>
    %269 = tpu.matmul %268, %254, %cst_92 {dimension_numbers = #tpu.dot_dimension_numbers<[2], [1], [1], [2], [0, 0, 0, 1, 1, 2], [0], [0]>} : vector<2x1x8xf32>, vector<2x8x4xf32>, vector<2x1x4xf32> -> vector<2x1x4xf32>
    "tpu.trace_stop"() : () -> ()
    %270 = vector.shape_cast %269 : vector<2x1x4xf32> to vector<2x4xf32>
    %271 = vector.extract_strided_slice %211 {offsets = [0, 0, 12], sizes = [2, 8, 4], strides = [1, 1, 1]} : vector<2x8x32xf32> to vector<2x8x4xf32>
    %272 = vector.extract_strided_slice %212 {offsets = [0, 0, 12], sizes = [2, 8, 4], strides = [1, 1, 1]} : vector<2x8x32xf32> to vector<2x8x4xf32>
    %273 = vector.extract_strided_slice %213 {offsets = [0, 0, 12], sizes = [2, 8, 4], strides = [1, 1, 1]} : vector<2x8x32xf32> to vector<2x8x4xf32>
    "tpu.trace_start"() <{level = 10 : i32, message = "btd,bsd->bts"}> : () -> ()
    %cst_93 = arith.constant dense<0.000000e+00> : vector<2x8x8xf32>
    %274 = tpu.matmul %271, %272, %cst_93 {dimension_numbers = #tpu.dot_dimension_numbers<[2], [2], [1], [1], [0, 0, 0, 1, 1, 1], [0], [0]>} : vector<2x8x4xf32>, vector<2x8x4xf32>, vector<2x8x8xf32> -> vector<2x8x8xf32>
    "tpu.trace_stop"() : () -> ()
    %cst_94 = arith.constant dense<0xFF800000> : vector<2x8xf32>
    %275 = vector.multi_reduction <maximumf>, %274, %cst_94 [2] : vector<2x8x8xf32> to vector<2x8xf32>
    %276 = vector.shape_cast %275 : vector<2x8xf32> to vector<2x8x1xf32>
    %277 = vector.broadcast %276 : vector<2x8x1xf32> to vector<2x8x8xf32>
    %278 = arith.subf %274, %277 : vector<2x8x8xf32>
    %279 = math.exp %278 : vector<2x8x8xf32>
    %cst_95 = arith.constant dense<0.000000e+00> : vector<2x8xf32>
    %280 = vector.multi_reduction <add>, %279, %cst_95 [2] : vector<2x8x8xf32> to vector<2x8xf32>
    %281 = vector.shape_cast %280 : vector<2x8xf32> to vector<2x8x1xf32>
    %282 = vector.broadcast %281 : vector<2x8x1xf32> to vector<2x8x8xf32>
    %283 = arith.divf %279, %282 : vector<2x8x8xf32>
    %cst_96 = arith.constant dense<0.000000e+00> : vector<2x8xf32>
    %284 = vector.multi_reduction <add>, %283, %cst_96 [1] : vector<2x8x8xf32> to vector<2x8xf32>
    %285 = vector.shape_cast %284 : vector<2x8xf32> to vector<2x1x8xf32>
    %cst_97 = arith.constant 8.000000e+00 : f32
    %286 = vector.broadcast %cst_97 : f32 to vector<2x1x8xf32>
    %287 = arith.divf %285, %286 : vector<2x1x8xf32>
    "tpu.trace_start"() <{level = 10 : i32, message = "bqt,btd->bqd"}> : () -> ()
    %cst_98 = arith.constant dense<0.000000e+00> : vector<2x1x4xf32>
    %288 = tpu.matmul %287, %273, %cst_98 {dimension_numbers = #tpu.dot_dimension_numbers<[2], [1], [1], [2], [0, 0, 0, 1, 1, 2], [0], [0]>} : vector<2x1x8xf32>, vector<2x8x4xf32>, vector<2x1x4xf32> -> vector<2x1x4xf32>
    "tpu.trace_stop"() : () -> ()
    %289 = vector.shape_cast %288 : vector<2x1x4xf32> to vector<2x4xf32>
    %290 = vector.extract_strided_slice %211 {offsets = [0, 0, 16], sizes = [2, 8, 4], strides = [1, 1, 1]} : vector<2x8x32xf32> to vector<2x8x4xf32>
    %291 = vector.extract_strided_slice %212 {offsets = [0, 0, 16], sizes = [2, 8, 4], strides = [1, 1, 1]} : vector<2x8x32xf32> to vector<2x8x4xf32>
    %292 = vector.extract_strided_slice %213 {offsets = [0, 0, 16], sizes = [2, 8, 4], strides = [1, 1, 1]} : vector<2x8x32xf32> to vector<2x8x4xf32>
    "tpu.trace_start"() <{level = 10 : i32, message = "btd,bsd->bts"}> : () -> ()
    %cst_99 = arith.constant dense<0.000000e+00> : vector<2x8x8xf32>
    %293 = tpu.matmul %290, %291, %cst_99 {dimension_numbers = #tpu.dot_dimension_numbers<[2], [2], [1], [1], [0, 0, 0, 1, 1, 1], [0], [0]>} : vector<2x8x4xf32>, vector<2x8x4xf32>, vector<2x8x8xf32> -> vector<2x8x8xf32>
    "tpu.trace_stop"() : () -> ()
    %cst_100 = arith.constant dense<0xFF800000> : vector<2x8xf32>
    %294 = vector.multi_reduction <maximumf>, %293, %cst_100 [2] : vector<2x8x8xf32> to vector<2x8xf32>
    %295 = vector.shape_cast %294 : vector<2x8xf32> to vector<2x8x1xf32>
    %296 = vector.broadcast %295 : vector<2x8x1xf32> to vector<2x8x8xf32>
    %297 = arith.subf %293, %296 : vector<2x8x8xf32>
    %298 = math.exp %297 : vector<2x8x8xf32>
    %cst_101 = arith.constant dense<0.000000e+00> : vector<2x8xf32>
    %299 = vector.multi_reduction <add>, %298, %cst_101 [2] : vector<2x8x8xf32> to vector<2x8xf32>
    %300 = vector.shape_cast %299 : vector<2x8xf32> to vector<2x8x1xf32>
    %301 = vector.broadcast %300 : vector<2x8x1xf32> to vector<2x8x8xf32>
    %302 = arith.divf %298, %301 : vector<2x8x8xf32>
    %cst_102 = arith.constant dense<0.000000e+00> : vector<2x8xf32>
    %303 = vector.multi_reduction <add>, %302, %cst_102 [1] : vector<2x8x8xf32> to vector<2x8xf32>
    %304 = vector.shape_cast %303 : vector<2x8xf32> to vector<2x1x8xf32>
    %cst_103 = arith.constant 8.000000e+00 : f32
    %305 = vector.broadcast %cst_103 : f32 to vector<2x1x8xf32>
    %306 = arith.divf %304, %305 : vector<2x1x8xf32>
    "tpu.trace_start"() <{level = 10 : i32, message = "bqt,btd->bqd"}> : () -> ()
    %cst_104 = arith.constant dense<0.000000e+00> : vector<2x1x4xf32>
    %307 = tpu.matmul %306, %292, %cst_104 {dimension_numbers = #tpu.dot_dimension_numbers<[2], [1], [1], [2], [0, 0, 0, 1, 1, 2], [0], [0]>} : vector<2x1x8xf32>, vector<2x8x4xf32>, vector<2x1x4xf32> -> vector<2x1x4xf32>
    "tpu.trace_stop"() : () -> ()
    %308 = vector.shape_cast %307 : vector<2x1x4xf32> to vector<2x4xf32>
    %309 = vector.extract_strided_slice %211 {offsets = [0, 0, 20], sizes = [2, 8, 4], strides = [1, 1, 1]} : vector<2x8x32xf32> to vector<2x8x4xf32>
    %310 = vector.extract_strided_slice %212 {offsets = [0, 0, 20], sizes = [2, 8, 4], strides = [1, 1, 1]} : vector<2x8x32xf32> to vector<2x8x4xf32>
    %311 = vector.extract_strided_slice %213 {offsets = [0, 0, 20], sizes = [2, 8, 4], strides = [1, 1, 1]} : vector<2x8x32xf32> to vector<2x8x4xf32>
    "tpu.trace_start"() <{level = 10 : i32, message = "btd,bsd->bts"}> : () -> ()
    %cst_105 = arith.constant dense<0.000000e+00> : vector<2x8x8xf32>
    %312 = tpu.matmul %309, %310, %cst_105 {dimension_numbers = #tpu.dot_dimension_numbers<[2], [2], [1], [1], [0, 0, 0, 1, 1, 1], [0], [0]>} : vector<2x8x4xf32>, vector<2x8x4xf32>, vector<2x8x8xf32> -> vector<2x8x8xf32>
    "tpu.trace_stop"() : () -> ()
    %cst_106 = arith.constant dense<0xFF800000> : vector<2x8xf32>
    %313 = vector.multi_reduction <maximumf>, %312, %cst_106 [2] : vector<2x8x8xf32> to vector<2x8xf32>
    %314 = vector.shape_cast %313 : vector<2x8xf32> to vector<2x8x1xf32>
    %315 = vector.broadcast %314 : vector<2x8x1xf32> to vector<2x8x8xf32>
    %316 = arith.subf %312, %315 : vector<2x8x8xf32>
    %317 = math.exp %316 : vector<2x8x8xf32>
    %cst_107 = arith.constant dense<0.000000e+00> : vector<2x8xf32>
    %318 = vector.multi_reduction <add>, %317, %cst_107 [2] : vector<2x8x8xf32> to vector<2x8xf32>
    %319 = vector.shape_cast %318 : vector<2x8xf32> to vector<2x8x1xf32>
    %320 = vector.broadcast %319 : vector<2x8x1xf32> to vector<2x8x8xf32>
    %321 = arith.divf %317, %320 : vector<2x8x8xf32>
    %cst_108 = arith.constant dense<0.000000e+00> : vector<2x8xf32>
    %322 = vector.multi_reduction <add>, %321, %cst_108 [1] : vector<2x8x8xf32> to vector<2x8xf32>
    %323 = vector.shape_cast %322 : vector<2x8xf32> to vector<2x1x8xf32>
    %cst_109 = arith.constant 8.000000e+00 : f32
    %324 = vector.broadcast %cst_109 : f32 to vector<2x1x8xf32>
    %325 = arith.divf %323, %324 : vector<2x1x8xf32>
    "tpu.trace_start"() <{level = 10 : i32, message = "bqt,btd->bqd"}> : () -> ()
    %cst_110 = arith.constant dense<0.000000e+00> : vector<2x1x4xf32>
    %326 = tpu.matmul %325, %311, %cst_110 {dimension_numbers = #tpu.dot_dimension_numbers<[2], [1], [1], [2], [0, 0, 0, 1, 1, 2], [0], [0]>} : vector<2x1x8xf32>, vector<2x8x4xf32>, vector<2x1x4xf32> -> vector<2x1x4xf32>
    "tpu.trace_stop"() : () -> ()
    %327 = vector.shape_cast %326 : vector<2x1x4xf32> to vector<2x4xf32>
    %328 = vector.extract_strided_slice %211 {offsets = [0, 0, 24], sizes = [2, 8, 4], strides = [1, 1, 1]} : vector<2x8x32xf32> to vector<2x8x4xf32>
    %329 = vector.extract_strided_slice %212 {offsets = [0, 0, 24], sizes = [2, 8, 4], strides = [1, 1, 1]} : vector<2x8x32xf32> to vector<2x8x4xf32>
    %330 = vector.extract_strided_slice %213 {offsets = [0, 0, 24], sizes = [2, 8, 4], strides = [1, 1, 1]} : vector<2x8x32xf32> to vector<2x8x4xf32>
    "tpu.trace_start"() <{level = 10 : i32, message = "btd,bsd->bts"}> : () -> ()
    %cst_111 = arith.constant dense<0.000000e+00> : vector<2x8x8xf32>
    %331 = tpu.matmul %328, %329, %cst_111 {dimension_numbers = #tpu.dot_dimension_numbers<[2], [2], [1], [1], [0, 0, 0, 1, 1, 1], [0], [0]>} : vector<2x8x4xf32>, vector<2x8x4xf32>, vector<2x8x8xf32> -> vector<2x8x8xf32>
    "tpu.trace_stop"() : () -> ()
    %cst_112 = arith.constant dense<0xFF800000> : vector<2x8xf32>
    %332 = vector.multi_reduction <maximumf>, %331, %cst_112 [2] : vector<2x8x8xf32> to vector<2x8xf32>
    %333 = vector.shape_cast %332 : vector<2x8xf32> to vector<2x8x1xf32>
    %334 = vector.broadcast %333 : vector<2x8x1xf32> to vector<2x8x8xf32>
    %335 = arith.subf %331, %334 : vector<2x8x8xf32>
    %336 = math.exp %335 : vector<2x8x8xf32>
    %cst_113 = arith.constant dense<0.000000e+00> : vector<2x8xf32>
    %337 = vector.multi_reduction <add>, %336, %cst_113 [2] : vector<2x8x8xf32> to vector<2x8xf32>
    %338 = vector.shape_cast %337 : vector<2x8xf32> to vector<2x8x1xf32>
    %339 = vector.broadcast %338 : vector<2x8x1xf32> to vector<2x8x8xf32>
    %340 = arith.divf %336, %339 : vector<2x8x8xf32>
    %cst_114 = arith.constant dense<0.000000e+00> : vector<2x8xf32>
    %341 = vector.multi_reduction <add>, %340, %cst_114 [1] : vector<2x8x8xf32> to vector<2x8xf32>
    %342 = vector.shape_cast %341 : vector<2x8xf32> to vector<2x1x8xf32>
    %cst_115 = arith.constant 8.000000e+00 : f32
    %343 = vector.broadcast %cst_115 : f32 to vector<2x1x8xf32>
    %344 = arith.divf %342, %343 : vector<2x1x8xf32>
    "tpu.trace_start"() <{level = 10 : i32, message = "bqt,btd->bqd"}> : () -> ()
    %cst_116 = arith.constant dense<0.000000e+00> : vector<2x1x4xf32>
    %345 = tpu.matmul %344, %330, %cst_116 {dimension_numbers = #tpu.dot_dimension_numbers<[2], [1], [1], [2], [0, 0, 0, 1, 1, 2], [0], [0]>} : vector<2x1x8xf32>, vector<2x8x4xf32>, vector<2x1x4xf32> -> vector<2x1x4xf32>
    "tpu.trace_stop"() : () -> ()
    %346 = vector.shape_cast %345 : vector<2x1x4xf32> to vector<2x4xf32>
    %347 = vector.extract_strided_slice %211 {offsets = [0, 0, 28], sizes = [2, 8, 4], strides = [1, 1, 1]} : vector<2x8x32xf32> to vector<2x8x4xf32>
    %348 = vector.extract_strided_slice %212 {offsets = [0, 0, 28], sizes = [2, 8, 4], strides = [1, 1, 1]} : vector<2x8x32xf32> to vector<2x8x4xf32>
    %349 = vector.extract_strided_slice %213 {offsets = [0, 0, 28], sizes = [2, 8, 4], strides = [1, 1, 1]} : vector<2x8x32xf32> to vector<2x8x4xf32>
    "tpu.trace_start"() <{level = 10 : i32, message = "btd,bsd->bts"}> : () -> ()
    %cst_117 = arith.constant dense<0.000000e+00> : vector<2x8x8xf32>
    %350 = tpu.matmul %347, %348, %cst_117 {dimension_numbers = #tpu.dot_dimension_numbers<[2], [2], [1], [1], [0, 0, 0, 1, 1, 1], [0], [0]>} : vector<2x8x4xf32>, vector<2x8x4xf32>, vector<2x8x8xf32> -> vector<2x8x8xf32>
    "tpu.trace_stop"() : () -> ()
    %cst_118 = arith.constant dense<0xFF800000> : vector<2x8xf32>
    %351 = vector.multi_reduction <maximumf>, %350, %cst_118 [2] : vector<2x8x8xf32> to vector<2x8xf32>
    %352 = vector.shape_cast %351 : vector<2x8xf32> to vector<2x8x1xf32>
    %353 = vector.broadcast %352 : vector<2x8x1xf32> to vector<2x8x8xf32>
    %354 = arith.subf %350, %353 : vector<2x8x8xf32>
    %355 = math.exp %354 : vector<2x8x8xf32>
    %cst_119 = arith.constant dense<0.000000e+00> : vector<2x8xf32>
    %356 = vector.multi_reduction <add>, %355, %cst_119 [2] : vector<2x8x8xf32> to vector<2x8xf32>
    %357 = vector.shape_cast %356 : vector<2x8xf32> to vector<2x8x1xf32>
    %358 = vector.broadcast %357 : vector<2x8x1xf32> to vector<2x8x8xf32>
    %359 = arith.divf %355, %358 : vector<2x8x8xf32>
    %cst_120 = arith.constant dense<0.000000e+00> : vector<2x8xf32>
    %360 = vector.multi_reduction <add>, %359, %cst_120 [1] : vector<2x8x8xf32> to vector<2x8xf32>
    %361 = vector.shape_cast %360 : vector<2x8xf32> to vector<2x1x8xf32>
    %cst_121 = arith.constant 8.000000e+00 : f32
    %362 = vector.broadcast %cst_121 : f32 to vector<2x1x8xf32>
    %363 = arith.divf %361, %362 : vector<2x1x8xf32>
    "tpu.trace_start"() <{level = 10 : i32, message = "bqt,btd->bqd"}> : () -> ()
    %cst_122 = arith.constant dense<0.000000e+00> : vector<2x1x4xf32>
    %364 = tpu.matmul %363, %349, %cst_122 {dimension_numbers = #tpu.dot_dimension_numbers<[2], [1], [1], [2], [0, 0, 0, 1, 1, 2], [0], [0]>} : vector<2x1x8xf32>, vector<2x8x4xf32>, vector<2x1x4xf32> -> vector<2x1x4xf32>
    "tpu.trace_stop"() : () -> ()
    %365 = vector.shape_cast %364 : vector<2x1x4xf32> to vector<2x4xf32>
    %366 = tpu.concatenate %232, %251, %270, %289, %308, %327, %346, %365 in 1 : vector<2x4xf32>, vector<2x4xf32>, vector<2x4xf32>, vector<2x4xf32>, vector<2x4xf32>, vector<2x4xf32>, vector<2x4xf32>, vector<2x4xf32> -> vector<2x32xf32>
    %c0_123 = arith.constant 0 : index
    %c0_124 = arith.constant 0 : index
    %367 = vector.load %arg14[%c0_123, %c0_124] : memref<32x32xf32, #tpu.memory_space<vmem>>, vector<32x32xf32>
    %cst_125 = arith.constant dense<0.000000e+00> : vector<2x32xf32>
    %368 = tpu.matmul %366, %367, %cst_125 {dimension_numbers = #tpu.dot_dimension_numbers<[1], [0], [0], [1], [0, 0, 1, 1], [], []>} : vector<2x32xf32>, vector<32x32xf32>, vector<2x32xf32> -> vector<2x32xf32>
    %c0_126 = arith.constant 0 : index
    %c0_127 = arith.constant 0 : index
    %369 = vector.load %arg15[%c0_126, %c0_127] : memref<1x32xf32, #tpu.memory_space<vmem>>, vector<1x32xf32>
    %370 = vector.broadcast %369 : vector<1x32xf32> to vector<2x32xf32>
    %371 = arith.addf %368, %370 : vector<2x32xf32>
    %372 = tpu.concatenate %190, %371 in 1 : vector<2x32xf32>, vector<2x32xf32> -> vector<2x64xf32>
    %c0_128 = arith.constant 0 : index
    %c0_129 = arith.constant 0 : index
    %373 = vector.load %arg16[%c0_128, %c0_129] : memref<2x64xf32, #tpu.memory_space<vmem>>, vector<2x64xf32>
    tpu.vector_store %arg16[%c0_128, %c0_129], %372 {strides = array<i32>} : memref<2x64xf32, #tpu.memory_space<vmem>>, vector<2x64xf32>,
    return
  }
}

</mosaic_0001>

<llo_original>
// kernel: unimodal_attention_forward.1
$region0: #{unimodal_attention_forward.1}
  #allocation0 [shape = 'u32[]', space=smem, size = 0x4, offset = 0x4, fixed_abs, tag = 'smem constant byte address 0x4 - core index']
  #allocation1 [shape = 'u32[144,128]{1,0:T(1,128)}', space=vmem, size = 0x12000, scoped, tag = 'internal scratch']
  #allocation2 [shape = 'f32[2,8,32]{2,1,0:T(8,128)}', space=vmem, size = 0x2000, scoped, tag = 'scratch operand']
  %s0 = inlined_call_operand.vmem [shape: f32[2,8,16], index: 0, kind: input, shape index: {}]
  %s1 = inlined_call_operand.vmem [shape: f32[16,128], index: 1, kind: input, shape index: {}]
  %s2 = inlined_call_operand.vmem [shape: f32[1,128], index: 2, kind: input, shape index: {}]
  %s3 = inlined_call_operand.vmem [shape: f32[32,128], index: 3, kind: input, shape index: {}]
  %s4 = inlined_call_operand.vmem [shape: f32[32,32], index: 4, kind: input, shape index: {}]
  %s5 = inlined_call_operand.vmem [shape: f32[1,32], index: 5, kind: input, shape index: {}]
  %s6 = inlined_call_operand.vmem [shape: f32[32,32], index: 6, kind: input, shape index: {}]
  %s7 = inlined_call_operand.vmem [shape: f32[1,32], index: 7, kind: input, shape index: {}]
  %s8 = inlined_call_operand.vmem [shape: f32[32,32], index: 8, kind: input, shape index: {}]
  %s9 = inlined_call_operand.vmem [shape: f32[1,32], index: 9, kind: input, shape index: {}]
  %s10 = inlined_call_operand.vmem [shape: f32[32,32], index: 10, kind: input, shape index: {}]
  %s11 = inlined_call_operand.vmem [shape: f32[1,32], index: 11, kind: input, shape index: {}]
  %s12 = inlined_call_operand.vmem [shape: f32[32,32], index: 12, kind: input, shape index: {}]
  %s13 = inlined_call_operand.vmem [shape: f32[1,32], index: 13, kind: input, shape index: {}]
  %s14 = inlined_call_operand.vmem [shape: f32[32,32], index: 14, kind: input, shape index: {}]
  %s15 = inlined_call_operand.vmem [shape: f32[1,32], index: 15, kind: input, shape index: {}]
  %s16 = inlined_call_operand.hbm [shape: f32[2,64], index: 16, kind: output, shape index: {0}]
  %s17 = inlined_call_operand.hbm [shape: f32[2,32], index: 17, kind: output, shape index: {1}]
  %18 = xla_tuple %s16, %s17
  %s19 = sld [smem:[#allocation0]]
  $region82: #{unimodal_attention_forward.1} parent=0
    _
  %s21 = ssub.s32 1, %s19
  %s22 = scalar_select 0, %s21, %s19
  $region1: #{unimodal_attention_forward.1} parent=0
    #allocation3 [shape = 'u8[1024]{0}', space=vmem, size = 0x400, scoped, tag = 'output window, operand 0, single buffered']
    #allocation4 [shape = 's32[1]{0}', space=sflag, size = 0x4, scoped, tag = 'scoped memory for unimodal_attention_forward.1']
    #allocation5 [shape = 'u8[1024]{0}', space=vmem, size = 0x400, scoped, tag = 'output window, operand 1, single buffered']
    #allocation6 [shape = 's32[1]{0}', space=sflag, size = 0x4, scoped, tag = 'scoped memory for unimodal_attention_forward.1']
    %23 = vsyncpa [#allocation4], 0
    %24 = vsyncpa [#allocation6], 0
    // Predicated region
    $region2: #{unimodal_attention_forward.1} parent=1 // pred_check
      _
    $region3: #{unimodal_attention_forward.1} parent=1 // pred_check_branch
      %26 = sbr.rel (0) target = $region5
    $region4: #{unimodal_attention_forward.1} parent=1 // pred_region
      _
    $region5: #{unimodal_attention_forward.1} parent=1 // pred_fallthru
      _
    // Predicated region
    $region6: #{unimodal_attention_forward.1} parent=1 // pred_check
      _
    $region7: #{unimodal_attention_forward.1} parent=1 // pred_check_branch
      %28 = sbr.rel (0) target = $region9
    $region8: #{unimodal_attention_forward.1} parent=1 // pred_region
      _
    $region9: #{unimodal_attention_forward.1} parent=1 // pred_fallthru
      _
    // Predicated region
    $region10: #{unimodal_attention_forward.1} parent=1 // pred_check
      _
    $region11: #{unimodal_attention_forward.1} parent=1 // pred_check_branch
      %30 = sbr.rel (0) target = $region13
    $region12: #{unimodal_attention_forward.1} parent=1 // pred_region
      _
    $region13: #{unimodal_attention_forward.1} parent=1 // pred_fallthru
      _
    // Predicated region
    $region14: #{unimodal_attention_forward.1} parent=1 // pred_check
      _
    $region15: #{unimodal_attention_forward.1} parent=1 // pred_check_branch
      %32 = sbr.rel (0) target = $region17
    $region16: #{unimodal_attention_forward.1} parent=1 // pred_region
      _
    $region17: #{unimodal_attention_forward.1} parent=1 // pred_fallthru
      _
    // Predicated region
    $region18: #{unimodal_attention_forward.1} parent=1 // pred_check
      _
    $region19: #{unimodal_attention_forward.1} parent=1 // pred_check_branch
      %34 = sbr.rel (0) target = $region21
    $region20: #{unimodal_attention_forward.1} parent=1 // pred_region
      _
    $region21: #{unimodal_attention_forward.1} parent=1 // pred_fallthru
      _
    // Predicated region
    $region22: #{unimodal_attention_forward.1} parent=1 // pred_check
      _
    $region23: #{unimodal_attention_forward.1} parent=1 // pred_check_branch
      %36 = sbr.rel (0) target = $region25
    $region24: #{unimodal_attention_forward.1} parent=1 // pred_region
      _
    $region25: #{unimodal_attention_forward.1} parent=1 // pred_fallthru
      _
    // Predicated region
    $region26: #{unimodal_attention_forward.1} parent=1 // pred_check
      _
    $region27: #{unimodal_attention_forward.1} parent=1 // pred_check_branch
      %38 = sbr.rel (0) target = $region29
    $region28: #{unimodal_attention_forward.1} parent=1 // pred_region
      _
    $region29: #{unimodal_attention_forward.1} parent=1 // pred_fallthru
      _
    // Predicated region
    $region30: #{unimodal_attention_forward.1} parent=1 // pred_check
      _
    $region31: #{unimodal_attention_forward.1} parent=1 // pred_check_branch
      %40 = sbr.rel (0) target = $region33
    $region32: #{unimodal_attention_forward.1} parent=1 // pred_region
      _
    $region33: #{unimodal_attention_forward.1} parent=1 // pred_fallthru
      _
    // Predicated region
    $region34: #{unimodal_attention_forward.1} parent=1 // pred_check
      _
    $region35: #{unimodal_attention_forward.1} parent=1 // pred_check_branch
      %42 = sbr.rel (0) target = $region37
    $region36: #{unimodal_attention_forward.1} parent=1 // pred_region
      _
    $region37: #{unimodal_attention_forward.1} parent=1 // pred_fallthru
      _
    // Predicated region
    $region38: #{unimodal_attention_forward.1} parent=1 // pred_check
      _
    $region39: #{unimodal_attention_forward.1} parent=1 // pred_check_branch
      %44 = sbr.rel (0) target = $region41
    $region40: #{unimodal_attention_forward.1} parent=1 // pred_region
      _
    $region41: #{unimodal_attention_forward.1} parent=1 // pred_fallthru
      _
    // Predicated region
    $region42: #{unimodal_attention_forward.1} parent=1 // pred_check
      _
    $region43: #{unimodal_attention_forward.1} parent=1 // pred_check_branch
      %46 = sbr.rel (0) target = $region45
    $region44: #{unimodal_attention_forward.1} parent=1 // pred_region
      _
    $region45: #{unimodal_attention_forward.1} parent=1 // pred_fallthru
      _
    // Predicated region
    $region46: #{unimodal_attention_forward.1} parent=1 // pred_check
      _
    $region47: #{unimodal_attention_forward.1} parent=1 // pred_check_branch
      %48 = sbr.rel (0) target = $region49
    $region48: #{unimodal_attention_forward.1} parent=1 // pred_region
      _
    $region49: #{unimodal_attention_forward.1} parent=1 // pred_fallthru
      _
    // Predicated region
    $region50: #{unimodal_attention_forward.1} parent=1 // pred_check
      _
    $region51: #{unimodal_attention_forward.1} parent=1 // pred_check_branch
      %50 = sbr.rel (0) target = $region53
    $region52: #{unimodal_attention_forward.1} parent=1 // pred_region
      _
    $region53: #{unimodal_attention_forward.1} parent=1 // pred_fallthru
      _
    // Predicated region
    $region54: #{unimodal_attention_forward.1} parent=1 // pred_check
      _
    $region55: #{unimodal_attention_forward.1} parent=1 // pred_check_branch
      %52 = sbr.rel (0) target = $region57
    $region56: #{unimodal_attention_forward.1} parent=1 // pred_region
      _
    $region57: #{unimodal_attention_forward.1} parent=1 // pred_fallthru
      _
    // Predicated region
    $region58: #{unimodal_attention_forward.1} parent=1 // pred_check
      _
    $region59: #{unimodal_attention_forward.1} parent=1 // pred_check_branch
      %54 = sbr.rel (0) target = $region61
    $region60: #{unimodal_attention_forward.1} parent=1 // pred_region
      _
    $region61: #{unimodal_attention_forward.1} parent=1 // pred_fallthru
      _
    // Predicated region
    $region62: #{unimodal_attention_forward.1} parent=1 // pred_check
      _
    $region63: #{unimodal_attention_forward.1} parent=1 // pred_check_branch
      %56 = sbr.rel (0) target = $region65
    $region64: #{unimodal_attention_forward.1} parent=1 // pred_region
      _
    $region65: #{unimodal_attention_forward.1} parent=1 // pred_fallthru
      _
    %v57 = vld [vmem:[%s1] sm:$0xff]
    %v58 = vld [vmem:[%s1 + $0x8] sm:$0xff]
    %v59 = vld [vmem:[%s3] sm:$0xff]
    %v60 = vld [vmem:[%s3 + $0x8] sm:$0xff]
    %v61 = vld [vmem:[%s3 + $0x10] sm:$0xff]
    %v62 = vld [vmem:[%s3 + $0x18] sm:$0xff]
    %v63 = vld [vmem:[%s0] sm:$0xff]
    %v64 = vld [vmem:[%s0 + $0x8] sm:$0xff]
    %v65 = vld [vmem:[%s2] sm:$0x1]
    %v67 = vlaneseq
    %v68 = vshrl.u32 %v67, 7
    %v69 = vsub.s32 0, %v68
    %v70 = vrot.slane %v65, %v69
    %vm72 = vcmask 130048
    %v74 = vsel %vm72, %v63, 0
    %v77 = vsel %vm72, %v64, 0
    %79 = vmatprep.subr.mxu0 0.0
    %80 = vmatpush1.msra.mxu0 %v57
    %81 = vmatprep.subr.mxu0 0.0
    %82 = vmatpush1.msra.mxu0 %v58
    %83 = vmatprep.subr.mxu0 0.0
    %84 = vmatpush1.msra.mxu0 0.0
    %85 = vmatprep.subr.mxu0 0.0
    %86 = vmatpush1.msra.mxu0 0.0
    %87 = vmatprep.subr.mxu0 0.0
    %88 = vmatpush1.msra.mxu0 0.0
    %89 = vmatprep.subr.mxu0 0.0
    %90 = vmatpush1.msra.mxu0 0.0
    %91 = vmatprep.subr.mxu0 0.0
    %92 = vmatpush1.msra.mxu0 0.0
    %93 = vmatprep.subr.mxu0 0.0
    %94 = vmatpush1.msra.mxu0 0.0
    %95 = vmatprep.subr.mxu0 0.0
    %96 = vmatpush1.msra.mxu0 0.0
    %97 = vmatprep.subr.mxu0 0.0
    %98 = vmatpush1.msra.mxu0 0.0
    %99 = vmatprep.subr.mxu0 0.0
    %100 = vmatpush1.msra.mxu0 0.0
    %101 = vmatprep.subr.mxu0 0.0
    %102 = vmatpush1.msra.mxu0 0.0
    %103 = vmatprep.subr.mxu0 0.0
    %104 = vmatpush1.msra.mxu0 0.0
    %105 = vmatprep.subr.mxu0 0.0
    %106 = vmatpush1.msra.mxu0 0.0
    %107 = vmatprep.subr.mxu0 0.0
    %108 = vmatpush1.msra.mxu0 0.0
    %109 = vmatprep.subr.mxu0 0.0
    %110 = vmatpush1.msra.mxu0 0.0
    %111 = vmatprep.subr.mxu0 0.0
    %112 = vmatpush1.msra.mxu0 0.0
    %113 = vmatprep.subr.mxu0 0.0
    %114 = vmatpush1.msra.mxu0 0.0
    %115 = vmatprep.subr.mxu0 0.0
    %116 = vmatpush1.msra.mxu0 0.0
    %117 = vmatprep.subr.mxu0 0.0
    %118 = vmatpush1.msra.mxu0 0.0
    %119 = vmatprep.subr.mxu0 0.0
    %120 = vmatpush1.msra.mxu0 0.0
    %121 = vmatprep.subr.mxu0 0.0
    %122 = vmatpush1.msra.mxu0 0.0
    %123 = vmatprep.subr.mxu0 0.0
    %124 = vmatpush1.msra.mxu0 0.0
    %125 = vmatprep.subr.mxu0 0.0
    %126 = vmatpush1.msra.mxu0 0.0
    %127 = vmatprep.subr.mxu0 0.0
    %128 = vmatpush1.msra.mxu0 0.0
    %129 = vmatprep.subr.mxu0 0.0
    %130 = vmatpush1.msra.mxu0 0.0
    %131 = vmatprep.subr.mxu0 0.0
    %132 = vmatpush1.msra.mxu0 0.0
    %133 = vmatprep.subr.mxu0 0.0
    %134 = vmatpush1.msra.mxu0 0.0
    %135 = vmatprep.subr.mxu0 0.0
    %136 = vmatpush1.msra.mxu0 0.0
    %137 = vmatprep.subr.mxu0 0.0
    %138 = vmatpush1.msra.mxu0 0.0
    %139 = vmatprep.subr.mxu0 0.0
    %140 = vmatpush1.msra.mxu0 0.0
    %141 = vmatprep.subr.mxu0 0.0
    %142 = vmatpush1.msra.mxu0 0.0
    %143 = vmatprep.mubr.f32.mxu0 0.0
    %144 = vmatmul.mubr.f32.gmra.mrb[0].mxu0 %v74
    %v145 = vpop.f32.mrb[0].mxu0
    %v146 = vadd.f32 %v70, %v145
    %v147 = vpop.f32.mrb[0].mxu0
    %148 = vmatprep.mubr.f32.mxu0 0.0
    %149 = vmatmul.mubr.f32.gmra.mrb[0].mxu0 %v77
    %v150 = vpop.f32.mrb[0].mxu0
    %v151 = vadd.f32 %v70, %v150
    %v152 = vpop.f32.mrb[0].mxu0
    %153 = vdwg.mxu0
    %vm154 = vcmask 261120
    %v156 = vsel %vm154, 0.0, 0
    %158 = vmatprep.subr.mxu0 0.0
    %159 = vmatpush1.msra.mxu0 %v59
    %160 = vmatprep.subr.mxu0 0.0
    %161 = vmatpush1.msra.mxu0 %v60
    %162 = vmatprep.subr.mxu0 0.0
    %163 = vmatpush1.msra.mxu0 %v61
    %164 = vmatprep.subr.mxu0 0.0
    %165 = vmatpush1.msra.mxu0 %v62
    %166 = vmatprep.subr.mxu0 0.0
    %167 = vmatpush1.msra.mxu0 0.0
    %168 = vmatprep.subr.mxu0 0.0
    %169 = vmatpush1.msra.mxu0 0.0
    %170 = vmatprep.subr.mxu0 0.0
    %171 = vmatpush1.msra.mxu0 0.0
    %172 = vmatprep.subr.mxu0 0.0
    %173 = vmatpush1.msra.mxu0 0.0
    %174 = vmatprep.subr.mxu0 0.0
    %175 = vmatpush1.msra.mxu0 0.0
    %176 = vmatprep.subr.mxu0 0.0
    %177 = vmatpush1.msra.mxu0 0.0
    %178 = vmatprep.subr.mxu0 0.0
    %179 = vmatpush1.msra.mxu0 0.0
    %180 = vmatprep.subr.mxu0 0.0
    %181 = vmatpush1.msra.mxu0 0.0
    %182 = vmatprep.subr.mxu0 0.0
    %183 = vmatpush1.msra.mxu0 0.0
    %184 = vmatprep.subr.mxu0 0.0
    %185 = vmatpush1.msra.mxu0 0.0
    %186 = vmatprep.subr.mxu0 0.0
    %187 = vmatpush1.msra.mxu0 0.0
    %188 = vmatprep.subr.mxu0 0.0
    %189 = vmatpush1.msra.mxu0 0.0
    %190 = vmatprep.subr.mxu0 0.0
    %191 = vmatpush1.msra.mxu0 0.0
    %192 = vmatprep.subr.mxu0 0.0
    %193 = vmatpush1.msra.mxu0 0.0
    %194 = vmatprep.subr.mxu0 0.0
    %195 = vmatpush1.msra.mxu0 0.0
    %196 = vmatprep.subr.mxu0 0.0
    %197 = vmatpush1.msra.mxu0 0.0
    %198 = vmatprep.subr.mxu0 0.0
    %199 = vmatpush1.msra.mxu0 0.0
    %200 = vmatprep.subr.mxu0 0.0
    %201 = vmatpush1.msra.mxu0 0.0
    %202 = vmatprep.subr.mxu0 0.0
    %203 = vmatpush1.msra.mxu0 0.0
    %204 = vmatprep.subr.mxu0 0.0
    %205 = vmatpush1.msra.mxu0 0.0
    %206 = vmatprep.subr.mxu0 0.0
    %207 = vmatpush1.msra.mxu0 0.0
    %208 = vmatprep.subr.mxu0 0.0
    %209 = vmatpush1.msra.mxu0 0.0
    %210 = vmatprep.subr.mxu0 0.0
    %211 = vmatpush1.msra.mxu0 0.0
    %212 = vmatprep.subr.mxu0 0.0
    %213 = vmatpush1.msra.mxu0 0.0
    %214 = vmatprep.subr.mxu0 0.0
    %215 = vmatpush1.msra.mxu0 0.0
    %216 = vmatprep.subr.mxu0 0.0
    %217 = vmatpush1.msra.mxu0 0.0
    %218 = vmatprep.subr.mxu0 0.0
    %219 = vmatpush1.msra.mxu0 0.0
    %220 = vmatprep.subr.mxu0 0.0
    %221 = vmatpush1.msra.mxu0 0.0
    %222 = vmatprep.mubr.f32.mxu0 0.0
    %223 = vmatmul.mubr.f32.gmra.mrb[0].mxu0 %v156
    %v224 = vpop.f32.mrb[0].mxu0
    %v225 = vadd.f32 0.0, %v224
    %v226 = vpop.f32.mrb[0].mxu0
    %227 = vdwg.mxu0
    %v229 = vrot.slane %v225, 1
    %v232 = vadd.f32 %v146, %v225
    %v233 = vadd.f32 %v151, %v229
    %v234 = vxor.u32 %v232, 2147483648
    %v235 = vxor.u32 %v233, 2147483648
    %v236 = vmul.f32 %v234, 1.442695
    %v237 = vpow.pop %v236
    %v238 = vmul.f32 %v235, 1.442695
    %v239 = vpow.pop %v238
    %v240 = vadd.f32 %v237, 1.0
    %v241 = vadd.f32 %v239, 1.0
    %v242 = vrcp.pop %v240
    %v243 = vmul.f32 1.0, %v242
    %v244 = vrcp.pop %v241
    %v245 = vmul.f32 1.0, %v244
    %v246 = vtanh.pop %v232
    %v247 = vtanh.pop %v233
    %v248 = vmul.f32 %v243, 0.0
    %v249 = vmul.f32 %v245, 0.0
    %252 = vrot.lane.b32.xlu0 %v246, 64
    %v253 = vpop.permute.xlu0 %252
    %254 = vrot.lane.b32.xlu0 %v247, 64
    %v255 = vpop.permute.xlu0 %254
    %v258 = vmul.f32 %v243, %v253
    %v259 = vmul.f32 %v245, %v255
    %262 = vrot.lane.b32.xlu0 %v258, 32
    %v263 = vpop.permute.xlu0 %262
    %264 = vrot.lane.b32.xlu0 %v259, 32
    %v265 = vpop.permute.xlu0 %264
    %v268 = vadd.f32 %v248, %v263
    %v269 = vadd.f32 %v249, %v265
    %v270 = vtanh.pop %v268
    %v271 = vtanh.pop %v269
    %274 = vrot.lane.b32.xlu0 %v270, 64
    %v275 = vpop.permute.xlu0 %274
    %276 = vrot.lane.b32.xlu0 %v271, 64
    %v277 = vpop.permute.xlu0 %276
    %v280 = vmul.f32 %v243, %v275
    %v281 = vmul.f32 %v245, %v277
    %284 = vrot.lane.b32.xlu0 %v280, 32
    %v285 = vpop.permute.xlu0 %284
    %286 = vrot.lane.b32.xlu0 %v281, 32
    %v287 = vpop.permute.xlu0 %286
    %vm290 = vcmask 253952
    %291 = vst.msk [vmem:[#allocation2] sm:$0x1] %vm290, %v285
    %292 = vst.msk [vmem:[#allocation2 + $0x8] sm:$0x1] %vm290, %v287
    %v293 = vrot.slane %v281, 7
    %vm294 = vcmask 1041409
    %v295 = vsel %vm294, %v293, %v280
    %296 = vrot.lane.b32.xlu0 %v295, 32
    %v297 = vpop.permute.xlu0 %296
    %v298 = vsel %vm154, %v297, 0
    %300 = vmatprep.subr.mxu0 0.0
    %301 = vmatpush1.msra.mxu0 %v59
    %302 = vmatprep.subr.mxu0 0.0
    %303 = vmatpush1.msra.mxu0 %v60
    %304 = vmatprep.subr.mxu0 0.0
    %305 = vmatpush1.msra.mxu0 %v61
    %306 = vmatprep.subr.mxu0 0.0
    %307 = vmatpush1.msra.mxu0 %v62
    %308 = vmatprep.subr.mxu0 0.0
    %309 = vmatpush1.msra.mxu0 0.0
    %310 = vmatprep.subr.mxu0 0.0
    %311 = vmatpush1.msra.mxu0 0.0
    %312 = vmatprep.subr.mxu0 0.0
    %313 = vmatpush1.msra.mxu0 0.0
    %314 = vmatprep.subr.mxu0 0.0
    %315 = vmatpush1.msra.mxu0 0.0
    %316 = vmatprep.subr.mxu0 0.0
    %317 = vmatpush1.msra.mxu0 0.0
    %318 = vmatprep.subr.mxu0 0.0
    %319 = vmatpush1.msra.mxu0 0.0
    %320 = vmatprep.subr.mxu0 0.0
    %321 = vmatpush1.msra.mxu0 0.0
    %322 = vmatprep.subr.mxu0 0.0
    %323 = vmatpush1.msra.mxu0 0.0
    %324 = vmatprep.subr.mxu0 0.0
    %325 = vmatpush1.msra.mxu0 0.0
    %326 = vmatprep.subr.mxu0 0.0
    %327 = vmatpush1.msra.mxu0 0.0
    %328 = vmatprep.subr.mxu0 0.0
    %329 = vmatpush1.msra.mxu0 0.0
    %330 = vmatprep.subr.mxu0 0.0
    %331 = vmatpush1.msra.mxu0 0.0
    %332 = vmatprep.subr.mxu0 0.0
    %333 = vmatpush1.msra.mxu0 0.0
    %334 = vmatprep.subr.mxu0 0.0
    %335 = vmatpush1.msra.mxu0 0.0
    %336 = vmatprep.subr.mxu0 0.0
    %337 = vmatpush1.msra.mxu0 0.0
    %338 = vmatprep.subr.mxu0 0.0
    %339 = vmatpush1.msra.mxu0 0.0
    %340 = vmatprep.subr.mxu0 0.0
    %341 = vmatpush1.msra.mxu0 0.0
    %342 = vmatprep.subr.mxu0 0.0
    %343 = vmatpush1.msra.mxu0 0.0
    %344 = vmatprep.subr.mxu0 0.0
    %345 = vmatpush1.msra.mxu0 0.0
    %346 = vmatprep.subr.mxu0 0.0
    %347 = vmatpush1.msra.mxu0 0.0
    %348 = vmatprep.subr.mxu0 0.0
    %349 = vmatpush1.msra.mxu0 0.0
    %350 = vmatprep.subr.mxu0 0.0
    %351 = vmatpush1.msra.mxu0 0.0
    %352 = vmatprep.subr.mxu0 0.0
    %353 = vmatpush1.msra.mxu0 0.0
    %354 = vmatprep.subr.mxu0 0.0
    %355 = vmatpush1.msra.mxu0 0.0
    %356 = vmatprep.subr.mxu0 0.0
    %357 = vmatpush1.msra.mxu0 0.0
    %358 = vmatprep.subr.mxu0 0.0
    %359 = vmatpush1.msra.mxu0 0.0
    %360 = vmatprep.subr.mxu0 0.0
    %361 = vmatpush1.msra.mxu0 0.0
    %362 = vmatprep.subr.mxu0 0.0
    %363 = vmatpush1.msra.mxu0 0.0
    %364 = vmatprep.mubr.f32.mxu0 0.0
    %365 = vmatmul.mubr.f32.gmra.mrb[0].mxu0 %v298
    %v366 = vpop.f32.mrb[0].mxu0
    %v367 = vadd.f32 0.0, %v366
    %v368 = vpop.f32.mrb[0].mxu0
    %369 = vdwg.mxu0
    %v371 = vrot.slane %v367, 7
    %v374 = vadd.f32 %v146, %v371
    %v375 = vadd.f32 %v151, %v367
    %v376 = vxor.u32 %v374, 2147483648
    %v377 = vxor.u32 %v375, 2147483648
    %v378 = vmul.f32 %v376, 1.442695
    %v379 = vpow.pop %v378
    %v380 = vmul.f32 %v377, 1.442695
    %v381 = vpow.pop %v380
    %v382 = vadd.f32 %v379, 1.0
    %v383 = vadd.f32 %v381, 1.0
    %v384 = vrcp.pop %v382
    %v385 = vmul.f32 1.0, %v384
    %v386 = vrcp.pop %v383
    %v387 = vmul.f32 1.0, %v386
    %v388 = vtanh.pop %v374
    %v389 = vtanh.pop %v375
    %v392 = vrot.slane %v268, 7
    %v393 = vrot.slane %v269, 7
    %v396 = vmul.f32 %v385, %v392
    %v397 = vmul.f32 %v387, %v393
    %400 = vrot.lane.b32.xlu0 %v388, 64
    %v401 = vpop.permute.xlu0 %400
    %402 = vrot.lane.b32.xlu0 %v389, 64
    %v403 = vpop.permute.xlu0 %402
    %v406 = vmul.f32 %v385, %v401
    %v407 = vmul.f32 %v387, %v403
    %410 = vrot.lane.b32.xlu0 %v406, 32
    %v411 = vpop.permute.xlu0 %410
    %412 = vrot.lane.b32.xlu0 %v407, 32
    %v413 = vpop.permute.xlu0 %412
    %v416 = vadd.f32 %v396, %v411
    %v417 = vadd.f32 %v397, %v413
    %v418 = vtanh.pop %v416
    %v419 = vtanh.pop %v417
    %422 = vrot.lane.b32.xlu0 %v418, 64
    %v423 = vpop.permute.xlu0 %422
    %424 = vrot.lane.b32.xlu0 %v419, 64
    %v425 = vpop.permute.xlu0 %424
    %v428 = vmul.f32 %v385, %v423
    %v429 = vmul.f32 %v387, %v425
    %432 = vrot.lane.b32.xlu0 %v428, 32
    %v433 = vpop.permute.xlu0 %432
    %434 = vrot.lane.b32.xlu0 %v429, 32
    %v435 = vpop.permute.xlu0 %434
    %vm438 = vcmask 254977
    %439 = vst.msk [vmem:[#allocation2] sm:$0x2] %vm438, %v433
    %440 = vst.msk [vmem:[#allocation2 + $0x8] sm:$0x2] %vm438, %v435
    %v441 = vrot.slane %v428, 1
    %v442 = vsel %vm294, %v429, %v441
    %443 = vrot.lane.b32.xlu0 %v442, 32
    %v444 = vpop.permute.xlu0 %443
    %v445 = vsel %vm154, %v444, 0
    %447 = vmatprep.subr.mxu0 0.0
    %448 = vmatpush1.msra.mxu0 %v59
    %449 = vmatprep.subr.mxu0 0.0
    %450 = vmatpush1.msra.mxu0 %v60
    %451 = vmatprep.subr.mxu0 0.0
    %452 = vmatpush1.msra.mxu0 %v61
    %453 = vmatprep.subr.mxu0 0.0
    %454 = vmatpush1.msra.mxu0 %v62
    %455 = vmatprep.subr.mxu0 0.0
    %456 = vmatpush1.msra.mxu0 0.0
    %457 = vmatprep.subr.mxu0 0.0
    %458 = vmatpush1.msra.mxu0 0.0
    %459 = vmatprep.subr.mxu0 0.0
    %460 = vmatpush1.msra.mxu0 0.0
    %461 = vmatprep.subr.mxu0 0.0
    %462 = vmatpush1.msra.mxu0 0.0
    %463 = vmatprep.subr.mxu0 0.0
    %464 = vmatpush1.msra.mxu0 0.0
    %465 = vmatprep.subr.mxu0 0.0
    %466 = vmatpush1.msra.mxu0 0.0
    %467 = vmatprep.subr.mxu0 0.0
    %468 = vmatpush1.msra.mxu0 0.0
    %469 = vmatprep.subr.mxu0 0.0
    %470 = vmatpush1.msra.mxu0 0.0
    %471 = vmatprep.subr.mxu0 0.0
    %472 = vmatpush1.msra.mxu0 0.0
    %473 = vmatprep.subr.mxu0 0.0
    %474 = vmatpush1.msra.mxu0 0.0
    %475 = vmatprep.subr.mxu0 0.0
    %476 = vmatpush1.msra.mxu0 0.0
    %477 = vmatprep.subr.mxu0 0.0
    %478 = vmatpush1.msra.mxu0 0.0
    %479 = vmatprep.subr.mxu0 0.0
    %480 = vmatpush1.msra.mxu0 0.0
    %481 = vmatprep.subr.mxu0 0.0
    %482 = vmatpush1.msra.mxu0 0.0
    %483 = vmatprep.subr.mxu0 0.0
    %484 = vmatpush1.msra.mxu0 0.0
    %485 = vmatprep.subr.mxu0 0.0
    %486 = vmatpush1.msra.mxu0 0.0
    %487 = vmatprep.subr.mxu0 0.0
    %488 = vmatpush1.msra.mxu0 0.0
    %489 = vmatprep.subr.mxu0 0.0
    %490 = vmatpush1.msra.mxu0 0.0
    %491 = vmatprep.subr.mxu0 0.0
    %492 = vmatpush1.msra.mxu0 0.0
    %493 = vmatprep.subr.mxu0 0.0
    %494 = vmatpush1.msra.mxu0 0.0
    %495 = vmatprep.subr.mxu0 0.0
    %496 = vmatpush1.msra.mxu0 0.0
    %497 = vmatprep.subr.mxu0 0.0
    %498 = vmatpush1.msra.mxu0 0.0
    %499 = vmatprep.subr.mxu0 0.0
    %500 = vmatpush1.msra.mxu0 0.0
    %501 = vmatprep.subr.mxu0 0.0
    %502 = vmatpush1.msra.mxu0 0.0
    %503 = vmatprep.subr.mxu0 0.0
    %504 = vmatpush1.msra.mxu0 0.0
    %505 = vmatprep.subr.mxu0 0.0
    %506 = vmatpush1.msra.mxu0 0.0
    %507 = vmatprep.subr.mxu0 0.0
    %508 = vmatpush1.msra.mxu0 0.0
    %509 = vmatprep.subr.mxu0 0.0
    %510 = vmatpush1.msra.mxu0 0.0
    %511 = vmatprep.mubr.f32.mxu0 0.0
    %512 = vmatmul.mubr.f32.gmra.mrb[0].mxu0 %v445
    %v513 = vpop.f32.mrb[0].mxu0
    %v514 = vadd.f32 0.0, %v513
    %v515 = vpop.f32.mrb[0].mxu0
    %516 = vdwg.mxu0
    %v518 = vrot.slane %v514, 6
    %v519 = vrot.slane %v514, 7
    %v522 = vadd.f32 %v146, %v518
    %v523 = vadd.f32 %v151, %v519
    %v524 = vxor.u32 %v522, 2147483648
    %v525 = vxor.u32 %v523, 2147483648
    %v526 = vmul.f32 %v524, 1.442695
    %v527 = vpow.pop %v526
    %v528 = vmul.f32 %v525, 1.442695
    %v529 = vpow.pop %v528
    %v530 = vadd.f32 %v527, 1.0
    %v531 = vadd.f32 %v529, 1.0
    %v532 = vrcp.pop %v530
    %v533 = vmul.f32 1.0, %v532
    %v534 = vrcp.pop %v531
    %v535 = vmul.f32 1.0, %v534
    %v536 = vtanh.pop %v522
    %v537 = vtanh.pop %v523
    %v540 = vrot.slane %v416, 7
    %v541 = vrot.slane %v417, 7
    %v544 = vmul.f32 %v533, %v540
    %v545 = vmul.f32 %v535, %v541
    %548 = vrot.lane.b32.xlu0 %v536, 64
    %v549 = vpop.permute.xlu0 %548
    %550 = vrot.lane.b32.xlu0 %v537, 64
    %v551 = vpop.permute.xlu0 %550
    %v554 = vmul.f32 %v533, %v549
    %v555 = vmul.f32 %v535, %v551
    %558 = vrot.lane.b32.xlu0 %v554, 32
    %v559 = vpop.permute.xlu0 %558
    %560 = vrot.lane.b32.xlu0 %v555, 32
    %v561 = vpop.permute.xlu0 %560
    %v564 = vadd.f32 %v544, %v559
    %v565 = vadd.f32 %v545, %v561
    %v566 = vtanh.pop %v564
    %v567 = vtanh.pop %v565
    %570 = vrot.lane.b32.xlu0 %v566, 64
    %v571 = vpop.permute.xlu0 %570
    %572 = vrot.lane.b32.xlu0 %v567, 64
    %v573 = vpop.permute.xlu0 %572
    %v576 = vmul.f32 %v533, %v571
    %v577 = vmul.f32 %v535, %v573
    %580 = vrot.lane.b32.xlu0 %v576, 32
    %v581 = vpop.permute.xlu0 %580
    %582 = vrot.lane.b32.xlu0 %v577, 32
    %v583 = vpop.permute.xlu0 %582
    %vm586 = vcmask 256002
    %587 = vst.msk [vmem:[#allocation2] sm:$0x4] %vm586, %v581
    %588 = vst.msk [vmem:[#allocation2 + $0x8] sm:$0x4] %vm586, %v583
    %v589 = vrot.slane %v576, 2
    %v590 = vrot.slane %v577, 1
    %v591 = vsel %vm294, %v590, %v589
    %592 = vrot.lane.b32.xlu0 %v591, 32
    %v593 = vpop.permute.xlu0 %592
    %v594 = vsel %vm154, %v593, 0
    %596 = vmatprep.subr.mxu0 0.0
    %597 = vmatpush1.msra.mxu0 %v59
    %598 = vmatprep.subr.mxu0 0.0
    %599 = vmatpush1.msra.mxu0 %v60
    %600 = vmatprep.subr.mxu0 0.0
    %601 = vmatpush1.msra.mxu0 %v61
    %602 = vmatprep.subr.mxu0 0.0
    %603 = vmatpush1.msra.mxu0 %v62
    %604 = vmatprep.subr.mxu0 0.0
    %605 = vmatpush1.msra.mxu0 0.0
    %606 = vmatprep.subr.mxu0 0.0
    %607 = vmatpush1.msra.mxu0 0.0
    %608 = vmatprep.subr.mxu0 0.0
    %609 = vmatpush1.msra.mxu0 0.0
    %610 = vmatprep.subr.mxu0 0.0
    %611 = vmatpush1.msra.mxu0 0.0
    %612 = vmatprep.subr.mxu0 0.0
    %613 = vmatpush1.msra.mxu0 0.0
    %614 = vmatprep.subr.mxu0 0.0
    %615 = vmatpush1.msra.mxu0 0.0
    %616 = vmatprep.subr.mxu0 0.0
    %617 = vmatpush1.msra.mxu0 0.0
    %618 = vmatprep.subr.mxu0 0.0
    %619 = vmatpush1.msra.mxu0 0.0
    %620 = vmatprep.subr.mxu0 0.0
    %621 = vmatpush1.msra.mxu0 0.0
    %622 = vmatprep.subr.mxu0 0.0
    %623 = vmatpush1.msra.mxu0 0.0
    %624 = vmatprep.subr.mxu0 0.0
    %625 = vmatpush1.msra.mxu0 0.0
    %626 = vmatprep.subr.mxu0 0.0
    %627 = vmatpush1.msra.mxu0 0.0
    %628 = vmatprep.subr.mxu0 0.0
    %629 = vmatpush1.msra.mxu0 0.0
    %630 = vmatprep.subr.mxu0 0.0
    %631 = vmatpush1.msra.mxu0 0.0
    %632 = vmatprep.subr.mxu0 0.0
    %633 = vmatpush1.msra.mxu0 0.0
    %634 = vmatprep.subr.mxu0 0.0
    %635 = vmatpush1.msra.mxu0 0.0
    %636 = vmatprep.subr.mxu0 0.0
    %637 = vmatpush1.msra.mxu0 0.0
    %638 = vmatprep.subr.mxu0 0.0
    %639 = vmatpush1.msra.mxu0 0.0
    %640 = vmatprep.subr.mxu0 0.0
    %641 = vmatpush1.msra.mxu0 0.0
    %642 = vmatprep.subr.mxu0 0.0
    %643 = vmatpush1.msra.mxu0 0.0
    %644 = vmatprep.subr.mxu0 0.0
    %645 = vmatpush1.msra.mxu0 0.0
    %646 = vmatprep.subr.mxu0 0.0
    %647 = vmatpush1.msra.mxu0 0.0
    %648 = vmatprep.subr.mxu0 0.0
    %649 = vmatpush1.msra.mxu0 0.0
    %650 = vmatprep.subr.mxu0 0.0
    %651 = vmatpush1.msra.mxu0 0.0
    %652 = vmatprep.subr.mxu0 0.0
    %653 = vmatpush1.msra.mxu0 0.0
    %654 = vmatprep.subr.mxu0 0.0
    %655 = vmatpush1.msra.mxu0 0.0
    %656 = vmatprep.subr.mxu0 0.0
    %657 = vmatpush1.msra.mxu0 0.0
    %658 = vmatprep.subr.mxu0 0.0
    %659 = vmatpush1.msra.mxu0 0.0
    %660 = vmatprep.mubr.f32.mxu0 0.0
    %661 = vmatmul.mubr.f32.gmra.mrb[0].mxu0 %v594
    %v662 = vpop.f32.mrb[0].mxu0
    %v663 = vadd.f32 0.0, %v662
    %v664 = vpop.f32.mrb[0].mxu0
    %665 = vdwg.mxu0
    %v667 = vrot.slane %v663, 5
    %v668 = vrot.slane %v663, 6
    %v671 = vadd.f32 %v146, %v667
    %v672 = vadd.f32 %v151, %v668
    %v673 = vxor.u32 %v671, 2147483648
    %v674 = vxor.u32 %v672, 2147483648
    %v675 = vmul.f32 %v673, 1.442695
    %v676 = vpow.pop %v675
    %v677 = vmul.f32 %v674, 1.442695
    %v678 = vpow.pop %v677
    %v679 = vadd.f32 %v676, 1.0
    %v680 = vadd.f32 %v678, 1.0
    %v681 = vrcp.pop %v679
    %v682 = vmul.f32 1.0, %v681
    %v683 = vrcp.pop %v680
    %v684 = vmul.f32 1.0, %v683
    %v685 = vtanh.pop %v671
    %v686 = vtanh.pop %v672
    %v689 = vrot.slane %v564, 7
    %v690 = vrot.slane %v565, 7
    %v693 = vmul.f32 %v682, %v689
    %v694 = vmul.f32 %v684, %v690
    %697 = vrot.lane.b32.xlu0 %v685, 64
    %v698 = vpop.permute.xlu0 %697
    %699 = vrot.lane.b32.xlu0 %v686, 64
    %v700 = vpop.permute.xlu0 %699
    %v703 = vmul.f32 %v682, %v698
    %v704 = vmul.f32 %v684, %v700
    %707 = vrot.lane.b32.xlu0 %v703, 32
    %v708 = vpop.permute.xlu0 %707
    %709 = vrot.lane.b32.xlu0 %v704, 32
    %v710 = vpop.permute.xlu0 %709
    %v713 = vadd.f32 %v693, %v708
    %v714 = vadd.f32 %v694, %v710
    %v715 = vtanh.pop %v713
    %v716 = vtanh.pop %v714
    %719 = vrot.lane.b32.xlu0 %v715, 64
    %v720 = vpop.permute.xlu0 %719
    %721 = vrot.lane.b32.xlu0 %v716, 64
    %v722 = vpop.permute.xlu0 %721
    %v725 = vmul.f32 %v682, %v720
    %v726 = vmul.f32 %v684, %v722
    %729 = vrot.lane.b32.xlu0 %v725, 32
    %v730 = vpop.permute.xlu0 %729
    %731 = vrot.lane.b32.xlu0 %v726, 32
    %v732 = vpop.permute.xlu0 %731
    %vm735 = vcmask 257027
    %736 = vst.msk [vmem:[#allocation2] sm:$0x8] %vm735, %v730
    %737 = vst.msk [vmem:[#allocation2 + $0x8] sm:$0x8] %vm735, %v732
    %v738 = vrot.slane %v725, 3
    %v739 = vrot.slane %v726, 2
    %v740 = vsel %vm294, %v739, %v738
    %741 = vrot.lane.b32.xlu0 %v740, 32
    %v742 = vpop.permute.xlu0 %741
    %v743 = vsel %vm154, %v742, 0
    %745 = vmatprep.subr.mxu0 0.0
    %746 = vmatpush1.msra.mxu0 %v59
    %747 = vmatprep.subr.mxu0 0.0
    %748 = vmatpush1.msra.mxu0 %v60
    %749 = vmatprep.subr.mxu0 0.0
    %750 = vmatpush1.msra.mxu0 %v61
    %751 = vmatprep.subr.mxu0 0.0
    %752 = vmatpush1.msra.mxu0 %v62
    %753 = vmatprep.subr.mxu0 0.0
    %754 = vmatpush1.msra.mxu0 0.0
    %755 = vmatprep.subr.mxu0 0.0
    %756 = vmatpush1.msra.mxu0 0.0
    %757 = vmatprep.subr.mxu0 0.0
    %758 = vmatpush1.msra.mxu0 0.0
    %759 = vmatprep.subr.mxu0 0.0
    %760 = vmatpush1.msra.mxu0 0.0
    %761 = vmatprep.subr.mxu0 0.0
    %762 = vmatpush1.msra.mxu0 0.0
    %763 = vmatprep.subr.mxu0 0.0
    %764 = vmatpush1.msra.mxu0 0.0
    %765 = vmatprep.subr.mxu0 0.0
    %766 = vmatpush1.msra.mxu0 0.0
    %767 = vmatprep.subr.mxu0 0.0
    %768 = vmatpush1.msra.mxu0 0.0
    %769 = vmatprep.subr.mxu0 0.0
    %770 = vmatpush1.msra.mxu0 0.0
    %771 = vmatprep.subr.mxu0 0.0
    %772 = vmatpush1.msra.mxu0 0.0
    %773 = vmatprep.subr.mxu0 0.0
    %774 = vmatpush1.msra.mxu0 0.0
    %775 = vmatprep.subr.mxu0 0.0
    %776 = vmatpush1.msra.mxu0 0.0
    %777 = vmatprep.subr.mxu0 0.0
    %778 = vmatpush1.msra.mxu0 0.0
    %779 = vmatprep.subr.mxu0 0.0
    %780 = vmatpush1.msra.mxu0 0.0
    %781 = vmatprep.subr.mxu0 0.0
    %782 = vmatpush1.msra.mxu0 0.0
    %783 = vmatprep.subr.mxu0 0.0
    %784 = vmatpush1.msra.mxu0 0.0
    %785 = vmatprep.subr.mxu0 0.0
    %786 = vmatpush1.msra.mxu0 0.0
    %787 = vmatprep.subr.mxu0 0.0
    %788 = vmatpush1.msra.mxu0 0.0
    %789 = vmatprep.subr.mxu0 0.0
    %790 = vmatpush1.msra.mxu0 0.0
    %791 = vmatprep.subr.mxu0 0.0
    %792 = vmatpush1.msra.mxu0 0.0
    %793 = vmatprep.subr.mxu0 0.0
    %794 = vmatpush1.msra.mxu0 0.0
    %795 = vmatprep.subr.mxu0 0.0
    %796 = vmatpush1.msra.mxu0 0.0
    %797 = vmatprep.subr.mxu0 0.0
    %798 = vmatpush1.msra.mxu0 0.0
    %799 = vmatprep.subr.mxu0 0.0
    %800 = vmatpush1.msra.mxu0 0.0
    %801 = vmatprep.subr.mxu0 0.0
    %802 = vmatpush1.msra.mxu0 0.0
    %803 = vmatprep.subr.mxu0 0.0
    %804 = vmatpush1.msra.mxu0 0.0
    %805 = vmatprep.subr.mxu0 0.0
    %806 = vmatpush1.msra.mxu0 0.0
    %807 = vmatprep.subr.mxu0 0.0
    %808 = vmatpush1.msra.mxu0 0.0
    %809 = vmatprep.mubr.f32.mxu0 0.0
    %810 = vmatmul.mubr.f32.gmra.mrb[0].mxu0 %v743
    %v811 = vpop.f32.mrb[0].mxu0
    %v812 = vadd.f32 0.0, %v811
    %v813 = vpop.f32.mrb[0].mxu0
    %814 = vdwg.mxu0
    %v816 = vrot.slane %v812, 4
    %v817 = vrot.slane %v812, 5
    %v820 = vadd.f32 %v146, %v816
    %v821 = vadd.f32 %v151, %v817
    %v822 = vxor.u32 %v820, 2147483648
    %v823 = vxor.u32 %v821, 2147483648
    %v824 = vmul.f32 %v822, 1.442695
    %v825 = vpow.pop %v824
    %v826 = vmul.f32 %v823, 1.442695
    %v827 = vpow.pop %v826
    %v828 = vadd.f32 %v825, 1.0
    %v829 = vadd.f32 %v827, 1.0
    %v830 = vrcp.pop %v828
    %v831 = vmul.f32 1.0, %v830
    %v832 = vrcp.pop %v829
    %v833 = vmul.f32 1.0, %v832
    %v834 = vtanh.pop %v820
    %v835 = vtanh.pop %v821
    %v838 = vrot.slane %v713, 7
    %v839 = vrot.slane %v714, 7
    %v842 = vmul.f32 %v831, %v838
    %v843 = vmul.f32 %v833, %v839
    %846 = vrot.lane.b32.xlu0 %v834, 64
    %v847 = vpop.permute.xlu0 %846
    %848 = vrot.lane.b32.xlu0 %v835, 64
    %v849 = vpop.permute.xlu0 %848
    %v852 = vmul.f32 %v831, %v847
    %v853 = vmul.f32 %v833, %v849
    %856 = vrot.lane.b32.xlu0 %v852, 32
    %v857 = vpop.permute.xlu0 %856
    %858 = vrot.lane.b32.xlu0 %v853, 32
    %v859 = vpop.permute.xlu0 %858
    %v862 = vadd.f32 %v842, %v857
    %v863 = vadd.f32 %v843, %v859
    %v864 = vtanh.pop %v862
    %v865 = vtanh.pop %v863
    %868 = vrot.lane.b32.xlu0 %v864, 64
    %v869 = vpop.permute.xlu0 %868
    %870 = vrot.lane.b32.xlu0 %v865, 64
    %v871 = vpop.permute.xlu0 %870
    %v874 = vmul.f32 %v831, %v869
    %v875 = vmul.f32 %v833, %v871
    %878 = vrot.lane.b32.xlu0 %v874, 32
    %v879 = vpop.permute.xlu0 %878
    %880 = vrot.lane.b32.xlu0 %v875, 32
    %v881 = vpop.permute.xlu0 %880
    %vm884 = vcmask 258052
    %885 = vst.msk [vmem:[#allocation2] sm:$0x10] %vm884, %v879
    %886 = vst.msk [vmem:[#allocation2 + $0x8] sm:$0x10] %vm884, %v881
    %v887 = vrot.slane %v874, 4
    %v888 = vrot.slane %v875, 3
    %v889 = vsel %vm294, %v888, %v887
    %890 = vrot.lane.b32.xlu0 %v889, 32
    %v891 = vpop.permute.xlu0 %890
    %v892 = vsel %vm154, %v891, 0
    %894 = vmatprep.subr.mxu0 0.0
    %895 = vmatpush1.msra.mxu0 %v59
    %896 = vmatprep.subr.mxu0 0.0
    %897 = vmatpush1.msra.mxu0 %v60
    %898 = vmatprep.subr.mxu0 0.0
    %899 = vmatpush1.msra.mxu0 %v61
    %900 = vmatprep.subr.mxu0 0.0
    %901 = vmatpush1.msra.mxu0 %v62
    %902 = vmatprep.subr.mxu0 0.0
    %903 = vmatpush1.msra.mxu0 0.0
    %904 = vmatprep.subr.mxu0 0.0
    %905 = vmatpush1.msra.mxu0 0.0
    %906 = vmatprep.subr.mxu0 0.0
    %907 = vmatpush1.msra.mxu0 0.0
    %908 = vmatprep.subr.mxu0 0.0
    %909 = vmatpush1.msra.mxu0 0.0
    %910 = vmatprep.subr.mxu0 0.0
    %911 = vmatpush1.msra.mxu0 0.0
    %912 = vmatprep.subr.mxu0 0.0
    %913 = vmatpush1.msra.mxu0 0.0
    %914 = vmatprep.subr.mxu0 0.0
    %915 = vmatpush1.msra.mxu0 0.0
    %916 = vmatprep.subr.mxu0 0.0
    %917 = vmatpush1.msra.mxu0 0.0
    %918 = vmatprep.subr.mxu0 0.0
    %919 = vmatpush1.msra.mxu0 0.0
    %920 = vmatprep.subr.mxu0 0.0
    %921 = vmatpush1.msra.mxu0 0.0
    %922 = vmatprep.subr.mxu0 0.0
    %923 = vmatpush1.msra.mxu0 0.0
    %924 = vmatprep.subr.mxu0 0.0
    %925 = vmatpush1.msra.mxu0 0.0
    %926 = vmatprep.subr.mxu0 0.0
    %927 = vmatpush1.msra.mxu0 0.0
    %928 = vmatprep.subr.mxu0 0.0
    %929 = vmatpush1.msra.mxu0 0.0
    %930 = vmatprep.subr.mxu0 0.0
    %931 = vmatpush1.msra.mxu0 0.0
    %932 = vmatprep.subr.mxu0 0.0
    %933 = vmatpush1.msra.mxu0 0.0
    %934 = vmatprep.subr.mxu0 0.0
    %935 = vmatpush1.msra.mxu0 0.0
    %936 = vmatprep.subr.mxu0 0.0
    %937 = vmatpush1.msra.mxu0 0.0
    %938 = vmatprep.subr.mxu0 0.0
    %939 = vmatpush1.msra.mxu0 0.0
    %940 = vmatprep.subr.mxu0 0.0
    %941 = vmatpush1.msra.mxu0 0.0
    %942 = vmatprep.subr.mxu0 0.0
    %943 = vmatpush1.msra.mxu0 0.0
    %944 = vmatprep.subr.mxu0 0.0
    %945 = vmatpush1.msra.mxu0 0.0
    %946 = vmatprep.subr.mxu0 0.0
    %947 = vmatpush1.msra.mxu0 0.0
    %948 = vmatprep.subr.mxu0 0.0
    %949 = vmatpush1.msra.mxu0 0.0
    %950 = vmatprep.subr.mxu0 0.0
    %951 = vmatpush1.msra.mxu0 0.0
    %952 = vmatprep.subr.mxu0 0.0
    %953 = vmatpush1.msra.mxu0 0.0
    %954 = vmatprep.subr.mxu0 0.0
    %955 = vmatpush1.msra.mxu0 0.0
    %956 = vmatprep.subr.mxu0 0.0
    %957 = vmatpush1.msra.mxu0 0.0
    %958 = vmatprep.mubr.f32.mxu0 0.0
    %959 = vmatmul.mubr.f32.gmra.mrb[0].mxu0 %v892
    %v960 = vpop.f32.mrb[0].mxu0
    %v961 = vadd.f32 0.0, %v960
    %v962 = vpop.f32.mrb[0].mxu0
    %963 = vdwg.mxu0
    %v965 = vrot.slane %v961, 3
    %v966 = vrot.slane %v961, 4
    %v969 = vadd.f32 %v146, %v965
    %v970 = vadd.f32 %v151, %v966
    %v971 = vxor.u32 %v969, 2147483648
    %v972 = vxor.u32 %v970, 2147483648
    %v973 = vmul.f32 %v971, 1.442695
    %v974 = vpow.pop %v973
    %v975 = vmul.f32 %v972, 1.442695
    %v976 = vpow.pop %v975
    %v977 = vadd.f32 %v974, 1.0
    %v978 = vadd.f32 %v976, 1.0
    %v979 = vrcp.pop %v977
    %v980 = vmul.f32 1.0, %v979
    %v981 = vrcp.pop %v978
    %v982 = vmul.f32 1.0, %v981
    %v983 = vtanh.pop %v969
    %v984 = vtanh.pop %v970
    %v987 = vrot.slane %v862, 7
    %v988 = vrot.slane %v863, 7
    %v991 = vmul.f32 %v980, %v987
    %v992 = vmul.f32 %v982, %v988
    %995 = vrot.lane.b32.xlu0 %v983, 64
    %v996 = vpop.permute.xlu0 %995
    %997 = vrot.lane.b32.xlu0 %v984, 64
    %v998 = vpop.permute.xlu0 %997
    %v1001 = vmul.f32 %v980, %v996
    %v1002 = vmul.f32 %v982, %v998
    %1005 = vrot.lane.b32.xlu0 %v1001, 32
    %v1006 = vpop.permute.xlu0 %1005
    %1007 = vrot.lane.b32.xlu0 %v1002, 32
    %v1008 = vpop.permute.xlu0 %1007
    %v1011 = vadd.f32 %v991, %v1006
    %v1012 = vadd.f32 %v992, %v1008
    %v1013 = vtanh.pop %v1011
    %v1014 = vtanh.pop %v1012
    %1017 = vrot.lane.b32.xlu0 %v1013, 64
    %v1018 = vpop.permute.xlu0 %1017
    %1019 = vrot.lane.b32.xlu0 %v1014, 64
    %v1020 = vpop.permute.xlu0 %1019
    %v1023 = vmul.f32 %v980, %v1018
    %v1024 = vmul.f32 %v982, %v1020
    %1027 = vrot.lane.b32.xlu0 %v1023, 32
    %v1028 = vpop.permute.xlu0 %1027
    %1029 = vrot.lane.b32.xlu0 %v1024, 32
    %v1030 = vpop.permute.xlu0 %1029
    %vm1033 = vcmask 259077
    %1034 = vst.msk [vmem:[#allocation2] sm:$0x20] %vm1033, %v1028
    %1035 = vst.msk [vmem:[#allocation2 + $0x8] sm:$0x20] %vm1033, %v1030
    %v1036 = vrot.slane %v1023, 5
    %v1037 = vrot.slane %v1024, 4
    %v1038 = vsel %vm294, %v1037, %v1036
    %1039 = vrot.lane.b32.xlu0 %v1038, 32
    %v1040 = vpop.permute.xlu0 %1039
    %v1041 = vsel %vm154, %v1040, 0
    %1043 = vmatprep.subr.mxu0 0.0
    %1044 = vmatpush1.msra.mxu0 %v59
    %1045 = vmatprep.subr.mxu0 0.0
    %1046 = vmatpush1.msra.mxu0 %v60
    %1047 = vmatprep.subr.mxu0 0.0
    %1048 = vmatpush1.msra.mxu0 %v61
    %1049 = vmatprep.subr.mxu0 0.0
    %1050 = vmatpush1.msra.mxu0 %v62
    %1051 = vmatprep.subr.mxu0 0.0
    %1052 = vmatpush1.msra.mxu0 0.0
    %1053 = vmatprep.subr.mxu0 0.0
    %1054 = vmatpush1.msra.mxu0 0.0
    %1055 = vmatprep.subr.mxu0 0.0
    %1056 = vmatpush1.msra.mxu0 0.0
    %1057 = vmatprep.subr.mxu0 0.0
    %1058 = vmatpush1.msra.mxu0 0.0
    %1059 = vmatprep.subr.mxu0 0.0
    %1060 = vmatpush1.msra.mxu0 0.0
    %1061 = vmatprep.subr.mxu0 0.0
    %1062 = vmatpush1.msra.mxu0 0.0
    %1063 = vmatprep.subr.mxu0 0.0
    %1064 = vmatpush1.msra.mxu0 0.0
    %1065 = vmatprep.subr.mxu0 0.0
    %1066 = vmatpush1.msra.mxu0 0.0
    %1067 = vmatprep.subr.mxu0 0.0
    %1068 = vmatpush1.msra.mxu0 0.0
    %1069 = vmatprep.subr.mxu0 0.0
    %1070 = vmatpush1.msra.mxu0 0.0
    %1071 = vmatprep.subr.mxu0 0.0
    %1072 = vmatpush1.msra.mxu0 0.0
    %1073 = vmatprep.subr.mxu0 0.0
    %1074 = vmatpush1.msra.mxu0 0.0
    %1075 = vmatprep.subr.mxu0 0.0
    %1076 = vmatpush1.msra.mxu0 0.0
    %1077 = vmatprep.subr.mxu0 0.0
    %1078 = vmatpush1.msra.mxu0 0.0
    %1079 = vmatprep.subr.mxu0 0.0
    %1080 = vmatpush1.msra.mxu0 0.0
    %1081 = vmatprep.subr.mxu0 0.0
    %1082 = vmatpush1.msra.mxu0 0.0
    %1083 = vmatprep.subr.mxu0 0.0
    %1084 = vmatpush1.msra.mxu0 0.0
    %1085 = vmatprep.subr.mxu0 0.0
    %1086 = vmatpush1.msra.mxu0 0.0
    %1087 = vmatprep.subr.mxu0 0.0
    %1088 = vmatpush1.msra.mxu0 0.0
    %1089 = vmatprep.subr.mxu0 0.0
    %1090 = vmatpush1.msra.mxu0 0.0
    %1091 = vmatprep.subr.mxu0 0.0
    %1092 = vmatpush1.msra.mxu0 0.0
    %1093 = vmatprep.subr.mxu0 0.0
    %1094 = vmatpush1.msra.mxu0 0.0
    %1095 = vmatprep.subr.mxu0 0.0
    %1096 = vmatpush1.msra.mxu0 0.0
    %1097 = vmatprep.subr.mxu0 0.0
    %1098 = vmatpush1.msra.mxu0 0.0
    %1099 = vmatprep.subr.mxu0 0.0
    %1100 = vmatpush1.msra.mxu0 0.0
    %1101 = vmatprep.subr.mxu0 0.0
    %1102 = vmatpush1.msra.mxu0 0.0
    %1103 = vmatprep.subr.mxu0 0.0
    %1104 = vmatpush1.msra.mxu0 0.0
    %1105 = vmatprep.subr.mxu0 0.0
    %1106 = vmatpush1.msra.mxu0 0.0
    %1107 = vmatprep.mubr.f32.mxu0 0.0
    %1108 = vmatmul.mubr.f32.gmra.mrb[0].mxu0 %v1041
    %v1109 = vpop.f32.mrb[0].mxu0
    %v1110 = vadd.f32 0.0, %v1109
    %v1111 = vpop.f32.mrb[0].mxu0
    %1112 = vdwg.mxu0
    %v1114 = vrot.slane %v1110, 2
    %v1115 = vrot.slane %v1110, 3
    %v1118 = vadd.f32 %v146, %v1114
    %v1119 = vadd.f32 %v151, %v1115
    %v1120 = vxor.u32 %v1118, 2147483648
    %v1121 = vxor.u32 %v1119, 2147483648
    %v1122 = vmul.f32 %v1120, 1.442695
    %v1123 = vpow.pop %v1122
    %v1124 = vmul.f32 %v1121, 1.442695
    %v1125 = vpow.pop %v1124
    %v1126 = vadd.f32 %v1123, 1.0
    %v1127 = vadd.f32 %v1125, 1.0
    %v1128 = vrcp.pop %v1126
    %v1129 = vmul.f32 1.0, %v1128
    %v1130 = vrcp.pop %v1127
    %v1131 = vmul.f32 1.0, %v1130
    %v1132 = vtanh.pop %v1118
    %v1133 = vtanh.pop %v1119
    %v1136 = vrot.slane %v1011, 7
    %v1137 = vrot.slane %v1012, 7
    %v1140 = vmul.f32 %v1129, %v1136
    %v1141 = vmul.f32 %v1131, %v1137
    %1144 = vrot.lane.b32.xlu0 %v1132, 64
    %v1145 = vpop.permute.xlu0 %1144
    %1146 = vrot.lane.b32.xlu0 %v1133, 64
    %v1147 = vpop.permute.xlu0 %1146
    %v1150 = vmul.f32 %v1129, %v1145
    %v1151 = vmul.f32 %v1131, %v1147
    %1154 = vrot.lane.b32.xlu0 %v1150, 32
    %v1155 = vpop.permute.xlu0 %1154
    %1156 = vrot.lane.b32.xlu0 %v1151, 32
    %v1157 = vpop.permute.xlu0 %1156
    %v1160 = vadd.f32 %v1140, %v1155
    %v1161 = vadd.f32 %v1141, %v1157
    %v1162 = vtanh.pop %v1160
    %v1163 = vtanh.pop %v1161
    %1166 = vrot.lane.b32.xlu0 %v1162, 64
    %v1167 = vpop.permute.xlu0 %1166
    %1168 = vrot.lane.b32.xlu0 %v1163, 64
    %v1169 = vpop.permute.xlu0 %1168
    %v1172 = vmul.f32 %v1129, %v1167
    %v1173 = vmul.f32 %v1131, %v1169
    %1176 = vrot.lane.b32.xlu0 %v1172, 32
    %v1177 = vpop.permute.xlu0 %1176
    %1178 = vrot.lane.b32.xlu0 %v1173, 32
    %v1179 = vpop.permute.xlu0 %1178
    %vm1182 = vcmask 260102
    %1183 = vst.msk [vmem:[#allocation2] sm:$0x40] %vm1182, %v1177
    %1184 = vst.msk [vmem:[#allocation2 + $0x8] sm:$0x40] %vm1182, %v1179
    %v1185 = vrot.slane %v1172, 6
    %v1186 = vrot.slane %v1173, 5
    %v1187 = vsel %vm294, %v1186, %v1185
    %1188 = vrot.lane.b32.xlu0 %v1187, 32
    %v1189 = vpop.permute.xlu0 %1188
    %v1190 = vsel %vm154, %v1189, 0
    %1192 = vmatprep.subr.mxu0 0.0
    %1193 = vmatpush1.msra.mxu0 %v59
    %1194 = vmatprep.subr.mxu0 0.0
    %1195 = vmatpush1.msra.mxu0 %v60
    %1196 = vmatprep.subr.mxu0 0.0
    %1197 = vmatpush1.msra.mxu0 %v61
    %1198 = vmatprep.subr.mxu0 0.0
    %1199 = vmatpush1.msra.mxu0 %v62
    %1200 = vmatprep.subr.mxu0 0.0
    %1201 = vmatpush1.msra.mxu0 0.0
    %1202 = vmatprep.subr.mxu0 0.0
    %1203 = vmatpush1.msra.mxu0 0.0
    %1204 = vmatprep.subr.mxu0 0.0
    %1205 = vmatpush1.msra.mxu0 0.0
    %1206 = vmatprep.subr.mxu0 0.0
    %1207 = vmatpush1.msra.mxu0 0.0
    %1208 = vmatprep.subr.mxu0 0.0
    %1209 = vmatpush1.msra.mxu0 0.0
    %1210 = vmatprep.subr.mxu0 0.0
    %1211 = vmatpush1.msra.mxu0 0.0
    %1212 = vmatprep.subr.mxu0 0.0
    %1213 = vmatpush1.msra.mxu0 0.0
    %1214 = vmatprep.subr.mxu0 0.0
    %1215 = vmatpush1.msra.mxu0 0.0
    %1216 = vmatprep.subr.mxu0 0.0
    %1217 = vmatpush1.msra.mxu0 0.0
    %1218 = vmatprep.subr.mxu0 0.0
    %1219 = vmatpush1.msra.mxu0 0.0
    %1220 = vmatprep.subr.mxu0 0.0
    %1221 = vmatpush1.msra.mxu0 0.0
    %1222 = vmatprep.subr.mxu0 0.0
    %1223 = vmatpush1.msra.mxu0 0.0
    %1224 = vmatprep.subr.mxu0 0.0
    %1225 = vmatpush1.msra.mxu0 0.0
    %1226 = vmatprep.subr.mxu0 0.0
    %1227 = vmatpush1.msra.mxu0 0.0
    %1228 = vmatprep.subr.mxu0 0.0
    %1229 = vmatpush1.msra.mxu0 0.0
    %1230 = vmatprep.subr.mxu0 0.0
    %1231 = vmatpush1.msra.mxu0 0.0
    %1232 = vmatprep.subr.mxu0 0.0
    %1233 = vmatpush1.msra.mxu0 0.0
    %1234 = vmatprep.subr.mxu0 0.0
    %1235 = vmatpush1.msra.mxu0 0.0
    %1236 = vmatprep.subr.mxu0 0.0
    %1237 = vmatpush1.msra.mxu0 0.0
    %1238 = vmatprep.subr.mxu0 0.0
    %1239 = vmatpush1.msra.mxu0 0.0
    %1240 = vmatprep.subr.mxu0 0.0
    %1241 = vmatpush1.msra.mxu0 0.0
    %1242 = vmatprep.subr.mxu0 0.0
    %1243 = vmatpush1.msra.mxu0 0.0
    %1244 = vmatprep.subr.mxu0 0.0
    %1245 = vmatpush1.msra.mxu0 0.0
    %1246 = vmatprep.subr.mxu0 0.0
    %1247 = vmatpush1.msra.mxu0 0.0
    %1248 = vmatprep.subr.mxu0 0.0
    %1249 = vmatpush1.msra.mxu0 0.0
    %1250 = vmatprep.subr.mxu0 0.0
    %1251 = vmatpush1.msra.mxu0 0.0
    %1252 = vmatprep.subr.mxu0 0.0
    %1253 = vmatpush1.msra.mxu0 0.0
    %1254 = vmatprep.subr.mxu0 0.0
    %1255 = vmatpush1.msra.mxu0 0.0
    %1256 = vmatprep.mubr.f32.mxu0 0.0
    %1257 = vmatmul.mubr.f32.gmra.mrb[0].mxu0 %v1190
    %v1258 = vpop.f32.mrb[0].mxu0
    %v1259 = vadd.f32 0.0, %v1258
    %v1260 = vpop.f32.mrb[0].mxu0
    %1261 = vdwg.mxu0
    %v1263 = vrot.slane %v1259, 1
    %v1264 = vrot.slane %v1259, 2
    %v1267 = vadd.f32 %v146, %v1263
    %v1268 = vadd.f32 %v151, %v1264
    %v1269 = vxor.u32 %v1267, 2147483648
    %v1270 = vxor.u32 %v1268, 2147483648
    %v1271 = vmul.f32 %v1269, 1.442695
    %v1272 = vpow.pop %v1271
    %v1273 = vmul.f32 %v1270, 1.442695
    %v1274 = vpow.pop %v1273
    %v1275 = vadd.f32 %v1272, 1.0
    %v1276 = vadd.f32 %v1274, 1.0
    %v1277 = vrcp.pop %v1275
    %v1278 = vmul.f32 1.0, %v1277
    %v1279 = vrcp.pop %v1276
    %v1280 = vmul.f32 1.0, %v1279
    %v1281 = vtanh.pop %v1267
    %v1282 = vtanh.pop %v1268
    %v1285 = vrot.slane %v1160, 7
    %v1286 = vrot.slane %v1161, 7
    %v1289 = vmul.f32 %v1278, %v1285
    %v1290 = vmul.f32 %v1280, %v1286
    %1293 = vrot.lane.b32.xlu0 %v1281, 64
    %v1294 = vpop.permute.xlu0 %1293
    %1295 = vrot.lane.b32.xlu0 %v1282, 64
    %v1296 = vpop.permute.xlu0 %1295
    %v1299 = vmul.f32 %v1278, %v1294
    %v1300 = vmul.f32 %v1280, %v1296
    %1303 = vrot.lane.b32.xlu0 %v1299, 32
    %v1304 = vpop.permute.xlu0 %1303
    %1305 = vrot.lane.b32.xlu0 %v1300, 32
    %v1306 = vpop.permute.xlu0 %1305
    %v1309 = vadd.f32 %v1289, %v1304
    %v1310 = vadd.f32 %v1290, %v1306
    %v1311 = vtanh.pop %v1309
    %v1312 = vtanh.pop %v1310
    %1315 = vrot.lane.b32.xlu0 %v1311, 64
    %v1316 = vpop.permute.xlu0 %1315
    %1317 = vrot.lane.b32.xlu0 %v1312, 64
    %v1318 = vpop.permute.xlu0 %1317
    %v1321 = vmul.f32 %v1278, %v1316
    %v1322 = vmul.f32 %v1280, %v1318
    %1325 = vrot.lane.b32.xlu0 %v1321, 32
    %v1326 = vpop.permute.xlu0 %1325
    %1327 = vrot.lane.b32.xlu0 %v1322, 32
    %v1328 = vpop.permute.xlu0 %1327
    %vm1331 = vcmask 261127
    %1332 = vst.msk [vmem:[#allocation2] sm:$0x80] %vm1331, %v1326
    %1333 = vst.msk [vmem:[#allocation2 + $0x8] sm:$0x80] %vm1331, %v1328
    %v1334 = vld [vmem:[%s4] sm:$0xff]
    %v1335 = vld [vmem:[%s4 + $0x8] sm:$0xff]
    %v1336 = vld [vmem:[%s4 + $0x10] sm:$0xff]
    %v1337 = vld [vmem:[%s4 + $0x18] sm:$0xff]
    %v1338 = vld [vmem:[%s5] sm:$0x1]
    %v1340 = vlaneseq
    %v1341 = vshrl.u32 %v1340, 7
    %v1342 = vsub.s32 0, %v1341
    %v1343 = vrot.slane %v1338, %v1342
    %v1345 = vrot.slane %v1321, 7
    %v1346 = vrot.slane %v1322, 6
    %v1347 = vsel %vm294, %v1346, %v1345
    %1348 = vrot.lane.b32.xlu0 %v1347, 32
    %v1349 = vpop.permute.xlu0 %1348
    %v1350 = vsel %vm154, %v1349, 0
    %1352 = vmatprep.subr.mxu0 0.0
    %1353 = vmatpush1.msra.mxu0 %v1334
    %1354 = vmatprep.subr.mxu0 0.0
    %1355 = vmatpush1.msra.mxu0 %v1335
    %1356 = vmatprep.subr.mxu0 0.0
    %1357 = vmatpush1.msra.mxu0 %v1336
    %1358 = vmatprep.subr.mxu0 0.0
    %1359 = vmatpush1.msra.mxu0 %v1337
    %1360 = vmatprep.subr.mxu0 0.0
    %1361 = vmatpush1.msra.mxu0 0.0
    %1362 = vmatprep.subr.mxu0 0.0
    %1363 = vmatpush1.msra.mxu0 0.0
    %1364 = vmatprep.subr.mxu0 0.0
    %1365 = vmatpush1.msra.mxu0 0.0
    %1366 = vmatprep.subr.mxu0 0.0
    %1367 = vmatpush1.msra.mxu0 0.0
    %1368 = vmatprep.subr.mxu0 0.0
    %1369 = vmatpush1.msra.mxu0 0.0
    %1370 = vmatprep.subr.mxu0 0.0
    %1371 = vmatpush1.msra.mxu0 0.0
    %1372 = vmatprep.subr.mxu0 0.0
    %1373 = vmatpush1.msra.mxu0 0.0
    %1374 = vmatprep.subr.mxu0 0.0
    %1375 = vmatpush1.msra.mxu0 0.0
    %1376 = vmatprep.subr.mxu0 0.0
    %1377 = vmatpush1.msra.mxu0 0.0
    %1378 = vmatprep.subr.mxu0 0.0
    %1379 = vmatpush1.msra.mxu0 0.0
    %1380 = vmatprep.subr.mxu0 0.0
    %1381 = vmatpush1.msra.mxu0 0.0
    %1382 = vmatprep.subr.mxu0 0.0
    %1383 = vmatpush1.msra.mxu0 0.0
    %1384 = vmatprep.subr.mxu0 0.0
    %1385 = vmatpush1.msra.mxu0 0.0
    %1386 = vmatprep.subr.mxu0 0.0
    %1387 = vmatpush1.msra.mxu0 0.0
    %1388 = vmatprep.subr.mxu0 0.0
    %1389 = vmatpush1.msra.mxu0 0.0
    %1390 = vmatprep.subr.mxu0 0.0
    %1391 = vmatpush1.msra.mxu0 0.0
    %1392 = vmatprep.subr.mxu0 0.0
    %1393 = vmatpush1.msra.mxu0 0.0
    %1394 = vmatprep.subr.mxu0 0.0
    %1395 = vmatpush1.msra.mxu0 0.0
    %1396 = vmatprep.subr.mxu0 0.0
    %1397 = vmatpush1.msra.mxu0 0.0
    %1398 = vmatprep.subr.mxu0 0.0
    %1399 = vmatpush1.msra.mxu0 0.0
    %1400 = vmatprep.subr.mxu0 0.0
    %1401 = vmatpush1.msra.mxu0 0.0
    %1402 = vmatprep.subr.mxu0 0.0
    %1403 = vmatpush1.msra.mxu0 0.0
    %1404 = vmatprep.subr.mxu0 0.0
    %1405 = vmatpush1.msra.mxu0 0.0
    %1406 = vmatprep.subr.mxu0 0.0
    %1407 = vmatpush1.msra.mxu0 0.0
    %1408 = vmatprep.subr.mxu0 0.0
    %1409 = vmatpush1.msra.mxu0 0.0
    %1410 = vmatprep.subr.mxu0 0.0
    %1411 = vmatpush1.msra.mxu0 0.0
    %1412 = vmatprep.subr.mxu0 0.0
    %1413 = vmatpush1.msra.mxu0 0.0
    %1414 = vmatprep.subr.mxu0 0.0
    %1415 = vmatpush1.msra.mxu0 0.0
    %1416 = vmatprep.mubr.f32.mxu0 0.0
    %1417 = vmatmul.mubr.f32.gmra.mrb[0].mxu0 %v1350
    %v1418 = vpop.f32.mrb[0].mxu0
    %v1419 = vadd.f32 %v1343, %v1418
    %v1420 = vpop.f32.mrb[0].mxu0
    %1421 = vdwg.mxu0
    %v1422 = vmax.f32 %v1419, 0.0
    %v1423 = vld [vmem:[%s6] sm:$0xff]
    %v1424 = vld [vmem:[%s6 + $0x8] sm:$0xff]
    %v1425 = vld [vmem:[%s6 + $0x10] sm:$0xff]
    %v1426 = vld [vmem:[%s6 + $0x18] sm:$0xff]
    %v1427 = vld [vmem:[%s7] sm:$0x1]
    %v1429 = vlaneseq
    %v1430 = vshrl.u32 %v1429, 7
    %v1431 = vsub.s32 0, %v1430
    %v1432 = vrot.slane %v1427, %v1431
    %v1435 = vsel %vm154, %v1422, 0
    %1437 = vmatprep.subr.mxu0 0.0
    %1438 = vmatpush1.msra.mxu0 %v1423
    %1439 = vmatprep.subr.mxu0 0.0
    %1440 = vmatpush1.msra.mxu0 %v1424
    %1441 = vmatprep.subr.mxu0 0.0
    %1442 = vmatpush1.msra.mxu0 %v1425
    %1443 = vmatprep.subr.mxu0 0.0
    %1444 = vmatpush1.msra.mxu0 %v1426
    %1445 = vmatprep.subr.mxu0 0.0
    %1446 = vmatpush1.msra.mxu0 0.0
    %1447 = vmatprep.subr.mxu0 0.0
    %1448 = vmatpush1.msra.mxu0 0.0
    %1449 = vmatprep.subr.mxu0 0.0
    %1450 = vmatpush1.msra.mxu0 0.0
    %1451 = vmatprep.subr.mxu0 0.0
    %1452 = vmatpush1.msra.mxu0 0.0
    %1453 = vmatprep.subr.mxu0 0.0
    %1454 = vmatpush1.msra.mxu0 0.0
    %1455 = vmatprep.subr.mxu0 0.0
    %1456 = vmatpush1.msra.mxu0 0.0
    %1457 = vmatprep.subr.mxu0 0.0
    %1458 = vmatpush1.msra.mxu0 0.0
    %1459 = vmatprep.subr.mxu0 0.0
    %1460 = vmatpush1.msra.mxu0 0.0
    %1461 = vmatprep.subr.mxu0 0.0
    %1462 = vmatpush1.msra.mxu0 0.0
    %1463 = vmatprep.subr.mxu0 0.0
    %1464 = vmatpush1.msra.mxu0 0.0
    %1465 = vmatprep.subr.mxu0 0.0
    %1466 = vmatpush1.msra.mxu0 0.0
    %1467 = vmatprep.subr.mxu0 0.0
    %1468 = vmatpush1.msra.mxu0 0.0
    %1469 = vmatprep.subr.mxu0 0.0
    %1470 = vmatpush1.msra.mxu0 0.0
    %1471 = vmatprep.subr.mxu0 0.0
    %1472 = vmatpush1.msra.mxu0 0.0
    %1473 = vmatprep.subr.mxu0 0.0
    %1474 = vmatpush1.msra.mxu0 0.0
    %1475 = vmatprep.subr.mxu0 0.0
    %1476 = vmatpush1.msra.mxu0 0.0
    %1477 = vmatprep.subr.mxu0 0.0
    %1478 = vmatpush1.msra.mxu0 0.0
    %1479 = vmatprep.subr.mxu0 0.0
    %1480 = vmatpush1.msra.mxu0 0.0
    %1481 = vmatprep.subr.mxu0 0.0
    %1482 = vmatpush1.msra.mxu0 0.0
    %1483 = vmatprep.subr.mxu0 0.0
    %1484 = vmatpush1.msra.mxu0 0.0
    %1485 = vmatprep.subr.mxu0 0.0
    %1486 = vmatpush1.msra.mxu0 0.0
    %1487 = vmatprep.subr.mxu0 0.0
    %1488 = vmatpush1.msra.mxu0 0.0
    %1489 = vmatprep.subr.mxu0 0.0
    %1490 = vmatpush1.msra.mxu0 0.0
    %1491 = vmatprep.subr.mxu0 0.0
    %1492 = vmatpush1.msra.mxu0 0.0
    %1493 = vmatprep.subr.mxu0 0.0
    %1494 = vmatpush1.msra.mxu0 0.0
    %1495 = vmatprep.subr.mxu0 0.0
    %1496 = vmatpush1.msra.mxu0 0.0
    %1497 = vmatprep.subr.mxu0 0.0
    %1498 = vmatpush1.msra.mxu0 0.0
    %1499 = vmatprep.subr.mxu0 0.0
    %1500 = vmatpush1.msra.mxu0 0.0
    %1501 = vmatprep.mubr.f32.mxu0 0.0
    %1502 = vmatmul.mubr.f32.gmra.mrb[0].mxu0 %v1435
    %v1503 = vpop.f32.mrb[0].mxu0
    %v1504 = vadd.f32 %v1432, %v1503
    %v1505 = vpop.f32.mrb[0].mxu0
    %1506 = vdwg.mxu0
    %vm1507 = vcmask 254976
    %1508 = vst.msk [vmem:[#allocation5] sm:$0x3] %vm1507, %v1504
    %v1509 = vld [vmem:[#allocation2] sm:$0xff]
    %v1510 = vld [vmem:[#allocation2 + $0x8] sm:$0xff]
    %v1511 = vld [vmem:[%s8] sm:$0xff]
    %v1512 = vld [vmem:[%s8 + $0x8] sm:$0xff]
    %v1513 = vld [vmem:[%s8 + $0x10] sm:$0xff]
    %v1514 = vld [vmem:[%s8 + $0x18] sm:$0xff]
    %v1515 = vld [vmem:[%s9] sm:$0x1]
    %v1517 = vlaneseq
    %v1518 = vshrl.u32 %v1517, 7
    %v1519 = vsub.s32 0, %v1518
    %v1520 = vrot.slane %v1515, %v1519
    %v1523 = vsel %vm154, %v1509, 0
    %v1526 = vsel %vm154, %v1510, 0
    %1528 = vmatprep.subr.mxu0 0.0
    %1529 = vmatpush1.msra.mxu0 %v1511
    %1530 = vmatprep.subr.mxu0 0.0
    %1531 = vmatpush1.msra.mxu0 %v1512
    %1532 = vmatprep.subr.mxu0 0.0
    %1533 = vmatpush1.msra.mxu0 %v1513
    %1534 = vmatprep.subr.mxu0 0.0
    %1535 = vmatpush1.msra.mxu0 %v1514
    %1536 = vmatprep.subr.mxu0 0.0
    %1537 = vmatpush1.msra.mxu0 0.0
    %1538 = vmatprep.subr.mxu0 0.0
    %1539 = vmatpush1.msra.mxu0 0.0
    %1540 = vmatprep.subr.mxu0 0.0
    %1541 = vmatpush1.msra.mxu0 0.0
    %1542 = vmatprep.subr.mxu0 0.0
    %1543 = vmatpush1.msra.mxu0 0.0
    %1544 = vmatprep.subr.mxu0 0.0
    %1545 = vmatpush1.msra.mxu0 0.0
    %1546 = vmatprep.subr.mxu0 0.0
    %1547 = vmatpush1.msra.mxu0 0.0
    %1548 = vmatprep.subr.mxu0 0.0
    %1549 = vmatpush1.msra.mxu0 0.0
    %1550 = vmatprep.subr.mxu0 0.0
    %1551 = vmatpush1.msra.mxu0 0.0
    %1552 = vmatprep.subr.mxu0 0.0
    %1553 = vmatpush1.msra.mxu0 0.0
    %1554 = vmatprep.subr.mxu0 0.0
    %1555 = vmatpush1.msra.mxu0 0.0
    %1556 = vmatprep.subr.mxu0 0.0
    %1557 = vmatpush1.msra.mxu0 0.0
    %1558 = vmatprep.subr.mxu0 0.0
    %1559 = vmatpush1.msra.mxu0 0.0
    %1560 = vmatprep.subr.mxu0 0.0
    %1561 = vmatpush1.msra.mxu0 0.0
    %1562 = vmatprep.subr.mxu0 0.0
    %1563 = vmatpush1.msra.mxu0 0.0
    %1564 = vmatprep.subr.mxu0 0.0
    %1565 = vmatpush1.msra.mxu0 0.0
    %1566 = vmatprep.subr.mxu0 0.0
    %1567 = vmatpush1.msra.mxu0 0.0
    %1568 = vmatprep.subr.mxu0 0.0
    %1569 = vmatpush1.msra.mxu0 0.0
    %1570 = vmatprep.subr.mxu0 0.0
    %1571 = vmatpush1.msra.mxu0 0.0
    %1572 = vmatprep.subr.mxu0 0.0
    %1573 = vmatpush1.msra.mxu0 0.0
    %1574 = vmatprep.subr.mxu0 0.0
    %1575 = vmatpush1.msra.mxu0 0.0
    %1576 = vmatprep.subr.mxu0 0.0
    %1577 = vmatpush1.msra.mxu0 0.0
    %1578 = vmatprep.subr.mxu0 0.0
    %1579 = vmatpush1.msra.mxu0 0.0
    %1580 = vmatprep.subr.mxu0 0.0
    %1581 = vmatpush1.msra.mxu0 0.0
    %1582 = vmatprep.subr.mxu0 0.0
    %1583 = vmatpush1.msra.mxu0 0.0
    %1584 = vmatprep.subr.mxu0 0.0
    %1585 = vmatpush1.msra.mxu0 0.0
    %1586 = vmatprep.subr.mxu0 0.0
    %1587 = vmatpush1.msra.mxu0 0.0
    %1588 = vmatprep.subr.mxu0 0.0
    %1589 = vmatpush1.msra.mxu0 0.0
    %1590 = vmatprep.subr.mxu0 0.0
    %1591 = vmatpush1.msra.mxu0 0.0
    %1592 = vmatprep.mubr.f32.mxu0 0.0
    %1593 = vmatmul.mubr.f32.gmra.mrb[0].mxu0 %v1523
    %v1594 = vpop.f32.mrb[0].mxu0
    %v1595 = vadd.f32 %v1520, %v1594
    %v1596 = vpop.f32.mrb[0].mxu0
    %1597 = vmatprep.mubr.f32.mxu0 0.0
    %1598 = vmatmul.mubr.f32.gmra.mrb[0].mxu0 %v1526
    %v1599 = vpop.f32.mrb[0].mxu0
    %v1600 = vadd.f32 %v1520, %v1599
    %v1601 = vpop.f32.mrb[0].mxu0
    %1602 = vdwg.mxu0
    %v1603 = vmul.f32 %v1595, 0.5
    %v1604 = vmul.f32 %v1600, 0.5
    %v1605 = vld [vmem:[%s10] sm:$0xff]
    %v1606 = vld [vmem:[%s10 + $0x8] sm:$0xff]
    %v1607 = vld [vmem:[%s10 + $0x10] sm:$0xff]
    %v1608 = vld [vmem:[%s10 + $0x18] sm:$0xff]
    %v1609 = vld [vmem:[%s11] sm:$0x1]
    %v1611 = vlaneseq
    %v1612 = vshrl.u32 %v1611, 7
    %v1613 = vsub.s32 0, %v1612
    %v1614 = vrot.slane %v1609, %v1613
    %1616 = vmatprep.subr.mxu0 0.0
    %1617 = vmatpush1.msra.mxu0 %v1605
    %1618 = vmatprep.subr.mxu0 0.0
    %1619 = vmatpush1.msra.mxu0 %v1606
    %1620 = vmatprep.subr.mxu0 0.0
    %1621 = vmatpush1.msra.mxu0 %v1607
    %1622 = vmatprep.subr.mxu0 0.0
    %1623 = vmatpush1.msra.mxu0 %v1608
    %1624 = vmatprep.subr.mxu0 0.0
    %1625 = vmatpush1.msra.mxu0 0.0
    %1626 = vmatprep.subr.mxu0 0.0
    %1627 = vmatpush1.msra.mxu0 0.0
    %1628 = vmatprep.subr.mxu0 0.0
    %1629 = vmatpush1.msra.mxu0 0.0
    %1630 = vmatprep.subr.mxu0 0.0
    %1631 = vmatpush1.msra.mxu0 0.0
    %1632 = vmatprep.subr.mxu0 0.0
    %1633 = vmatpush1.msra.mxu0 0.0
    %1634 = vmatprep.subr.mxu0 0.0
    %1635 = vmatpush1.msra.mxu0 0.0
    %1636 = vmatprep.subr.mxu0 0.0
    %1637 = vmatpush1.msra.mxu0 0.0
    %1638 = vmatprep.subr.mxu0 0.0
    %1639 = vmatpush1.msra.mxu0 0.0
    %1640 = vmatprep.subr.mxu0 0.0
    %1641 = vmatpush1.msra.mxu0 0.0
    %1642 = vmatprep.subr.mxu0 0.0
    %1643 = vmatpush1.msra.mxu0 0.0
    %1644 = vmatprep.subr.mxu0 0.0
    %1645 = vmatpush1.msra.mxu0 0.0
    %1646 = vmatprep.subr.mxu0 0.0
    %1647 = vmatpush1.msra.mxu0 0.0
    %1648 = vmatprep.subr.mxu0 0.0
    %1649 = vmatpush1.msra.mxu0 0.0
    %1650 = vmatprep.subr.mxu0 0.0
    %1651 = vmatpush1.msra.mxu0 0.0
    %1652 = vmatprep.subr.mxu0 0.0
    %1653 = vmatpush1.msra.mxu0 0.0
    %1654 = vmatprep.subr.mxu0 0.0
    %1655 = vmatpush1.msra.mxu0 0.0
    %1656 = vmatprep.subr.mxu0 0.0
    %1657 = vmatpush1.msra.mxu0 0.0
    %1658 = vmatprep.subr.mxu0 0.0
    %1659 = vmatpush1.msra.mxu0 0.0
    %1660 = vmatprep.subr.mxu0 0.0
    %1661 = vmatpush1.msra.mxu0 0.0
    %1662 = vmatprep.subr.mxu0 0.0
    %1663 = vmatpush1.msra.mxu0 0.0
    %1664 = vmatprep.subr.mxu0 0.0
    %1665 = vmatpush1.msra.mxu0 0.0
    %1666 = vmatprep.subr.mxu0 0.0
    %1667 = vmatpush1.msra.mxu0 0.0
    %1668 = vmatprep.subr.mxu0 0.0
    %1669 = vmatpush1.msra.mxu0 0.0
    %1670 = vmatprep.subr.mxu0 0.0
    %1671 = vmatpush1.msra.mxu0 0.0
    %1672 = vmatprep.subr.mxu0 0.0
    %1673 = vmatpush1.msra.mxu0 0.0
    %1674 = vmatprep.subr.mxu0 0.0
    %1675 = vmatpush1.msra.mxu0 0.0
    %1676 = vmatprep.subr.mxu0 0.0
    %1677 = vmatpush1.msra.mxu0 0.0
    %1678 = vmatprep.subr.mxu0 0.0
    %1679 = vmatpush1.msra.mxu0 0.0
    %1680 = vmatprep.mubr.f32.mxu0 0.0
    %1681 = vmatmul.mubr.f32.gmra.mrb[0].mxu0 %v1523
    %v1682 = vpop.f32.mrb[0].mxu0
    %v1683 = vadd.f32 %v1614, %v1682
    %v1684 = vpop.f32.mrb[0].mxu0
    %1685 = vmatprep.mubr.f32.mxu0 0.0
    %1686 = vmatmul.mubr.f32.gmra.mrb[0].mxu0 %v1526
    %v1687 = vpop.f32.mrb[0].mxu0
    %v1688 = vadd.f32 %v1614, %v1687
    %v1689 = vpop.f32.mrb[0].mxu0
    %1690 = vdwg.mxu0
    %v1691 = vld [vmem:[%s12] sm:$0xff]
    %v1692 = vld [vmem:[%s12 + $0x8] sm:$0xff]
    %v1693 = vld [vmem:[%s12 + $0x10] sm:$0xff]
    %v1694 = vld [vmem:[%s12 + $0x18] sm:$0xff]
    %v1695 = vld [vmem:[%s13] sm:$0x1]
    %v1697 = vlaneseq
    %v1698 = vshrl.u32 %v1697, 7
    %v1699 = vsub.s32 0, %v1698
    %v1700 = vrot.slane %v1695, %v1699
    %1702 = vmatprep.subr.mxu0 0.0
    %1703 = vmatpush1.msra.mxu0 %v1691
    %1704 = vmatprep.subr.mxu0 0.0
    %1705 = vmatpush1.msra.mxu0 %v1692
    %1706 = vmatprep.subr.mxu0 0.0
    %1707 = vmatpush1.msra.mxu0 %v1693
    %1708 = vmatprep.subr.mxu0 0.0
    %1709 = vmatpush1.msra.mxu0 %v1694
    %1710 = vmatprep.subr.mxu0 0.0
    %1711 = vmatpush1.msra.mxu0 0.0
    %1712 = vmatprep.subr.mxu0 0.0
    %1713 = vmatpush1.msra.mxu0 0.0
    %1714 = vmatprep.subr.mxu0 0.0
    %1715 = vmatpush1.msra.mxu0 0.0
    %1716 = vmatprep.subr.mxu0 0.0
    %1717 = vmatpush1.msra.mxu0 0.0
    %1718 = vmatprep.subr.mxu0 0.0
    %1719 = vmatpush1.msra.mxu0 0.0
    %1720 = vmatprep.subr.mxu0 0.0
    %1721 = vmatpush1.msra.mxu0 0.0
    %1722 = vmatprep.subr.mxu0 0.0
    %1723 = vmatpush1.msra.mxu0 0.0
    %1724 = vmatprep.subr.mxu0 0.0
    %1725 = vmatpush1.msra.mxu0 0.0
    %1726 = vmatprep.subr.mxu0 0.0
    %1727 = vmatpush1.msra.mxu0 0.0
    %1728 = vmatprep.subr.mxu0 0.0
    %1729 = vmatpush1.msra.mxu0 0.0
    %1730 = vmatprep.subr.mxu0 0.0
    %1731 = vmatpush1.msra.mxu0 0.0
    %1732 = vmatprep.subr.mxu0 0.0
    %1733 = vmatpush1.msra.mxu0 0.0
    %1734 = vmatprep.subr.mxu0 0.0
    %1735 = vmatpush1.msra.mxu0 0.0
    %1736 = vmatprep.subr.mxu0 0.0
    %1737 = vmatpush1.msra.mxu0 0.0
    %1738 = vmatprep.subr.mxu0 0.0
    %1739 = vmatpush1.msra.mxu0 0.0
    %1740 = vmatprep.subr.mxu0 0.0
    %1741 = vmatpush1.msra.mxu0 0.0
    %1742 = vmatprep.subr.mxu0 0.0
    %1743 = vmatpush1.msra.mxu0 0.0
    %1744 = vmatprep.subr.mxu0 0.0
    %1745 = vmatpush1.msra.mxu0 0.0
    %1746 = vmatprep.subr.mxu0 0.0
    %1747 = vmatpush1.msra.mxu0 0.0
    %1748 = vmatprep.subr.mxu0 0.0
    %1749 = vmatpush1.msra.mxu0 0.0
    %1750 = vmatprep.subr.mxu0 0.0
    %1751 = vmatpush1.msra.mxu0 0.0
    %1752 = vmatprep.subr.mxu0 0.0
    %1753 = vmatpush1.msra.mxu0 0.0
    %1754 = vmatprep.subr.mxu0 0.0
    %1755 = vmatpush1.msra.mxu0 0.0
    %1756 = vmatprep.subr.mxu0 0.0
    %1757 = vmatpush1.msra.mxu0 0.0
    %1758 = vmatprep.subr.mxu0 0.0
    %1759 = vmatpush1.msra.mxu0 0.0
    %1760 = vmatprep.subr.mxu0 0.0
    %1761 = vmatpush1.msra.mxu0 0.0
    %1762 = vmatprep.subr.mxu0 0.0
    %1763 = vmatpush1.msra.mxu0 0.0
    %1764 = vmatprep.subr.mxu0 0.0
    %1765 = vmatpush1.msra.mxu0 0.0
    %1766 = vmatprep.mubr.f32.mxu0 0.0
    %1767 = vmatmul.mubr.f32.gmra.mrb[0].mxu0 %v1523
    %v1768 = vpop.f32.mrb[0].mxu0
    %v1769 = vadd.f32 %v1700, %v1768
    %v1770 = vpop.f32.mrb[0].mxu0
    %1771 = vmatprep.mubr.f32.mxu0 0.0
    %1772 = vmatmul.mubr.f32.gmra.mrb[0].mxu0 %v1526
    %v1773 = vpop.f32.mrb[0].mxu0
    %v1774 = vadd.f32 %v1700, %v1773
    %v1775 = vpop.f32.mrb[0].mxu0
    %1776 = vdwg.mxu0
    %vm1777 = vcmask 31744
    %v1779 = vsel %vm1777, %v1603, 0
    %v1782 = vsel %vm1777, %v1683, 0
    %1784 = vmatprep.subr.mxu0 0.0
    %1785 = vmatpush1.xpose.msra.mxu0 %v1782
    %1786 = vmatprep.subr.mxu0 0.0
    %1787 = vmatpush1.xpose.msra.mxu0 0.0
    %1788 = vmatprep.subr.mxu0 0.0
    %1789 = vmatpush1.xpose.msra.mxu0 0.0
    %1790 = vmatprep.subr.mxu0 0.0
    %1791 = vmatpush1.xpose.msra.mxu0 0.0
    %1792 = vmatprep.subr.mxu0 0.0
    %1793 = vmatpush1.xpose.msra.mxu0 0.0
    %1794 = vmatprep.subr.mxu0 0.0
    %1795 = vmatpush1.xpose.msra.mxu0 0.0
    %1796 = vmatprep.subr.mxu0 0.0
    %1797 = vmatpush1.xpose.msra.mxu0 0.0
    %1798 = vmatprep.subr.mxu0 0.0
    %1799 = vmatpush1.xpose.msra.mxu0 0.0
    %1800 = vmatprep.subr.mxu0 0.0
    %1801 = vmatpush1.xpose.msra.mxu0 0.0
    %1802 = vmatprep.subr.mxu0 0.0
    %1803 = vmatpush1.xpose.msra.mxu0 0.0
    %1804 = vmatprep.subr.mxu0 0.0
    %1805 = vmatpush1.xpose.msra.mxu0 0.0
    %1806 = vmatprep.subr.mxu0 0.0
    %1807 = vmatpush1.xpose.msra.mxu0 0.0
    %1808 = vmatprep.subr.mxu0 0.0
    %1809 = vmatpush1.xpose.msra.mxu0 0.0
    %1810 = vmatprep.subr.mxu0 0.0
    %1811 = vmatpush1.xpose.msra.mxu0 0.0
    %1812 = vmatprep.subr.mxu0 0.0
    %1813 = vmatpush1.xpose.msra.mxu0 0.0
    %1814 = vmatprep.subr.mxu0 0.0
    %1815 = vmatpush1.xpose.msra.mxu0 0.0
    %1816 = vmatprep.subr.mxu0 0.0
    %1817 = vmatpush1.xpose.msra.mxu0 0.0
    %1818 = vmatprep.subr.mxu0 0.0
    %1819 = vmatpush1.xpose.msra.mxu0 0.0
    %1820 = vmatprep.subr.mxu0 0.0
    %1821 = vmatpush1.xpose.msra.mxu0 0.0
    %1822 = vmatprep.subr.mxu0 0.0
    %1823 = vmatpush1.xpose.msra.mxu0 0.0
    %1824 = vmatprep.subr.mxu0 0.0
    %1825 = vmatpush1.xpose.msra.mxu0 0.0
    %1826 = vmatprep.subr.mxu0 0.0
    %1827 = vmatpush1.xpose.msra.mxu0 0.0
    %1828 = vmatprep.subr.mxu0 0.0
    %1829 = vmatpush1.xpose.msra.mxu0 0.0
    %1830 = vmatprep.subr.mxu0 0.0
    %1831 = vmatpush1.xpose.msra.mxu0 0.0
    %1832 = vmatprep.subr.mxu0 0.0
    %1833 = vmatpush1.xpose.msra.mxu0 0.0
    %1834 = vmatprep.subr.mxu0 0.0
    %1835 = vmatpush1.xpose.msra.mxu0 0.0
    %1836 = vmatprep.subr.mxu0 0.0
    %1837 = vmatpush1.xpose.msra.mxu0 0.0
    %1838 = vmatprep.subr.mxu0 0.0
    %1839 = vmatpush1.xpose.msra.mxu0 0.0
    %1840 = vmatprep.subr.mxu0 0.0
    %1841 = vmatpush1.xpose.msra.mxu0 0.0
    %1842 = vmatprep.subr.mxu0 0.0
    %1843 = vmatpush1.xpose.msra.mxu0 0.0
    %1844 = vmatprep.subr.mxu0 0.0
    %1845 = vmatpush1.xpose.msra.mxu0 0.0
    %1846 = vmatprep.subr.mxu0 0.0
    %1847 = vmatpush1.xpose.msra.mxu0 0.0
    %1848 = vmatprep.mubr.f32.mxu0 0.0
    %1849 = vmatmul.mubr.f32.gmra.mrb[0].mxu0 %v1779
    %v1850 = vpop.f32.mrb[0].mxu0
    %v1851 = vadd.f32 0.0, %v1850
    %v1852 = vpop.f32.mrb[0].mxu0
    %1853 = vdwg.mxu0
    %v1855 = vsel %vm1777, %v1604, 0
    %v1858 = vsel %vm1777, %v1688, 0
    %1860 = vmatprep.subr.mxu0 0.0
    %1861 = vmatpush1.xpose.msra.mxu0 %v1858
    %1862 = vmatprep.subr.mxu0 0.0
    %1863 = vmatpush1.xpose.msra.mxu0 0.0
    %1864 = vmatprep.subr.mxu0 0.0
    %1865 = vmatpush1.xpose.msra.mxu0 0.0
    %1866 = vmatprep.subr.mxu0 0.0
    %1867 = vmatpush1.xpose.msra.mxu0 0.0
    %1868 = vmatprep.subr.mxu0 0.0
    %1869 = vmatpush1.xpose.msra.mxu0 0.0
    %1870 = vmatprep.subr.mxu0 0.0
    %1871 = vmatpush1.xpose.msra.mxu0 0.0
    %1872 = vmatprep.subr.mxu0 0.0
    %1873 = vmatpush1.xpose.msra.mxu0 0.0
    %1874 = vmatprep.subr.mxu0 0.0
    %1875 = vmatpush1.xpose.msra.mxu0 0.0
    %1876 = vmatprep.subr.mxu0 0.0
    %1877 = vmatpush1.xpose.msra.mxu0 0.0
    %1878 = vmatprep.subr.mxu0 0.0
    %1879 = vmatpush1.xpose.msra.mxu0 0.0
    %1880 = vmatprep.subr.mxu0 0.0
    %1881 = vmatpush1.xpose.msra.mxu0 0.0
    %1882 = vmatprep.subr.mxu0 0.0
    %1883 = vmatpush1.xpose.msra.mxu0 0.0
    %1884 = vmatprep.subr.mxu0 0.0
    %1885 = vmatpush1.xpose.msra.mxu0 0.0
    %1886 = vmatprep.subr.mxu0 0.0
    %1887 = vmatpush1.xpose.msra.mxu0 0.0
    %1888 = vmatprep.subr.mxu0 0.0
    %1889 = vmatpush1.xpose.msra.mxu0 0.0
    %1890 = vmatprep.subr.mxu0 0.0
    %1891 = vmatpush1.xpose.msra.mxu0 0.0
    %1892 = vmatprep.subr.mxu0 0.0
    %1893 = vmatpush1.xpose.msra.mxu0 0.0
    %1894 = vmatprep.subr.mxu0 0.0
    %1895 = vmatpush1.xpose.msra.mxu0 0.0
    %1896 = vmatprep.subr.mxu0 0.0
    %1897 = vmatpush1.xpose.msra.mxu0 0.0
    %1898 = vmatprep.subr.mxu0 0.0
    %1899 = vmatpush1.xpose.msra.mxu0 0.0
    %1900 = vmatprep.subr.mxu0 0.0
    %1901 = vmatpush1.xpose.msra.mxu0 0.0
    %1902 = vmatprep.subr.mxu0 0.0
    %1903 = vmatpush1.xpose.msra.mxu0 0.0
    %1904 = vmatprep.subr.mxu0 0.0
    %1905 = vmatpush1.xpose.msra.mxu0 0.0
    %1906 = vmatprep.subr.mxu0 0.0
    %1907 = vmatpush1.xpose.msra.mxu0 0.0
    %1908 = vmatprep.subr.mxu0 0.0
    %1909 = vmatpush1.xpose.msra.mxu0 0.0
    %1910 = vmatprep.subr.mxu0 0.0
    %1911 = vmatpush1.xpose.msra.mxu0 0.0
    %1912 = vmatprep.subr.mxu0 0.0
    %1913 = vmatpush1.xpose.msra.mxu0 0.0
    %1914 = vmatprep.subr.mxu0 0.0
    %1915 = vmatpush1.xpose.msra.mxu0 0.0
    %1916 = vmatprep.subr.mxu0 0.0
    %1917 = vmatpush1.xpose.msra.mxu0 0.0
    %1918 = vmatprep.subr.mxu0 0.0
    %1919 = vmatpush1.xpose.msra.mxu0 0.0
    %1920 = vmatprep.subr.mxu0 0.0
    %1921 = vmatpush1.xpose.msra.mxu0 0.0
    %1922 = vmatprep.subr.mxu0 0.0
    %1923 = vmatpush1.xpose.msra.mxu0 0.0
    %1924 = vmatprep.mubr.f32.mxu0 0.0
    %1925 = vmatmul.mubr.f32.gmra.mrb[0].mxu0 %v1855
    %v1926 = vpop.f32.mrb[0].mxu0
    %v1927 = vadd.f32 0.0, %v1926
    %v1928 = vpop.f32.mrb[0].mxu0
    %1929 = vdwg.mxu0
    %vm1930 = vcmask 64512
    %v1931 = vsel %vm1930, %v1851, -inf
    %1932 = vmax.xlane.f32.xlu0 %v1931
    %v1933 = vpop.xlane.xlu0 %1932
    %v1934 = vsel %vm1930, %v1927, -inf
    %1935 = vmax.xlane.f32.xlu0 %v1934
    %v1936 = vpop.xlane.xlu0 %1935
    %v1937 = vsub.f32 %v1851, %v1933
    %v1938 = vsub.f32 %v1927, %v1936
    %v1939 = vmul.f32 %v1937, 1.442695
    %v1940 = vpow.pop %v1939
    %v1941 = vmul.f32 %v1938, 1.442695
    %v1942 = vpow.pop %v1941
    %v1943 = vsel %vm1930, %v1940, 0.0
    %1944 = vadd.xlane.f32.xlu0 %v1943
    %v1945 = vpop.xlane.xlu0 %1944
    %v1946 = vsel %vm1930, %v1942, 0.0
    %1947 = vadd.xlane.f32.xlu0 %v1946
    %v1948 = vpop.xlane.xlu0 %1947
    %v1949 = vrcp.pop %v1945
    %v1950 = vmul.f32 %v1940, %v1949
    %v1951 = vrcp.pop %v1948
    %v1952 = vmul.f32 %v1942, %v1951
    %v1953 = vsel %vm1930, %v1950, 0.0
    %v1954 = vrot.slane %v1953, 4
    %v1955 = vadd.f32 %v1953, %v1954
    %v1956 = vrot.slane %v1955, 2
    %v1957 = vadd.f32 %v1955, %v1956
    %v1958 = vrot.slane %v1957, 1
    %v1959 = vadd.f32 %v1957, %v1958
    %v1960 = vsel %vm1930, %v1952, 0.0
    %v1961 = vrot.slane %v1960, 4
    %v1962 = vadd.f32 %v1960, %v1961
    %v1963 = vrot.slane %v1962, 2
    %v1964 = vadd.f32 %v1962, %v1963
    %v1965 = vrot.slane %v1964, 1
    %v1966 = vadd.f32 %v1964, %v1965
    %v1967 = vrcp.pop 8.0
    %v1968 = vmul.f32 %v1959, %v1967
    %v1969 = vmul.f32 %v1966, %v1967
    %v1971 = vsel %vm1930, %v1968, 0
    %1973 = vmatprep.subr.mxu0 0.0
    %1974 = vmatpush1.msra.mxu0 %v1769
    %1975 = vmatprep.subr.mxu0 0.0
    %1976 = vmatpush1.msra.mxu0 0.0
    %1977 = vmatprep.subr.mxu0 0.0
    %1978 = vmatpush1.msra.mxu0 0.0
    %1979 = vmatprep.subr.mxu0 0.0
    %1980 = vmatpush1.msra.mxu0 0.0
    %1981 = vmatprep.subr.mxu0 0.0
    %1982 = vmatpush1.msra.mxu0 0.0
    %1983 = vmatprep.subr.mxu0 0.0
    %1984 = vmatpush1.msra.mxu0 0.0
    %1985 = vmatprep.subr.mxu0 0.0
    %1986 = vmatpush1.msra.mxu0 0.0
    %1987 = vmatprep.subr.mxu0 0.0
    %1988 = vmatpush1.msra.mxu0 0.0
    %1989 = vmatprep.subr.mxu0 0.0
    %1990 = vmatpush1.msra.mxu0 0.0
    %1991 = vmatprep.subr.mxu0 0.0
    %1992 = vmatpush1.msra.mxu0 0.0
    %1993 = vmatprep.subr.mxu0 0.0
    %1994 = vmatpush1.msra.mxu0 0.0
    %1995 = vmatprep.subr.mxu0 0.0
    %1996 = vmatpush1.msra.mxu0 0.0
    %1997 = vmatprep.subr.mxu0 0.0
    %1998 = vmatpush1.msra.mxu0 0.0
    %1999 = vmatprep.subr.mxu0 0.0
    %2000 = vmatpush1.msra.mxu0 0.0
    %2001 = vmatprep.subr.mxu0 0.0
    %2002 = vmatpush1.msra.mxu0 0.0
    %2003 = vmatprep.subr.mxu0 0.0
    %2004 = vmatpush1.msra.mxu0 0.0
    %2005 = vmatprep.subr.mxu0 0.0
    %2006 = vmatpush1.msra.mxu0 0.0
    %2007 = vmatprep.subr.mxu0 0.0
    %2008 = vmatpush1.msra.mxu0 0.0
    %2009 = vmatprep.subr.mxu0 0.0
    %2010 = vmatpush1.msra.mxu0 0.0
    %2011 = vmatprep.subr.mxu0 0.0
    %2012 = vmatpush1.msra.mxu0 0.0
    %2013 = vmatprep.subr.mxu0 0.0
    %2014 = vmatpush1.msra.mxu0 0.0
    %2015 = vmatprep.subr.mxu0 0.0
    %2016 = vmatpush1.msra.mxu0 0.0
    %2017 = vmatprep.subr.mxu0 0.0
    %2018 = vmatpush1.msra.mxu0 0.0
    %2019 = vmatprep.subr.mxu0 0.0
    %2020 = vmatpush1.msra.mxu0 0.0
    %2021 = vmatprep.subr.mxu0 0.0
    %2022 = vmatpush1.msra.mxu0 0.0
    %2023 = vmatprep.subr.mxu0 0.0
    %2024 = vmatpush1.msra.mxu0 0.0
    %2025 = vmatprep.subr.mxu0 0.0
    %2026 = vmatpush1.msra.mxu0 0.0
    %2027 = vmatprep.subr.mxu0 0.0
    %2028 = vmatpush1.msra.mxu0 0.0
    %2029 = vmatprep.subr.mxu0 0.0
    %2030 = vmatpush1.msra.mxu0 0.0
    %2031 = vmatprep.subr.mxu0 0.0
    %2032 = vmatpush1.msra.mxu0 0.0
    %2033 = vmatprep.subr.mxu0 0.0
    %2034 = vmatpush1.msra.mxu0 0.0
    %2035 = vmatprep.subr.mxu0 0.0
    %2036 = vmatpush1.msra.mxu0 0.0
    %2037 = vmatprep.mubr.f32.mxu0 0.0
    %2038 = vmatmul.mubr.f32.gmra.mrb[0].mxu0 %v1971
    %v2039 = vpop.f32.mrb[0].mxu0
    %v2040 = vadd.f32 0.0, %v2039
    %v2041 = vpop.f32.mrb[0].mxu0
    %2042 = vdwg.mxu0
    %v2044 = vsel %vm1930, %v1969, 0
    %2046 = vmatprep.subr.mxu0 0.0
    %2047 = vmatpush1.msra.mxu0 %v1774
    %2048 = vmatprep.subr.mxu0 0.0
    %2049 = vmatpush1.msra.mxu0 0.0
    %2050 = vmatprep.subr.mxu0 0.0
    %2051 = vmatpush1.msra.mxu0 0.0
    %2052 = vmatprep.subr.mxu0 0.0
    %2053 = vmatpush1.msra.mxu0 0.0
    %2054 = vmatprep.subr.mxu0 0.0
    %2055 = vmatpush1.msra.mxu0 0.0
    %2056 = vmatprep.subr.mxu0 0.0
    %2057 = vmatpush1.msra.mxu0 0.0
    %2058 = vmatprep.subr.mxu0 0.0
    %2059 = vmatpush1.msra.mxu0 0.0
    %2060 = vmatprep.subr.mxu0 0.0
    %2061 = vmatpush1.msra.mxu0 0.0
    %2062 = vmatprep.subr.mxu0 0.0
    %2063 = vmatpush1.msra.mxu0 0.0
    %2064 = vmatprep.subr.mxu0 0.0
    %2065 = vmatpush1.msra.mxu0 0.0
    %2066 = vmatprep.subr.mxu0 0.0
    %2067 = vmatpush1.msra.mxu0 0.0
    %2068 = vmatprep.subr.mxu0 0.0
    %2069 = vmatpush1.msra.mxu0 0.0
    %2070 = vmatprep.subr.mxu0 0.0
    %2071 = vmatpush1.msra.mxu0 0.0
    %2072 = vmatprep.subr.mxu0 0.0
    %2073 = vmatpush1.msra.mxu0 0.0
    %2074 = vmatprep.subr.mxu0 0.0
    %2075 = vmatpush1.msra.mxu0 0.0
    %2076 = vmatprep.subr.mxu0 0.0
    %2077 = vmatpush1.msra.mxu0 0.0
    %2078 = vmatprep.subr.mxu0 0.0
    %2079 = vmatpush1.msra.mxu0 0.0
    %2080 = vmatprep.subr.mxu0 0.0
    %2081 = vmatpush1.msra.mxu0 0.0
    %2082 = vmatprep.subr.mxu0 0.0
    %2083 = vmatpush1.msra.mxu0 0.0
    %2084 = vmatprep.subr.mxu0 0.0
    %2085 = vmatpush1.msra.mxu0 0.0
    %2086 = vmatprep.subr.mxu0 0.0
    %2087 = vmatpush1.msra.mxu0 0.0
    %2088 = vmatprep.subr.mxu0 0.0
    %2089 = vmatpush1.msra.mxu0 0.0
    %2090 = vmatprep.subr.mxu0 0.0
    %2091 = vmatpush1.msra.mxu0 0.0
    %2092 = vmatprep.subr.mxu0 0.0
    %2093 = vmatpush1.msra.mxu0 0.0
    %2094 = vmatprep.subr.mxu0 0.0
    %2095 = vmatpush1.msra.mxu0 0.0
    %2096 = vmatprep.subr.mxu0 0.0
    %2097 = vmatpush1.msra.mxu0 0.0
    %2098 = vmatprep.subr.mxu0 0.0
    %2099 = vmatpush1.msra.mxu0 0.0
    %2100 = vmatprep.subr.mxu0 0.0
    %2101 = vmatpush1.msra.mxu0 0.0
    %2102 = vmatprep.subr.mxu0 0.0
    %2103 = vmatpush1.msra.mxu0 0.0
    %2104 = vmatprep.subr.mxu0 0.0
    %2105 = vmatpush1.msra.mxu0 0.0
    %2106 = vmatprep.subr.mxu0 0.0
    %2107 = vmatpush1.msra.mxu0 0.0
    %2108 = vmatprep.subr.mxu0 0.0
    %2109 = vmatpush1.msra.mxu0 0.0
    %2110 = vmatprep.mubr.f32.mxu0 0.0
    %2111 = vmatmul.mubr.f32.gmra.mrb[0].mxu0 %v2044
    %v2112 = vpop.f32.mrb[0].mxu0
    %v2113 = vadd.f32 0.0, %v2112
    %v2114 = vpop.f32.mrb[0].mxu0
    %2115 = vdwg.mxu0
    %2116 = vrot.lane.b32.xlu0 %v1603, 124
    %v2117 = vpop.permute.xlu0 %2116
    %2118 = vrot.lane.b32.xlu0 %v1683, 124
    %v2119 = vpop.permute.xlu0 %2118
    %v2120 = vsel %vm1777, %v2117, 0
    %v2122 = vsel %vm1777, %v2119, 0
    %2124 = vmatprep.subr.mxu0 0.0
    %2125 = vmatpush1.xpose.msra.mxu0 %v2122
    %2126 = vmatprep.subr.mxu0 0.0
    %2127 = vmatpush1.xpose.msra.mxu0 0.0
    %2128 = vmatprep.subr.mxu0 0.0
    %2129 = vmatpush1.xpose.msra.mxu0 0.0
    %2130 = vmatprep.subr.mxu0 0.0
    %2131 = vmatpush1.xpose.msra.mxu0 0.0
    %2132 = vmatprep.subr.mxu0 0.0
    %2133 = vmatpush1.xpose.msra.mxu0 0.0
    %2134 = vmatprep.subr.mxu0 0.0
    %2135 = vmatpush1.xpose.msra.mxu0 0.0
    %2136 = vmatprep.subr.mxu0 0.0
    %2137 = vmatpush1.xpose.msra.mxu0 0.0
    %2138 = vmatprep.subr.mxu0 0.0
    %2139 = vmatpush1.xpose.msra.mxu0 0.0
    %2140 = vmatprep.subr.mxu0 0.0
    %2141 = vmatpush1.xpose.msra.mxu0 0.0
    %2142 = vmatprep.subr.mxu0 0.0
    %2143 = vmatpush1.xpose.msra.mxu0 0.0
    %2144 = vmatprep.subr.mxu0 0.0
    %2145 = vmatpush1.xpose.msra.mxu0 0.0
    %2146 = vmatprep.subr.mxu0 0.0
    %2147 = vmatpush1.xpose.msra.mxu0 0.0
    %2148 = vmatprep.subr.mxu0 0.0
    %2149 = vmatpush1.xpose.msra.mxu0 0.0
    %2150 = vmatprep.subr.mxu0 0.0
    %2151 = vmatpush1.xpose.msra.mxu0 0.0
    %2152 = vmatprep.subr.mxu0 0.0
    %2153 = vmatpush1.xpose.msra.mxu0 0.0
    %2154 = vmatprep.subr.mxu0 0.0
    %2155 = vmatpush1.xpose.msra.mxu0 0.0
    %2156 = vmatprep.subr.mxu0 0.0
    %2157 = vmatpush1.xpose.msra.mxu0 0.0
    %2158 = vmatprep.subr.mxu0 0.0
    %2159 = vmatpush1.xpose.msra.mxu0 0.0
    %2160 = vmatprep.subr.mxu0 0.0
    %2161 = vmatpush1.xpose.msra.mxu0 0.0
    %2162 = vmatprep.subr.mxu0 0.0
    %2163 = vmatpush1.xpose.msra.mxu0 0.0
    %2164 = vmatprep.subr.mxu0 0.0
    %2165 = vmatpush1.xpose.msra.mxu0 0.0
    %2166 = vmatprep.subr.mxu0 0.0
    %2167 = vmatpush1.xpose.msra.mxu0 0.0
    %2168 = vmatprep.subr.mxu0 0.0
    %2169 = vmatpush1.xpose.msra.mxu0 0.0
    %2170 = vmatprep.subr.mxu0 0.0
    %2171 = vmatpush1.xpose.msra.mxu0 0.0
    %2172 = vmatprep.subr.mxu0 0.0
    %2173 = vmatpush1.xpose.msra.mxu0 0.0
    %2174 = vmatprep.subr.mxu0 0.0
    %2175 = vmatpush1.xpose.msra.mxu0 0.0
    %2176 = vmatprep.subr.mxu0 0.0
    %2177 = vmatpush1.xpose.msra.mxu0 0.0
    %2178 = vmatprep.subr.mxu0 0.0
    %2179 = vmatpush1.xpose.msra.mxu0 0.0
    %2180 = vmatprep.subr.mxu0 0.0
    %2181 = vmatpush1.xpose.msra.mxu0 0.0
    %2182 = vmatprep.subr.mxu0 0.0
    %2183 = vmatpush1.xpose.msra.mxu0 0.0
    %2184 = vmatprep.subr.mxu0 0.0
    %2185 = vmatpush1.xpose.msra.mxu0 0.0
    %2186 = vmatprep.subr.mxu0 0.0
    %2187 = vmatpush1.xpose.msra.mxu0 0.0
    %2188 = vmatprep.mubr.f32.mxu0 0.0
    %2189 = vmatmul.mubr.f32.gmra.mrb[0].mxu0 %v2120
    %v2190 = vpop.f32.mrb[0].mxu0
    %v2191 = vadd.f32 0.0, %v2190
    %v2192 = vpop.f32.mrb[0].mxu0
    %2193 = vdwg.mxu0
    %2194 = vrot.lane.b32.xlu0 %v1604, 124
    %v2195 = vpop.permute.xlu0 %2194
    %2196 = vrot.lane.b32.xlu0 %v1688, 124
    %v2197 = vpop.permute.xlu0 %2196
    %v2198 = vsel %vm1777, %v2195, 0
    %v2200 = vsel %vm1777, %v2197, 0
    %2202 = vmatprep.subr.mxu0 0.0
    %2203 = vmatpush1.xpose.msra.mxu0 %v2200
    %2204 = vmatprep.subr.mxu0 0.0
    %2205 = vmatpush1.xpose.msra.mxu0 0.0
    %2206 = vmatprep.subr.mxu0 0.0
    %2207 = vmatpush1.xpose.msra.mxu0 0.0
    %2208 = vmatprep.subr.mxu0 0.0
    %2209 = vmatpush1.xpose.msra.mxu0 0.0
    %2210 = vmatprep.subr.mxu0 0.0
    %2211 = vmatpush1.xpose.msra.mxu0 0.0
    %2212 = vmatprep.subr.mxu0 0.0
    %2213 = vmatpush1.xpose.msra.mxu0 0.0
    %2214 = vmatprep.subr.mxu0 0.0
    %2215 = vmatpush1.xpose.msra.mxu0 0.0
    %2216 = vmatprep.subr.mxu0 0.0
    %2217 = vmatpush1.xpose.msra.mxu0 0.0
    %2218 = vmatprep.subr.mxu0 0.0
    %2219 = vmatpush1.xpose.msra.mxu0 0.0
    %2220 = vmatprep.subr.mxu0 0.0
    %2221 = vmatpush1.xpose.msra.mxu0 0.0
    %2222 = vmatprep.subr.mxu0 0.0
    %2223 = vmatpush1.xpose.msra.mxu0 0.0
    %2224 = vmatprep.subr.mxu0 0.0
    %2225 = vmatpush1.xpose.msra.mxu0 0.0
    %2226 = vmatprep.subr.mxu0 0.0
    %2227 = vmatpush1.xpose.msra.mxu0 0.0
    %2228 = vmatprep.subr.mxu0 0.0
    %2229 = vmatpush1.xpose.msra.mxu0 0.0
    %2230 = vmatprep.subr.mxu0 0.0
    %2231 = vmatpush1.xpose.msra.mxu0 0.0
    %2232 = vmatprep.subr.mxu0 0.0
    %2233 = vmatpush1.xpose.msra.mxu0 0.0
    %2234 = vmatprep.subr.mxu0 0.0
    %2235 = vmatpush1.xpose.msra.mxu0 0.0
    %2236 = vmatprep.subr.mxu0 0.0
    %2237 = vmatpush1.xpose.msra.mxu0 0.0
    %2238 = vmatprep.subr.mxu0 0.0
    %2239 = vmatpush1.xpose.msra.mxu0 0.0
    %2240 = vmatprep.subr.mxu0 0.0
    %2241 = vmatpush1.xpose.msra.mxu0 0.0
    %2242 = vmatprep.subr.mxu0 0.0
    %2243 = vmatpush1.xpose.msra.mxu0 0.0
    %2244 = vmatprep.subr.mxu0 0.0
    %2245 = vmatpush1.xpose.msra.mxu0 0.0
    %2246 = vmatprep.subr.mxu0 0.0
    %2247 = vmatpush1.xpose.msra.mxu0 0.0
    %2248 = vmatprep.subr.mxu0 0.0
    %2249 = vmatpush1.xpose.msra.mxu0 0.0
    %2250 = vmatprep.subr.mxu0 0.0
    %2251 = vmatpush1.xpose.msra.mxu0 0.0
    %2252 = vmatprep.subr.mxu0 0.0
    %2253 = vmatpush1.xpose.msra.mxu0 0.0
    %2254 = vmatprep.subr.mxu0 0.0
    %2255 = vmatpush1.xpose.msra.mxu0 0.0
    %2256 = vmatprep.subr.mxu0 0.0
    %2257 = vmatpush1.xpose.msra.mxu0 0.0
    %2258 = vmatprep.subr.mxu0 0.0
    %2259 = vmatpush1.xpose.msra.mxu0 0.0
    %2260 = vmatprep.subr.mxu0 0.0
    %2261 = vmatpush1.xpose.msra.mxu0 0.0
    %2262 = vmatprep.subr.mxu0 0.0
    %2263 = vmatpush1.xpose.msra.mxu0 0.0
    %2264 = vmatprep.subr.mxu0 0.0
    %2265 = vmatpush1.xpose.msra.mxu0 0.0
    %2266 = vmatprep.mubr.f32.mxu0 0.0
    %2267 = vmatmul.mubr.f32.gmra.mrb[0].mxu0 %v2198
    %v2268 = vpop.f32.mrb[0].mxu0
    %v2269 = vadd.f32 0.0, %v2268
    %v2270 = vpop.f32.mrb[0].mxu0
    %2271 = vdwg.mxu0
    %v2272 = vsel %vm1930, %v2191, -inf
    %2273 = vmax.xlane.f32.xlu0 %v2272
    %v2274 = vpop.xlane.xlu0 %2273
    %v2275 = vsel %vm1930, %v2269, -inf
    %2276 = vmax.xlane.f32.xlu0 %v2275
    %v2277 = vpop.xlane.xlu0 %2276
    %v2278 = vsub.f32 %v2191, %v2274
    %v2279 = vsub.f32 %v2269, %v2277
    %v2280 = vmul.f32 %v2278, 1.442695
    %v2281 = vpow.pop %v2280
    %v2282 = vmul.f32 %v2279, 1.442695
    %v2283 = vpow.pop %v2282
    %v2284 = vsel %vm1930, %v2281, 0.0
    %2285 = vadd.xlane.f32.xlu0 %v2284
    %v2286 = vpop.xlane.xlu0 %2285
    %v2287 = vsel %vm1930, %v2283, 0.0
    %2288 = vadd.xlane.f32.xlu0 %v2287
    %v2289 = vpop.xlane.xlu0 %2288
    %v2290 = vrcp.pop %v2286
    %v2291 = vmul.f32 %v2281, %v2290
    %v2292 = vrcp.pop %v2289
    %v2293 = vmul.f32 %v2283, %v2292
    %v2294 = vsel %vm1930, %v2291, 0.0
    %v2295 = vrot.slane %v2294, 4
    %v2296 = vadd.f32 %v2294, %v2295
    %v2297 = vrot.slane %v2296, 2
    %v2298 = vadd.f32 %v2296, %v2297
    %v2299 = vrot.slane %v2298, 1
    %v2300 = vadd.f32 %v2298, %v2299
    %v2301 = vsel %vm1930, %v2293, 0.0
    %v2302 = vrot.slane %v2301, 4
    %v2303 = vadd.f32 %v2301, %v2302
    %v2304 = vrot.slane %v2303, 2
    %v2305 = vadd.f32 %v2303, %v2304
    %v2306 = vrot.slane %v2305, 1
    %v2307 = vadd.f32 %v2305, %v2306
    %v2308 = vmul.f32 %v2300, %v1967
    %v2309 = vmul.f32 %v2307, %v1967
    %2311 = vrot.lane.b32.xlu0 %v1769, 124
    %v2312 = vpop.permute.xlu0 %2311
    %v2315 = vsel %vm1930, %v2308, 0
    %2317 = vmatprep.subr.mxu0 0.0
    %2318 = vmatpush1.msra.mxu0 %v2312
    %2319 = vmatprep.subr.mxu0 0.0
    %2320 = vmatpush1.msra.mxu0 0.0
    %2321 = vmatprep.subr.mxu0 0.0
    %2322 = vmatpush1.msra.mxu0 0.0
    %2323 = vmatprep.subr.mxu0 0.0
    %2324 = vmatpush1.msra.mxu0 0.0
    %2325 = vmatprep.subr.mxu0 0.0
    %2326 = vmatpush1.msra.mxu0 0.0
    %2327 = vmatprep.subr.mxu0 0.0
    %2328 = vmatpush1.msra.mxu0 0.0
    %2329 = vmatprep.subr.mxu0 0.0
    %2330 = vmatpush1.msra.mxu0 0.0
    %2331 = vmatprep.subr.mxu0 0.0
    %2332 = vmatpush1.msra.mxu0 0.0
    %2333 = vmatprep.subr.mxu0 0.0
    %2334 = vmatpush1.msra.mxu0 0.0
    %2335 = vmatprep.subr.mxu0 0.0
    %2336 = vmatpush1.msra.mxu0 0.0
    %2337 = vmatprep.subr.mxu0 0.0
    %2338 = vmatpush1.msra.mxu0 0.0
    %2339 = vmatprep.subr.mxu0 0.0
    %2340 = vmatpush1.msra.mxu0 0.0
    %2341 = vmatprep.subr.mxu0 0.0
    %2342 = vmatpush1.msra.mxu0 0.0
    %2343 = vmatprep.subr.mxu0 0.0
    %2344 = vmatpush1.msra.mxu0 0.0
    %2345 = vmatprep.subr.mxu0 0.0
    %2346 = vmatpush1.msra.mxu0 0.0
    %2347 = vmatprep.subr.mxu0 0.0
    %2348 = vmatpush1.msra.mxu0 0.0
    %2349 = vmatprep.subr.mxu0 0.0
    %2350 = vmatpush1.msra.mxu0 0.0
    %2351 = vmatprep.subr.mxu0 0.0
    %2352 = vmatpush1.msra.mxu0 0.0
    %2353 = vmatprep.subr.mxu0 0.0
    %2354 = vmatpush1.msra.mxu0 0.0
    %2355 = vmatprep.subr.mxu0 0.0
    %2356 = vmatpush1.msra.mxu0 0.0
    %2357 = vmatprep.subr.mxu0 0.0
    %2358 = vmatpush1.msra.mxu0 0.0
    %2359 = vmatprep.subr.mxu0 0.0
    %2360 = vmatpush1.msra.mxu0 0.0
    %2361 = vmatprep.subr.mxu0 0.0
    %2362 = vmatpush1.msra.mxu0 0.0
    %2363 = vmatprep.subr.mxu0 0.0
    %2364 = vmatpush1.msra.mxu0 0.0
    %2365 = vmatprep.subr.mxu0 0.0
    %2366 = vmatpush1.msra.mxu0 0.0
    %2367 = vmatprep.subr.mxu0 0.0
    %2368 = vmatpush1.msra.mxu0 0.0
    %2369 = vmatprep.subr.mxu0 0.0
    %2370 = vmatpush1.msra.mxu0 0.0
    %2371 = vmatprep.subr.mxu0 0.0
    %2372 = vmatpush1.msra.mxu0 0.0
    %2373 = vmatprep.subr.mxu0 0.0
    %2374 = vmatpush1.msra.mxu0 0.0
    %2375 = vmatprep.subr.mxu0 0.0
    %2376 = vmatpush1.msra.mxu0 0.0
    %2377 = vmatprep.subr.mxu0 0.0
    %2378 = vmatpush1.msra.mxu0 0.0
    %2379 = vmatprep.subr.mxu0 0.0
    %2380 = vmatpush1.msra.mxu0 0.0
    %2381 = vmatprep.mubr.f32.mxu0 0.0
    %2382 = vmatmul.mubr.f32.gmra.mrb[0].mxu0 %v2315
    %v2383 = vpop.f32.mrb[0].mxu0
    %v2384 = vadd.f32 0.0, %v2383
    %v2385 = vpop.f32.mrb[0].mxu0
    %2386 = vdwg.mxu0
    %2388 = vrot.lane.b32.xlu0 %v1774, 124
    %v2389 = vpop.permute.xlu0 %2388
    %v2392 = vsel %vm1930, %v2309, 0
    %2394 = vmatprep.subr.mxu0 0.0
    %2395 = vmatpush1.msra.mxu0 %v2389
    %2396 = vmatprep.subr.mxu0 0.0
    %2397 = vmatpush1.msra.mxu0 0.0
    %2398 = vmatprep.subr.mxu0 0.0
    %2399 = vmatpush1.msra.mxu0 0.0
    %2400 = vmatprep.subr.mxu0 0.0
    %2401 = vmatpush1.msra.mxu0 0.0
    %2402 = vmatprep.subr.mxu0 0.0
    %2403 = vmatpush1.msra.mxu0 0.0
    %2404 = vmatprep.subr.mxu0 0.0
    %2405 = vmatpush1.msra.mxu0 0.0
    %2406 = vmatprep.subr.mxu0 0.0
    %2407 = vmatpush1.msra.mxu0 0.0
    %2408 = vmatprep.subr.mxu0 0.0
    %2409 = vmatpush1.msra.mxu0 0.0
    %2410 = vmatprep.subr.mxu0 0.0
    %2411 = vmatpush1.msra.mxu0 0.0
    %2412 = vmatprep.subr.mxu0 0.0
    %2413 = vmatpush1.msra.mxu0 0.0
    %2414 = vmatprep.subr.mxu0 0.0
    %2415 = vmatpush1.msra.mxu0 0.0
    %2416 = vmatprep.subr.mxu0 0.0
    %2417 = vmatpush1.msra.mxu0 0.0
    %2418 = vmatprep.subr.mxu0 0.0
    %2419 = vmatpush1.msra.mxu0 0.0
    %2420 = vmatprep.subr.mxu0 0.0
    %2421 = vmatpush1.msra.mxu0 0.0
    %2422 = vmatprep.subr.mxu0 0.0
    %2423 = vmatpush1.msra.mxu0 0.0
    %2424 = vmatprep.subr.mxu0 0.0
    %2425 = vmatpush1.msra.mxu0 0.0
    %2426 = vmatprep.subr.mxu0 0.0
    %2427 = vmatpush1.msra.mxu0 0.0
    %2428 = vmatprep.subr.mxu0 0.0
    %2429 = vmatpush1.msra.mxu0 0.0
    %2430 = vmatprep.subr.mxu0 0.0
    %2431 = vmatpush1.msra.mxu0 0.0
    %2432 = vmatprep.subr.mxu0 0.0
    %2433 = vmatpush1.msra.mxu0 0.0
    %2434 = vmatprep.subr.mxu0 0.0
    %2435 = vmatpush1.msra.mxu0 0.0
    %2436 = vmatprep.subr.mxu0 0.0
    %2437 = vmatpush1.msra.mxu0 0.0
    %2438 = vmatprep.subr.mxu0 0.0
    %2439 = vmatpush1.msra.mxu0 0.0
    %2440 = vmatprep.subr.mxu0 0.0
    %2441 = vmatpush1.msra.mxu0 0.0
    %2442 = vmatprep.subr.mxu0 0.0
    %2443 = vmatpush1.msra.mxu0 0.0
    %2444 = vmatprep.subr.mxu0 0.0
    %2445 = vmatpush1.msra.mxu0 0.0
    %2446 = vmatprep.subr.mxu0 0.0
    %2447 = vmatpush1.msra.mxu0 0.0
    %2448 = vmatprep.subr.mxu0 0.0
    %2449 = vmatpush1.msra.mxu0 0.0
    %2450 = vmatprep.subr.mxu0 0.0
    %2451 = vmatpush1.msra.mxu0 0.0
    %2452 = vmatprep.subr.mxu0 0.0
    %2453 = vmatpush1.msra.mxu0 0.0
    %2454 = vmatprep.subr.mxu0 0.0
    %2455 = vmatpush1.msra.mxu0 0.0
    %2456 = vmatprep.subr.mxu0 0.0
    %2457 = vmatpush1.msra.mxu0 0.0
    %2458 = vmatprep.mubr.f32.mxu0 0.0
    %2459 = vmatmul.mubr.f32.gmra.mrb[0].mxu0 %v2392
    %v2460 = vpop.f32.mrb[0].mxu0
    %v2461 = vadd.f32 0.0, %v2460
    %v2462 = vpop.f32.mrb[0].mxu0
    %2463 = vdwg.mxu0
    %2464 = vrot.lane.b32.xlu0 %v1603, 120
    %v2465 = vpop.permute.xlu0 %2464
    %2466 = vrot.lane.b32.xlu0 %v1683, 120
    %v2467 = vpop.permute.xlu0 %2466
    %v2468 = vsel %vm1777, %v2465, 0
    %v2470 = vsel %vm1777, %v2467, 0
    %2472 = vmatprep.subr.mxu0 0.0
    %2473 = vmatpush1.xpose.msra.mxu0 %v2470
    %2474 = vmatprep.subr.mxu0 0.0
    %2475 = vmatpush1.xpose.msra.mxu0 0.0
    %2476 = vmatprep.subr.mxu0 0.0
    %2477 = vmatpush1.xpose.msra.mxu0 0.0
    %2478 = vmatprep.subr.mxu0 0.0
    %2479 = vmatpush1.xpose.msra.mxu0 0.0
    %2480 = vmatprep.subr.mxu0 0.0
    %2481 = vmatpush1.xpose.msra.mxu0 0.0
    %2482 = vmatprep.subr.mxu0 0.0
    %2483 = vmatpush1.xpose.msra.mxu0 0.0
    %2484 = vmatprep.subr.mxu0 0.0
    %2485 = vmatpush1.xpose.msra.mxu0 0.0
    %2486 = vmatprep.subr.mxu0 0.0
    %2487 = vmatpush1.xpose.msra.mxu0 0.0
    %2488 = vmatprep.subr.mxu0 0.0
    %2489 = vmatpush1.xpose.msra.mxu0 0.0
    %2490 = vmatprep.subr.mxu0 0.0
    %2491 = vmatpush1.xpose.msra.mxu0 0.0
    %2492 = vmatprep.subr.mxu0 0.0
    %2493 = vmatpush1.xpose.msra.mxu0 0.0
    %2494 = vmatprep.subr.mxu0 0.0
    %2495 = vmatpush1.xpose.msra.mxu0 0.0
    %2496 = vmatprep.subr.mxu0 0.0
    %2497 = vmatpush1.xpose.msra.mxu0 0.0
    %2498 = vmatprep.subr.mxu0 0.0
    %2499 = vmatpush1.xpose.msra.mxu0 0.0
    %2500 = vmatprep.subr.mxu0 0.0
    %2501 = vmatpush1.xpose.msra.mxu0 0.0
    %2502 = vmatprep.subr.mxu0 0.0
    %2503 = vmatpush1.xpose.msra.mxu0 0.0
    %2504 = vmatprep.subr.mxu0 0.0
    %2505 = vmatpush1.xpose.msra.mxu0 0.0
    %2506 = vmatprep.subr.mxu0 0.0
    %2507 = vmatpush1.xpose.msra.mxu0 0.0
    %2508 = vmatprep.subr.mxu0 0.0
    %2509 = vmatpush1.xpose.msra.mxu0 0.0
    %2510 = vmatprep.subr.mxu0 0.0
    %2511 = vmatpush1.xpose.msra.mxu0 0.0
    %2512 = vmatprep.subr.mxu0 0.0
    %2513 = vmatpush1.xpose.msra.mxu0 0.0
    %2514 = vmatprep.subr.mxu0 0.0
    %2515 = vmatpush1.xpose.msra.mxu0 0.0
    %2516 = vmatprep.subr.mxu0 0.0
    %2517 = vmatpush1.xpose.msra.mxu0 0.0
    %2518 = vmatprep.subr.mxu0 0.0
    %2519 = vmatpush1.xpose.msra.mxu0 0.0
    %2520 = vmatprep.subr.mxu0 0.0
    %2521 = vmatpush1.xpose.msra.mxu0 0.0
    %2522 = vmatprep.subr.mxu0 0.0
    %2523 = vmatpush1.xpose.msra.mxu0 0.0
    %2524 = vmatprep.subr.mxu0 0.0
    %2525 = vmatpush1.xpose.msra.mxu0 0.0
    %2526 = vmatprep.subr.mxu0 0.0
    %2527 = vmatpush1.xpose.msra.mxu0 0.0
    %2528 = vmatprep.subr.mxu0 0.0
    %2529 = vmatpush1.xpose.msra.mxu0 0.0
    %2530 = vmatprep.subr.mxu0 0.0
    %2531 = vmatpush1.xpose.msra.mxu0 0.0
    %2532 = vmatprep.subr.mxu0 0.0
    %2533 = vmatpush1.xpose.msra.mxu0 0.0
    %2534 = vmatprep.subr.mxu0 0.0
    %2535 = vmatpush1.xpose.msra.mxu0 0.0
    %2536 = vmatprep.mubr.f32.mxu0 0.0
    %2537 = vmatmul.mubr.f32.gmra.mrb[0].mxu0 %v2468
    %v2538 = vpop.f32.mrb[0].mxu0
    %v2539 = vadd.f32 0.0, %v2538
    %v2540 = vpop.f32.mrb[0].mxu0
    %2541 = vdwg.mxu0
    %2542 = vrot.lane.b32.xlu0 %v1604, 120
    %v2543 = vpop.permute.xlu0 %2542
    %2544 = vrot.lane.b32.xlu0 %v1688, 120
    %v2545 = vpop.permute.xlu0 %2544
    %v2546 = vsel %vm1777, %v2543, 0
    %v2548 = vsel %vm1777, %v2545, 0
    %2550 = vmatprep.subr.mxu0 0.0
    %2551 = vmatpush1.xpose.msra.mxu0 %v2548
    %2552 = vmatprep.subr.mxu0 0.0
    %2553 = vmatpush1.xpose.msra.mxu0 0.0
    %2554 = vmatprep.subr.mxu0 0.0
    %2555 = vmatpush1.xpose.msra.mxu0 0.0
    %2556 = vmatprep.subr.mxu0 0.0
    %2557 = vmatpush1.xpose.msra.mxu0 0.0
    %2558 = vmatprep.subr.mxu0 0.0
    %2559 = vmatpush1.xpose.msra.mxu0 0.0
    %2560 = vmatprep.subr.mxu0 0.0
    %2561 = vmatpush1.xpose.msra.mxu0 0.0
    %2562 = vmatprep.subr.mxu0 0.0
    %2563 = vmatpush1.xpose.msra.mxu0 0.0
    %2564 = vmatprep.subr.mxu0 0.0
    %2565 = vmatpush1.xpose.msra.mxu0 0.0
    %2566 = vmatprep.subr.mxu0 0.0
    %2567 = vmatpush1.xpose.msra.mxu0 0.0
    %2568 = vmatprep.subr.mxu0 0.0
    %2569 = vmatpush1.xpose.msra.mxu0 0.0
    %2570 = vmatprep.subr.mxu0 0.0
    %2571 = vmatpush1.xpose.msra.mxu0 0.0
    %2572 = vmatprep.subr.mxu0 0.0
    %2573 = vmatpush1.xpose.msra.mxu0 0.0
    %2574 = vmatprep.subr.mxu0 0.0
    %2575 = vmatpush1.xpose.msra.mxu0 0.0
    %2576 = vmatprep.subr.mxu0 0.0
    %2577 = vmatpush1.xpose.msra.mxu0 0.0
    %2578 = vmatprep.subr.mxu0 0.0
    %2579 = vmatpush1.xpose.msra.mxu0 0.0
    %2580 = vmatprep.subr.mxu0 0.0
    %2581 = vmatpush1.xpose.msra.mxu0 0.0
    %2582 = vmatprep.subr.mxu0 0.0
    %2583 = vmatpush1.xpose.msra.mxu0 0.0
    %2584 = vmatprep.subr.mxu0 0.0
    %2585 = vmatpush1.xpose.msra.mxu0 0.0
    %2586 = vmatprep.subr.mxu0 0.0
    %2587 = vmatpush1.xpose.msra.mxu0 0.0
    %2588 = vmatprep.subr.mxu0 0.0
    %2589 = vmatpush1.xpose.msra.mxu0 0.0
    %2590 = vmatprep.subr.mxu0 0.0
    %2591 = vmatpush1.xpose.msra.mxu0 0.0
    %2592 = vmatprep.subr.mxu0 0.0
    %2593 = vmatpush1.xpose.msra.mxu0 0.0
    %2594 = vmatprep.subr.mxu0 0.0
    %2595 = vmatpush1.xpose.msra.mxu0 0.0
    %2596 = vmatprep.subr.mxu0 0.0
    %2597 = vmatpush1.xpose.msra.mxu0 0.0
    %2598 = vmatprep.subr.mxu0 0.0
    %2599 = vmatpush1.xpose.msra.mxu0 0.0
    %2600 = vmatprep.subr.mxu0 0.0
    %2601 = vmatpush1.xpose.msra.mxu0 0.0
    %2602 = vmatprep.subr.mxu0 0.0
    %2603 = vmatpush1.xpose.msra.mxu0 0.0
    %2604 = vmatprep.subr.mxu0 0.0
    %2605 = vmatpush1.xpose.msra.mxu0 0.0
    %2606 = vmatprep.subr.mxu0 0.0
    %2607 = vmatpush1.xpose.msra.mxu0 0.0
    %2608 = vmatprep.subr.mxu0 0.0
    %2609 = vmatpush1.xpose.msra.mxu0 0.0
    %2610 = vmatprep.subr.mxu0 0.0
    %2611 = vmatpush1.xpose.msra.mxu0 0.0
    %2612 = vmatprep.subr.mxu0 0.0
    %2613 = vmatpush1.xpose.msra.mxu0 0.0
    %2614 = vmatprep.mubr.f32.mxu0 0.0
    %2615 = vmatmul.mubr.f32.gmra.mrb[0].mxu0 %v2546
    %v2616 = vpop.f32.mrb[0].mxu0
    %v2617 = vadd.f32 0.0, %v2616
    %v2618 = vpop.f32.mrb[0].mxu0
    %2619 = vdwg.mxu0
    %v2620 = vsel %vm1930, %v2539, -inf
    %2621 = vmax.xlane.f32.xlu0 %v2620
    %v2622 = vpop.xlane.xlu0 %2621
    %v2623 = vsel %vm1930, %v2617, -inf
    %2624 = vmax.xlane.f32.xlu0 %v2623
    %v2625 = vpop.xlane.xlu0 %2624
    %v2626 = vsub.f32 %v2539, %v2622
    %v2627 = vsub.f32 %v2617, %v2625
    %v2628 = vmul.f32 %v2626, 1.442695
    %v2629 = vpow.pop %v2628
    %v2630 = vmul.f32 %v2627, 1.442695
    %v2631 = vpow.pop %v2630
    %v2632 = vsel %vm1930, %v2629, 0.0
    %2633 = vadd.xlane.f32.xlu0 %v2632
    %v2634 = vpop.xlane.xlu0 %2633
    %v2635 = vsel %vm1930, %v2631, 0.0
    %2636 = vadd.xlane.f32.xlu0 %v2635
    %v2637 = vpop.xlane.xlu0 %2636
    %v2638 = vrcp.pop %v2634
    %v2639 = vmul.f32 %v2629, %v2638
    %v2640 = vrcp.pop %v2637
    %v2641 = vmul.f32 %v2631, %v2640
    %v2642 = vsel %vm1930, %v2639, 0.0
    %v2643 = vrot.slane %v2642, 4
    %v2644 = vadd.f32 %v2642, %v2643
    %v2645 = vrot.slane %v2644, 2
    %v2646 = vadd.f32 %v2644, %v2645
    %v2647 = vrot.slane %v2646, 1
    %v2648 = vadd.f32 %v2646, %v2647
    %v2649 = vsel %vm1930, %v2641, 0.0
    %v2650 = vrot.slane %v2649, 4
    %v2651 = vadd.f32 %v2649, %v2650
    %v2652 = vrot.slane %v2651, 2
    %v2653 = vadd.f32 %v2651, %v2652
    %v2654 = vrot.slane %v2653, 1
    %v2655 = vadd.f32 %v2653, %v2654
    %v2656 = vmul.f32 %v2648, %v1967
    %v2657 = vmul.f32 %v2655, %v1967
    %2658 = vrot.lane.b32.xlu0 %v1769, 120
    %v2659 = vpop.permute.xlu0 %2658
    %v2662 = vsel %vm1930, %v2656, 0
    %2664 = vmatprep.subr.mxu0 0.0
    %2665 = vmatpush1.msra.mxu0 %v2659
    %2666 = vmatprep.subr.mxu0 0.0
    %2667 = vmatpush1.msra.mxu0 0.0
    %2668 = vmatprep.subr.mxu0 0.0
    %2669 = vmatpush1.msra.mxu0 0.0
    %2670 = vmatprep.subr.mxu0 0.0
    %2671 = vmatpush1.msra.mxu0 0.0
    %2672 = vmatprep.subr.mxu0 0.0
    %2673 = vmatpush1.msra.mxu0 0.0
    %2674 = vmatprep.subr.mxu0 0.0
    %2675 = vmatpush1.msra.mxu0 0.0
    %2676 = vmatprep.subr.mxu0 0.0
    %2677 = vmatpush1.msra.mxu0 0.0
    %2678 = vmatprep.subr.mxu0 0.0
    %2679 = vmatpush1.msra.mxu0 0.0
    %2680 = vmatprep.subr.mxu0 0.0
    %2681 = vmatpush1.msra.mxu0 0.0
    %2682 = vmatprep.subr.mxu0 0.0
    %2683 = vmatpush1.msra.mxu0 0.0
    %2684 = vmatprep.subr.mxu0 0.0
    %2685 = vmatpush1.msra.mxu0 0.0
    %2686 = vmatprep.subr.mxu0 0.0
    %2687 = vmatpush1.msra.mxu0 0.0
    %2688 = vmatprep.subr.mxu0 0.0
    %2689 = vmatpush1.msra.mxu0 0.0
    %2690 = vmatprep.subr.mxu0 0.0
    %2691 = vmatpush1.msra.mxu0 0.0
    %2692 = vmatprep.subr.mxu0 0.0
    %2693 = vmatpush1.msra.mxu0 0.0
    %2694 = vmatprep.subr.mxu0 0.0
    %2695 = vmatpush1.msra.mxu0 0.0
    %2696 = vmatprep.subr.mxu0 0.0
    %2697 = vmatpush1.msra.mxu0 0.0
    %2698 = vmatprep.subr.mxu0 0.0
    %2699 = vmatpush1.msra.mxu0 0.0
    %2700 = vmatprep.subr.mxu0 0.0
    %2701 = vmatpush1.msra.mxu0 0.0
    %2702 = vmatprep.subr.mxu0 0.0
    %2703 = vmatpush1.msra.mxu0 0.0
    %2704 = vmatprep.subr.mxu0 0.0
    %2705 = vmatpush1.msra.mxu0 0.0
    %2706 = vmatprep.subr.mxu0 0.0
    %2707 = vmatpush1.msra.mxu0 0.0
    %2708 = vmatprep.subr.mxu0 0.0
    %2709 = vmatpush1.msra.mxu0 0.0
    %2710 = vmatprep.subr.mxu0 0.0
    %2711 = vmatpush1.msra.mxu0 0.0
    %2712 = vmatprep.subr.mxu0 0.0
    %2713 = vmatpush1.msra.mxu0 0.0
    %2714 = vmatprep.subr.mxu0 0.0
    %2715 = vmatpush1.msra.mxu0 0.0
    %2716 = vmatprep.subr.mxu0 0.0
    %2717 = vmatpush1.msra.mxu0 0.0
    %2718 = vmatprep.subr.mxu0 0.0
    %2719 = vmatpush1.msra.mxu0 0.0
    %2720 = vmatprep.subr.mxu0 0.0
    %2721 = vmatpush1.msra.mxu0 0.0
    %2722 = vmatprep.subr.mxu0 0.0
    %2723 = vmatpush1.msra.mxu0 0.0
    %2724 = vmatprep.subr.mxu0 0.0
    %2725 = vmatpush1.msra.mxu0 0.0
    %2726 = vmatprep.subr.mxu0 0.0
    %2727 = vmatpush1.msra.mxu0 0.0
    %2728 = vmatprep.mubr.f32.mxu0 0.0
    %2729 = vmatmul.mubr.f32.gmra.mrb[0].mxu0 %v2662
    %v2730 = vpop.f32.mrb[0].mxu0
    %v2731 = vadd.f32 0.0, %v2730
    %v2732 = vpop.f32.mrb[0].mxu0
    %2733 = vdwg.mxu0
    %2734 = vrot.lane.b32.xlu0 %v1774, 120
    %v2735 = vpop.permute.xlu0 %2734
    %v2738 = vsel %vm1930, %v2657, 0
    %2740 = vmatprep.subr.mxu0 0.0
    %2741 = vmatpush1.msra.mxu0 %v2735
    %2742 = vmatprep.subr.mxu0 0.0
    %2743 = vmatpush1.msra.mxu0 0.0
    %2744 = vmatprep.subr.mxu0 0.0
    %2745 = vmatpush1.msra.mxu0 0.0
    %2746 = vmatprep.subr.mxu0 0.0
    %2747 = vmatpush1.msra.mxu0 0.0
    %2748 = vmatprep.subr.mxu0 0.0
    %2749 = vmatpush1.msra.mxu0 0.0
    %2750 = vmatprep.subr.mxu0 0.0
    %2751 = vmatpush1.msra.mxu0 0.0
    %2752 = vmatprep.subr.mxu0 0.0
    %2753 = vmatpush1.msra.mxu0 0.0
    %2754 = vmatprep.subr.mxu0 0.0
    %2755 = vmatpush1.msra.mxu0 0.0
    %2756 = vmatprep.subr.mxu0 0.0
    %2757 = vmatpush1.msra.mxu0 0.0
    %2758 = vmatprep.subr.mxu0 0.0
    %2759 = vmatpush1.msra.mxu0 0.0
    %2760 = vmatprep.subr.mxu0 0.0
    %2761 = vmatpush1.msra.mxu0 0.0
    %2762 = vmatprep.subr.mxu0 0.0
    %2763 = vmatpush1.msra.mxu0 0.0
    %2764 = vmatprep.subr.mxu0 0.0
    %2765 = vmatpush1.msra.mxu0 0.0
    %2766 = vmatprep.subr.mxu0 0.0
    %2767 = vmatpush1.msra.mxu0 0.0
    %2768 = vmatprep.subr.mxu0 0.0
    %2769 = vmatpush1.msra.mxu0 0.0
    %2770 = vmatprep.subr.mxu0 0.0
    %2771 = vmatpush1.msra.mxu0 0.0
    %2772 = vmatprep.subr.mxu0 0.0
    %2773 = vmatpush1.msra.mxu0 0.0
    %2774 = vmatprep.subr.mxu0 0.0
    %2775 = vmatpush1.msra.mxu0 0.0
    %2776 = vmatprep.subr.mxu0 0.0
    %2777 = vmatpush1.msra.mxu0 0.0
    %2778 = vmatprep.subr.mxu0 0.0
    %2779 = vmatpush1.msra.mxu0 0.0
    %2780 = vmatprep.subr.mxu0 0.0
    %2781 = vmatpush1.msra.mxu0 0.0
    %2782 = vmatprep.subr.mxu0 0.0
    %2783 = vmatpush1.msra.mxu0 0.0
    %2784 = vmatprep.subr.mxu0 0.0
    %2785 = vmatpush1.msra.mxu0 0.0
    %2786 = vmatprep.subr.mxu0 0.0
    %2787 = vmatpush1.msra.mxu0 0.0
    %2788 = vmatprep.subr.mxu0 0.0
    %2789 = vmatpush1.msra.mxu0 0.0
    %2790 = vmatprep.subr.mxu0 0.0
    %2791 = vmatpush1.msra.mxu0 0.0
    %2792 = vmatprep.subr.mxu0 0.0
    %2793 = vmatpush1.msra.mxu0 0.0
    %2794 = vmatprep.subr.mxu0 0.0
    %2795 = vmatpush1.msra.mxu0 0.0
    %2796 = vmatprep.subr.mxu0 0.0
    %2797 = vmatpush1.msra.mxu0 0.0
    %2798 = vmatprep.subr.mxu0 0.0
    %2799 = vmatpush1.msra.mxu0 0.0
    %2800 = vmatprep.subr.mxu0 0.0
    %2801 = vmatpush1.msra.mxu0 0.0
    %2802 = vmatprep.subr.mxu0 0.0
    %2803 = vmatpush1.msra.mxu0 0.0
    %2804 = vmatprep.mubr.f32.mxu0 0.0
    %2805 = vmatmul.mubr.f32.gmra.mrb[0].mxu0 %v2738
    %v2806 = vpop.f32.mrb[0].mxu0
    %v2807 = vadd.f32 0.0, %v2806
    %v2808 = vpop.f32.mrb[0].mxu0
    %2809 = vdwg.mxu0
    %2810 = vrot.lane.b32.xlu0 %v1603, 116
    %v2811 = vpop.permute.xlu0 %2810
    %2812 = vrot.lane.b32.xlu0 %v1683, 116
    %v2813 = vpop.permute.xlu0 %2812
    %v2814 = vsel %vm1777, %v2811, 0
    %v2816 = vsel %vm1777, %v2813, 0
    %2818 = vmatprep.subr.mxu0 0.0
    %2819 = vmatpush1.xpose.msra.mxu0 %v2816
    %2820 = vmatprep.subr.mxu0 0.0
    %2821 = vmatpush1.xpose.msra.mxu0 0.0
    %2822 = vmatprep.subr.mxu0 0.0
    %2823 = vmatpush1.xpose.msra.mxu0 0.0
    %2824 = vmatprep.subr.mxu0 0.0
    %2825 = vmatpush1.xpose.msra.mxu0 0.0
    %2826 = vmatprep.subr.mxu0 0.0
    %2827 = vmatpush1.xpose.msra.mxu0 0.0
    %2828 = vmatprep.subr.mxu0 0.0
    %2829 = vmatpush1.xpose.msra.mxu0 0.0
    %2830 = vmatprep.subr.mxu0 0.0
    %2831 = vmatpush1.xpose.msra.mxu0 0.0
    %2832 = vmatprep.subr.mxu0 0.0
    %2833 = vmatpush1.xpose.msra.mxu0 0.0
    %2834 = vmatprep.subr.mxu0 0.0
    %2835 = vmatpush1.xpose.msra.mxu0 0.0
    %2836 = vmatprep.subr.mxu0 0.0
    %2837 = vmatpush1.xpose.msra.mxu0 0.0
    %2838 = vmatprep.subr.mxu0 0.0
    %2839 = vmatpush1.xpose.msra.mxu0 0.0
    %2840 = vmatprep.subr.mxu0 0.0
    %2841 = vmatpush1.xpose.msra.mxu0 0.0
    %2842 = vmatprep.subr.mxu0 0.0
    %2843 = vmatpush1.xpose.msra.mxu0 0.0
    %2844 = vmatprep.subr.mxu0 0.0
    %2845 = vmatpush1.xpose.msra.mxu0 0.0
    %2846 = vmatprep.subr.mxu0 0.0
    %2847 = vmatpush1.xpose.msra.mxu0 0.0
    %2848 = vmatprep.subr.mxu0 0.0
    %2849 = vmatpush1.xpose.msra.mxu0 0.0
    %2850 = vmatprep.subr.mxu0 0.0
    %2851 = vmatpush1.xpose.msra.mxu0 0.0
    %2852 = vmatprep.subr.mxu0 0.0
    %2853 = vmatpush1.xpose.msra.mxu0 0.0
    %2854 = vmatprep.subr.mxu0 0.0
    %2855 = vmatpush1.xpose.msra.mxu0 0.0
    %2856 = vmatprep.subr.mxu0 0.0
    %2857 = vmatpush1.xpose.msra.mxu0 0.0
    %2858 = vmatprep.subr.mxu0 0.0
    %2859 = vmatpush1.xpose.msra.mxu0 0.0
    %2860 = vmatprep.subr.mxu0 0.0
    %2861 = vmatpush1.xpose.msra.mxu0 0.0
    %2862 = vmatprep.subr.mxu0 0.0
    %2863 = vmatpush1.xpose.msra.mxu0 0.0
    %2864 = vmatprep.subr.mxu0 0.0
    %2865 = vmatpush1.xpose.msra.mxu0 0.0
    %2866 = vmatprep.subr.mxu0 0.0
    %2867 = vmatpush1.xpose.msra.mxu0 0.0
    %2868 = vmatprep.subr.mxu0 0.0
    %2869 = vmatpush1.xpose.msra.mxu0 0.0
    %2870 = vmatprep.subr.mxu0 0.0
    %2871 = vmatpush1.xpose.msra.mxu0 0.0
    %2872 = vmatprep.subr.mxu0 0.0
    %2873 = vmatpush1.xpose.msra.mxu0 0.0
    %2874 = vmatprep.subr.mxu0 0.0
    %2875 = vmatpush1.xpose.msra.mxu0 0.0
    %2876 = vmatprep.subr.mxu0 0.0
    %2877 = vmatpush1.xpose.msra.mxu0 0.0
    %2878 = vmatprep.subr.mxu0 0.0
    %2879 = vmatpush1.xpose.msra.mxu0 0.0
    %2880 = vmatprep.subr.mxu0 0.0
    %2881 = vmatpush1.xpose.msra.mxu0 0.0
    %2882 = vmatprep.mubr.f32.mxu0 0.0
    %2883 = vmatmul.mubr.f32.gmra.mrb[0].mxu0 %v2814
    %v2884 = vpop.f32.mrb[0].mxu0
    %v2885 = vadd.f32 0.0, %v2884
    %v2886 = vpop.f32.mrb[0].mxu0
    %2887 = vdwg.mxu0
    %2888 = vrot.lane.b32.xlu0 %v1604, 116
    %v2889 = vpop.permute.xlu0 %2888
    %2890 = vrot.lane.b32.xlu0 %v1688, 116
    %v2891 = vpop.permute.xlu0 %2890
    %v2892 = vsel %vm1777, %v2889, 0
    %v2894 = vsel %vm1777, %v2891, 0
    %2896 = vmatprep.subr.mxu0 0.0
    %2897 = vmatpush1.xpose.msra.mxu0 %v2894
    %2898 = vmatprep.subr.mxu0 0.0
    %2899 = vmatpush1.xpose.msra.mxu0 0.0
    %2900 = vmatprep.subr.mxu0 0.0
    %2901 = vmatpush1.xpose.msra.mxu0 0.0
    %2902 = vmatprep.subr.mxu0 0.0
    %2903 = vmatpush1.xpose.msra.mxu0 0.0
    %2904 = vmatprep.subr.mxu0 0.0
    %2905 = vmatpush1.xpose.msra.mxu0 0.0
    %2906 = vmatprep.subr.mxu0 0.0
    %2907 = vmatpush1.xpose.msra.mxu0 0.0
    %2908 = vmatprep.subr.mxu0 0.0
    %2909 = vmatpush1.xpose.msra.mxu0 0.0
    %2910 = vmatprep.subr.mxu0 0.0
    %2911 = vmatpush1.xpose.msra.mxu0 0.0
    %2912 = vmatprep.subr.mxu0 0.0
    %2913 = vmatpush1.xpose.msra.mxu0 0.0
    %2914 = vmatprep.subr.mxu0 0.0
    %2915 = vmatpush1.xpose.msra.mxu0 0.0
    %2916 = vmatprep.subr.mxu0 0.0
    %2917 = vmatpush1.xpose.msra.mxu0 0.0
    %2918 = vmatprep.subr.mxu0 0.0
    %2919 = vmatpush1.xpose.msra.mxu0 0.0
    %2920 = vmatprep.subr.mxu0 0.0
    %2921 = vmatpush1.xpose.msra.mxu0 0.0
    %2922 = vmatprep.subr.mxu0 0.0
    %2923 = vmatpush1.xpose.msra.mxu0 0.0
    %2924 = vmatprep.subr.mxu0 0.0
    %2925 = vmatpush1.xpose.msra.mxu0 0.0
    %2926 = vmatprep.subr.mxu0 0.0
    %2927 = vmatpush1.xpose.msra.mxu0 0.0
    %2928 = vmatprep.subr.mxu0 0.0
    %2929 = vmatpush1.xpose.msra.mxu0 0.0
    %2930 = vmatprep.subr.mxu0 0.0
    %2931 = vmatpush1.xpose.msra.mxu0 0.0
    %2932 = vmatprep.subr.mxu0 0.0
    %2933 = vmatpush1.xpose.msra.mxu0 0.0
    %2934 = vmatprep.subr.mxu0 0.0
    %2935 = vmatpush1.xpose.msra.mxu0 0.0
    %2936 = vmatprep.subr.mxu0 0.0
    %2937 = vmatpush1.xpose.msra.mxu0 0.0
    %2938 = vmatprep.subr.mxu0 0.0
    %2939 = vmatpush1.xpose.msra.mxu0 0.0
    %2940 = vmatprep.subr.mxu0 0.0
    %2941 = vmatpush1.xpose.msra.mxu0 0.0
    %2942 = vmatprep.subr.mxu0 0.0
    %2943 = vmatpush1.xpose.msra.mxu0 0.0
    %2944 = vmatprep.subr.mxu0 0.0
    %2945 = vmatpush1.xpose.msra.mxu0 0.0
    %2946 = vmatprep.subr.mxu0 0.0
    %2947 = vmatpush1.xpose.msra.mxu0 0.0
    %2948 = vmatprep.subr.mxu0 0.0
    %2949 = vmatpush1.xpose.msra.mxu0 0.0
    %2950 = vmatprep.subr.mxu0 0.0
    %2951 = vmatpush1.xpose.msra.mxu0 0.0
    %2952 = vmatprep.subr.mxu0 0.0
    %2953 = vmatpush1.xpose.msra.mxu0 0.0
    %2954 = vmatprep.subr.mxu0 0.0
    %2955 = vmatpush1.xpose.msra.mxu0 0.0
    %2956 = vmatprep.subr.mxu0 0.0
    %2957 = vmatpush1.xpose.msra.mxu0 0.0
    %2958 = vmatprep.subr.mxu0 0.0
    %2959 = vmatpush1.xpose.msra.mxu0 0.0
    %2960 = vmatprep.mubr.f32.mxu0 0.0
    %2961 = vmatmul.mubr.f32.gmra.mrb[0].mxu0 %v2892
    %v2962 = vpop.f32.mrb[0].mxu0
    %v2963 = vadd.f32 0.0, %v2962
    %v2964 = vpop.f32.mrb[0].mxu0
    %2965 = vdwg.mxu0
    %v2966 = vsel %vm1930, %v2885, -inf
    %2967 = vmax.xlane.f32.xlu0 %v2966
    %v2968 = vpop.xlane.xlu0 %2967
    %v2969 = vsel %vm1930, %v2963, -inf
    %2970 = vmax.xlane.f32.xlu0 %v2969
    %v2971 = vpop.xlane.xlu0 %2970
    %v2972 = vsub.f32 %v2885, %v2968
    %v2973 = vsub.f32 %v2963, %v2971
    %v2974 = vmul.f32 %v2972, 1.442695
    %v2975 = vpow.pop %v2974
    %v2976 = vmul.f32 %v2973, 1.442695
    %v2977 = vpow.pop %v2976
    %v2978 = vsel %vm1930, %v2975, 0.0
    %2979 = vadd.xlane.f32.xlu0 %v2978
    %v2980 = vpop.xlane.xlu0 %2979
    %v2981 = vsel %vm1930, %v2977, 0.0
    %2982 = vadd.xlane.f32.xlu0 %v2981
    %v2983 = vpop.xlane.xlu0 %2982
    %v2984 = vrcp.pop %v2980
    %v2985 = vmul.f32 %v2975, %v2984
    %v2986 = vrcp.pop %v2983
    %v2987 = vmul.f32 %v2977, %v2986
    %v2988 = vsel %vm1930, %v2985, 0.0
    %v2989 = vrot.slane %v2988, 4
    %v2990 = vadd.f32 %v2988, %v2989
    %v2991 = vrot.slane %v2990, 2
    %v2992 = vadd.f32 %v2990, %v2991
    %v2993 = vrot.slane %v2992, 1
    %v2994 = vadd.f32 %v2992, %v2993
    %v2995 = vsel %vm1930, %v2987, 0.0
    %v2996 = vrot.slane %v2995, 4
    %v2997 = vadd.f32 %v2995, %v2996
    %v2998 = vrot.slane %v2997, 2
    %v2999 = vadd.f32 %v2997, %v2998
    %v3000 = vrot.slane %v2999, 1
    %v3001 = vadd.f32 %v2999, %v3000
    %v3002 = vmul.f32 %v2994, %v1967
    %v3003 = vmul.f32 %v3001, %v1967
    %3004 = vrot.lane.b32.xlu0 %v1769, 116
    %v3005 = vpop.permute.xlu0 %3004
    %v3008 = vsel %vm1930, %v3002, 0
    %3010 = vmatprep.subr.mxu0 0.0
    %3011 = vmatpush1.msra.mxu0 %v3005
    %3012 = vmatprep.subr.mxu0 0.0
    %3013 = vmatpush1.msra.mxu0 0.0
    %3014 = vmatprep.subr.mxu0 0.0
    %3015 = vmatpush1.msra.mxu0 0.0
    %3016 = vmatprep.subr.mxu0 0.0
    %3017 = vmatpush1.msra.mxu0 0.0
    %3018 = vmatprep.subr.mxu0 0.0
    %3019 = vmatpush1.msra.mxu0 0.0
    %3020 = vmatprep.subr.mxu0 0.0
    %3021 = vmatpush1.msra.mxu0 0.0
    %3022 = vmatprep.subr.mxu0 0.0
    %3023 = vmatpush1.msra.mxu0 0.0
    %3024 = vmatprep.subr.mxu0 0.0
    %3025 = vmatpush1.msra.mxu0 0.0
    %3026 = vmatprep.subr.mxu0 0.0
    %3027 = vmatpush1.msra.mxu0 0.0
    %3028 = vmatprep.subr.mxu0 0.0
    %3029 = vmatpush1.msra.mxu0 0.0
    %3030 = vmatprep.subr.mxu0 0.0
    %3031 = vmatpush1.msra.mxu0 0.0
    %3032 = vmatprep.subr.mxu0 0.0
    %3033 = vmatpush1.msra.mxu0 0.0
    %3034 = vmatprep.subr.mxu0 0.0
    %3035 = vmatpush1.msra.mxu0 0.0
    %3036 = vmatprep.subr.mxu0 0.0
    %3037 = vmatpush1.msra.mxu0 0.0
    %3038 = vmatprep.subr.mxu0 0.0
    %3039 = vmatpush1.msra.mxu0 0.0
    %3040 = vmatprep.subr.mxu0 0.0
    %3041 = vmatpush1.msra.mxu0 0.0
    %3042 = vmatprep.subr.mxu0 0.0
    %3043 = vmatpush1.msra.mxu0 0.0
    %3044 = vmatprep.subr.mxu0 0.0
    %3045 = vmatpush1.msra.mxu0 0.0
    %3046 = vmatprep.subr.mxu0 0.0
    %3047 = vmatpush1.msra.mxu0 0.0
    %3048 = vmatprep.subr.mxu0 0.0
    %3049 = vmatpush1.msra.mxu0 0.0
    %3050 = vmatprep.subr.mxu0 0.0
    %3051 = vmatpush1.msra.mxu0 0.0
    %3052 = vmatprep.subr.mxu0 0.0
    %3053 = vmatpush1.msra.mxu0 0.0
    %3054 = vmatprep.subr.mxu0 0.0
    %3055 = vmatpush1.msra.mxu0 0.0
    %3056 = vmatprep.subr.mxu0 0.0
    %3057 = vmatpush1.msra.mxu0 0.0
    %3058 = vmatprep.subr.mxu0 0.0
    %3059 = vmatpush1.msra.mxu0 0.0
    %3060 = vmatprep.subr.mxu0 0.0
    %3061 = vmatpush1.msra.mxu0 0.0
    %3062 = vmatprep.subr.mxu0 0.0
    %3063 = vmatpush1.msra.mxu0 0.0
    %3064 = vmatprep.subr.mxu0 0.0
    %3065 = vmatpush1.msra.mxu0 0.0
    %3066 = vmatprep.subr.mxu0 0.0
    %3067 = vmatpush1.msra.mxu0 0.0
    %3068 = vmatprep.subr.mxu0 0.0
    %3069 = vmatpush1.msra.mxu0 0.0
    %3070 = vmatprep.subr.mxu0 0.0
    %3071 = vmatpush1.msra.mxu0 0.0
    %3072 = vmatprep.subr.mxu0 0.0
    %3073 = vmatpush1.msra.mxu0 0.0
    %3074 = vmatprep.mubr.f32.mxu0 0.0
    %3075 = vmatmul.mubr.f32.gmra.mrb[0].mxu0 %v3008
    %v3076 = vpop.f32.mrb[0].mxu0
    %v3077 = vadd.f32 0.0, %v3076
    %v3078 = vpop.f32.mrb[0].mxu0
    %3079 = vdwg.mxu0
    %3080 = vrot.lane.b32.xlu0 %v1774, 116
    %v3081 = vpop.permute.xlu0 %3080
    %v3084 = vsel %vm1930, %v3003, 0
    %3086 = vmatprep.subr.mxu0 0.0
    %3087 = vmatpush1.msra.mxu0 %v3081
    %3088 = vmatprep.subr.mxu0 0.0
    %3089 = vmatpush1.msra.mxu0 0.0
    %3090 = vmatprep.subr.mxu0 0.0
    %3091 = vmatpush1.msra.mxu0 0.0
    %3092 = vmatprep.subr.mxu0 0.0
    %3093 = vmatpush1.msra.mxu0 0.0
    %3094 = vmatprep.subr.mxu0 0.0
    %3095 = vmatpush1.msra.mxu0 0.0
    %3096 = vmatprep.subr.mxu0 0.0
    %3097 = vmatpush1.msra.mxu0 0.0
    %3098 = vmatprep.subr.mxu0 0.0
    %3099 = vmatpush1.msra.mxu0 0.0
    %3100 = vmatprep.subr.mxu0 0.0
    %3101 = vmatpush1.msra.mxu0 0.0
    %3102 = vmatprep.subr.mxu0 0.0
    %3103 = vmatpush1.msra.mxu0 0.0
    %3104 = vmatprep.subr.mxu0 0.0
    %3105 = vmatpush1.msra.mxu0 0.0
    %3106 = vmatprep.subr.mxu0 0.0
    %3107 = vmatpush1.msra.mxu0 0.0
    %3108 = vmatprep.subr.mxu0 0.0
    %3109 = vmatpush1.msra.mxu0 0.0
    %3110 = vmatprep.subr.mxu0 0.0
    %3111 = vmatpush1.msra.mxu0 0.0
    %3112 = vmatprep.subr.mxu0 0.0
    %3113 = vmatpush1.msra.mxu0 0.0
    %3114 = vmatprep.subr.mxu0 0.0
    %3115 = vmatpush1.msra.mxu0 0.0
    %3116 = vmatprep.subr.mxu0 0.0
    %3117 = vmatpush1.msra.mxu0 0.0
    %3118 = vmatprep.subr.mxu0 0.0
    %3119 = vmatpush1.msra.mxu0 0.0
    %3120 = vmatprep.subr.mxu0 0.0
    %3121 = vmatpush1.msra.mxu0 0.0
    %3122 = vmatprep.subr.mxu0 0.0
    %3123 = vmatpush1.msra.mxu0 0.0
    %3124 = vmatprep.subr.mxu0 0.0
    %3125 = vmatpush1.msra.mxu0 0.0
    %3126 = vmatprep.subr.mxu0 0.0
    %3127 = vmatpush1.msra.mxu0 0.0
    %3128 = vmatprep.subr.mxu0 0.0
    %3129 = vmatpush1.msra.mxu0 0.0
    %3130 = vmatprep.subr.mxu0 0.0
    %3131 = vmatpush1.msra.mxu0 0.0
    %3132 = vmatprep.subr.mxu0 0.0
    %3133 = vmatpush1.msra.mxu0 0.0
    %3134 = vmatprep.subr.mxu0 0.0
    %3135 = vmatpush1.msra.mxu0 0.0
    %3136 = vmatprep.subr.mxu0 0.0
    %3137 = vmatpush1.msra.mxu0 0.0
    %3138 = vmatprep.subr.mxu0 0.0
    %3139 = vmatpush1.msra.mxu0 0.0
    %3140 = vmatprep.subr.mxu0 0.0
    %3141 = vmatpush1.msra.mxu0 0.0
    %3142 = vmatprep.subr.mxu0 0.0
    %3143 = vmatpush1.msra.mxu0 0.0
    %3144 = vmatprep.subr.mxu0 0.0
    %3145 = vmatpush1.msra.mxu0 0.0
    %3146 = vmatprep.subr.mxu0 0.0
    %3147 = vmatpush1.msra.mxu0 0.0
    %3148 = vmatprep.subr.mxu0 0.0
    %3149 = vmatpush1.msra.mxu0 0.0
    %3150 = vmatprep.mubr.f32.mxu0 0.0
    %3151 = vmatmul.mubr.f32.gmra.mrb[0].mxu0 %v3084
    %v3152 = vpop.f32.mrb[0].mxu0
    %v3153 = vadd.f32 0.0, %v3152
    %v3154 = vpop.f32.mrb[0].mxu0
    %3155 = vdwg.mxu0
    %3156 = vrot.lane.b32.xlu0 %v1603, 112
    %v3157 = vpop.permute.xlu0 %3156
    %3158 = vrot.lane.b32.xlu0 %v1683, 112
    %v3159 = vpop.permute.xlu0 %3158
    %v3160 = vsel %vm1777, %v3157, 0
    %v3162 = vsel %vm1777, %v3159, 0
    %3164 = vmatprep.subr.mxu0 0.0
    %3165 = vmatpush1.xpose.msra.mxu0 %v3162
    %3166 = vmatprep.subr.mxu0 0.0
    %3167 = vmatpush1.xpose.msra.mxu0 0.0
    %3168 = vmatprep.subr.mxu0 0.0
    %3169 = vmatpush1.xpose.msra.mxu0 0.0
    %3170 = vmatprep.subr.mxu0 0.0
    %3171 = vmatpush1.xpose.msra.mxu0 0.0
    %3172 = vmatprep.subr.mxu0 0.0
    %3173 = vmatpush1.xpose.msra.mxu0 0.0
    %3174 = vmatprep.subr.mxu0 0.0
    %3175 = vmatpush1.xpose.msra.mxu0 0.0
    %3176 = vmatprep.subr.mxu0 0.0
    %3177 = vmatpush1.xpose.msra.mxu0 0.0
    %3178 = vmatprep.subr.mxu0 0.0
    %3179 = vmatpush1.xpose.msra.mxu0 0.0
    %3180 = vmatprep.subr.mxu0 0.0
    %3181 = vmatpush1.xpose.msra.mxu0 0.0
    %3182 = vmatprep.subr.mxu0 0.0
    %3183 = vmatpush1.xpose.msra.mxu0 0.0
    %3184 = vmatprep.subr.mxu0 0.0
    %3185 = vmatpush1.xpose.msra.mxu0 0.0
    %3186 = vmatprep.subr.mxu0 0.0
    %3187 = vmatpush1.xpose.msra.mxu0 0.0
    %3188 = vmatprep.subr.mxu0 0.0
    %3189 = vmatpush1.xpose.msra.mxu0 0.0
    %3190 = vmatprep.subr.mxu0 0.0
    %3191 = vmatpush1.xpose.msra.mxu0 0.0
    %3192 = vmatprep.subr.mxu0 0.0
    %3193 = vmatpush1.xpose.msra.mxu0 0.0
    %3194 = vmatprep.subr.mxu0 0.0
    %3195 = vmatpush1.xpose.msra.mxu0 0.0
    %3196 = vmatprep.subr.mxu0 0.0
    %3197 = vmatpush1.xpose.msra.mxu0 0.0
    %3198 = vmatprep.subr.mxu0 0.0
    %3199 = vmatpush1.xpose.msra.mxu0 0.0
    %3200 = vmatprep.subr.mxu0 0.0
    %3201 = vmatpush1.xpose.msra.mxu0 0.0
    %3202 = vmatprep.subr.mxu0 0.0
    %3203 = vmatpush1.xpose.msra.mxu0 0.0
    %3204 = vmatprep.subr.mxu0 0.0
    %3205 = vmatpush1.xpose.msra.mxu0 0.0
    %3206 = vmatprep.subr.mxu0 0.0
    %3207 = vmatpush1.xpose.msra.mxu0 0.0
    %3208 = vmatprep.subr.mxu0 0.0
    %3209 = vmatpush1.xpose.msra.mxu0 0.0
    %3210 = vmatprep.subr.mxu0 0.0
    %3211 = vmatpush1.xpose.msra.mxu0 0.0
    %3212 = vmatprep.subr.mxu0 0.0
    %3213 = vmatpush1.xpose.msra.mxu0 0.0
    %3214 = vmatprep.subr.mxu0 0.0
    %3215 = vmatpush1.xpose.msra.mxu0 0.0
    %3216 = vmatprep.subr.mxu0 0.0
    %3217 = vmatpush1.xpose.msra.mxu0 0.0
    %3218 = vmatprep.subr.mxu0 0.0
    %3219 = vmatpush1.xpose.msra.mxu0 0.0
    %3220 = vmatprep.subr.mxu0 0.0
    %3221 = vmatpush1.xpose.msra.mxu0 0.0
    %3222 = vmatprep.subr.mxu0 0.0
    %3223 = vmatpush1.xpose.msra.mxu0 0.0
    %3224 = vmatprep.subr.mxu0 0.0
    %3225 = vmatpush1.xpose.msra.mxu0 0.0
    %3226 = vmatprep.subr.mxu0 0.0
    %3227 = vmatpush1.xpose.msra.mxu0 0.0
    %3228 = vmatprep.mubr.f32.mxu0 0.0
    %3229 = vmatmul.mubr.f32.gmra.mrb[0].mxu0 %v3160
    %v3230 = vpop.f32.mrb[0].mxu0
    %v3231 = vadd.f32 0.0, %v3230
    %v3232 = vpop.f32.mrb[0].mxu0
    %3233 = vdwg.mxu0
    %3234 = vrot.lane.b32.xlu0 %v1604, 112
    %v3235 = vpop.permute.xlu0 %3234
    %3236 = vrot.lane.b32.xlu0 %v1688, 112
    %v3237 = vpop.permute.xlu0 %3236
    %v3238 = vsel %vm1777, %v3235, 0
    %v3240 = vsel %vm1777, %v3237, 0
    %3242 = vmatprep.subr.mxu0 0.0
    %3243 = vmatpush1.xpose.msra.mxu0 %v3240
    %3244 = vmatprep.subr.mxu0 0.0
    %3245 = vmatpush1.xpose.msra.mxu0 0.0
    %3246 = vmatprep.subr.mxu0 0.0
    %3247 = vmatpush1.xpose.msra.mxu0 0.0
    %3248 = vmatprep.subr.mxu0 0.0
    %3249 = vmatpush1.xpose.msra.mxu0 0.0
    %3250 = vmatprep.subr.mxu0 0.0
    %3251 = vmatpush1.xpose.msra.mxu0 0.0
    %3252 = vmatprep.subr.mxu0 0.0
    %3253 = vmatpush1.xpose.msra.mxu0 0.0
    %3254 = vmatprep.subr.mxu0 0.0
    %3255 = vmatpush1.xpose.msra.mxu0 0.0
    %3256 = vmatprep.subr.mxu0 0.0
    %3257 = vmatpush1.xpose.msra.mxu0 0.0
    %3258 = vmatprep.subr.mxu0 0.0
    %3259 = vmatpush1.xpose.msra.mxu0 0.0
    %3260 = vmatprep.subr.mxu0 0.0
    %3261 = vmatpush1.xpose.msra.mxu0 0.0
    %3262 = vmatprep.subr.mxu0 0.0
    %3263 = vmatpush1.xpose.msra.mxu0 0.0
    %3264 = vmatprep.subr.mxu0 0.0
    %3265 = vmatpush1.xpose.msra.mxu0 0.0
    %3266 = vmatprep.subr.mxu0 0.0
    %3267 = vmatpush1.xpose.msra.mxu0 0.0
    %3268 = vmatprep.subr.mxu0 0.0
    %3269 = vmatpush1.xpose.msra.mxu0 0.0
    %3270 = vmatprep.subr.mxu0 0.0
    %3271 = vmatpush1.xpose.msra.mxu0 0.0
    %3272 = vmatprep.subr.mxu0 0.0
    %3273 = vmatpush1.xpose.msra.mxu0 0.0
    %3274 = vmatprep.subr.mxu0 0.0
    %3275 = vmatpush1.xpose.msra.mxu0 0.0
    %3276 = vmatprep.subr.mxu0 0.0
    %3277 = vmatpush1.xpose.msra.mxu0 0.0
    %3278 = vmatprep.subr.mxu0 0.0
    %3279 = vmatpush1.xpose.msra.mxu0 0.0
    %3280 = vmatprep.subr.mxu0 0.0
    %3281 = vmatpush1.xpose.msra.mxu0 0.0
    %3282 = vmatprep.subr.mxu0 0.0
    %3283 = vmatpush1.xpose.msra.mxu0 0.0
    %3284 = vmatprep.subr.mxu0 0.0
    %3285 = vmatpush1.xpose.msra.mxu0 0.0
    %3286 = vmatprep.subr.mxu0 0.0
    %3287 = vmatpush1.xpose.msra.mxu0 0.0
    %3288 = vmatprep.subr.mxu0 0.0
    %3289 = vmatpush1.xpose.msra.mxu0 0.0
    %3290 = vmatprep.subr.mxu0 0.0
    %3291 = vmatpush1.xpose.msra.mxu0 0.0
    %3292 = vmatprep.subr.mxu0 0.0
    %3293 = vmatpush1.xpose.msra.mxu0 0.0
    %3294 = vmatprep.subr.mxu0 0.0
    %3295 = vmatpush1.xpose.msra.mxu0 0.0
    %3296 = vmatprep.subr.mxu0 0.0
    %3297 = vmatpush1.xpose.msra.mxu0 0.0
    %3298 = vmatprep.subr.mxu0 0.0
    %3299 = vmatpush1.xpose.msra.mxu0 0.0
    %3300 = vmatprep.subr.mxu0 0.0
    %3301 = vmatpush1.xpose.msra.mxu0 0.0
    %3302 = vmatprep.subr.mxu0 0.0
    %3303 = vmatpush1.xpose.msra.mxu0 0.0
    %3304 = vmatprep.subr.mxu0 0.0
    %3305 = vmatpush1.xpose.msra.mxu0 0.0
    %3306 = vmatprep.mubr.f32.mxu0 0.0
    %3307 = vmatmul.mubr.f32.gmra.mrb[0].mxu0 %v3238
    %v3308 = vpop.f32.mrb[0].mxu0
    %v3309 = vadd.f32 0.0, %v3308
    %v3310 = vpop.f32.mrb[0].mxu0
    %3311 = vdwg.mxu0
    %v3312 = vsel %vm1930, %v3231, -inf
    %3313 = vmax.xlane.f32.xlu0 %v3312
    %v3314 = vpop.xlane.xlu0 %3313
    %v3315 = vsel %vm1930, %v3309, -inf
    %3316 = vmax.xlane.f32.xlu0 %v3315
    %v3317 = vpop.xlane.xlu0 %3316
    %v3318 = vsub.f32 %v3231, %v3314
    %v3319 = vsub.f32 %v3309, %v3317
    %v3320 = vmul.f32 %v3318, 1.442695
    %v3321 = vpow.pop %v3320
    %v3322 = vmul.f32 %v3319, 1.442695
    %v3323 = vpow.pop %v3322
    %v3324 = vsel %vm1930, %v3321, 0.0
    %3325 = vadd.xlane.f32.xlu0 %v3324
    %v3326 = vpop.xlane.xlu0 %3325
    %v3327 = vsel %vm1930, %v3323, 0.0
    %3328 = vadd.xlane.f32.xlu0 %v3327
    %v3329 = vpop.xlane.xlu0 %3328
    %v3330 = vrcp.pop %v3326
    %v3331 = vmul.f32 %v3321, %v3330
    %v3332 = vrcp.pop %v3329
    %v3333 = vmul.f32 %v3323, %v3332
    %v3334 = vsel %vm1930, %v3331, 0.0
    %v3335 = vrot.slane %v3334, 4
    %v3336 = vadd.f32 %v3334, %v3335
    %v3337 = vrot.slane %v3336, 2
    %v3338 = vadd.f32 %v3336, %v3337
    %v3339 = vrot.slane %v3338, 1
    %v3340 = vadd.f32 %v3338, %v3339
    %v3341 = vsel %vm1930, %v3333, 0.0
    %v3342 = vrot.slane %v3341, 4
    %v3343 = vadd.f32 %v3341, %v3342
    %v3344 = vrot.slane %v3343, 2
    %v3345 = vadd.f32 %v3343, %v3344
    %v3346 = vrot.slane %v3345, 1
    %v3347 = vadd.f32 %v3345, %v3346
    %v3348 = vmul.f32 %v3340, %v1967
    %v3349 = vmul.f32 %v3347, %v1967
    %3350 = vrot.lane.b32.xlu0 %v1769, 112
    %v3351 = vpop.permute.xlu0 %3350
    %v3354 = vsel %vm1930, %v3348, 0
    %3356 = vmatprep.subr.mxu0 0.0
    %3357 = vmatpush1.msra.mxu0 %v3351
    %3358 = vmatprep.subr.mxu0 0.0
    %3359 = vmatpush1.msra.mxu0 0.0
    %3360 = vmatprep.subr.mxu0 0.0
    %3361 = vmatpush1.msra.mxu0 0.0
    %3362 = vmatprep.subr.mxu0 0.0
    %3363 = vmatpush1.msra.mxu0 0.0
    %3364 = vmatprep.subr.mxu0 0.0
    %3365 = vmatpush1.msra.mxu0 0.0
    %3366 = vmatprep.subr.mxu0 0.0
    %3367 = vmatpush1.msra.mxu0 0.0
    %3368 = vmatprep.subr.mxu0 0.0
    %3369 = vmatpush1.msra.mxu0 0.0
    %3370 = vmatprep.subr.mxu0 0.0
    %3371 = vmatpush1.msra.mxu0 0.0
    %3372 = vmatprep.subr.mxu0 0.0
    %3373 = vmatpush1.msra.mxu0 0.0
    %3374 = vmatprep.subr.mxu0 0.0
    %3375 = vmatpush1.msra.mxu0 0.0
    %3376 = vmatprep.subr.mxu0 0.0
    %3377 = vmatpush1.msra.mxu0 0.0
    %3378 = vmatprep.subr.mxu0 0.0
    %3379 = vmatpush1.msra.mxu0 0.0
    %3380 = vmatprep.subr.mxu0 0.0
    %3381 = vmatpush1.msra.mxu0 0.0
    %3382 = vmatprep.subr.mxu0 0.0
    %3383 = vmatpush1.msra.mxu0 0.0
    %3384 = vmatprep.subr.mxu0 0.0
    %3385 = vmatpush1.msra.mxu0 0.0
    %3386 = vmatprep.subr.mxu0 0.0
    %3387 = vmatpush1.msra.mxu0 0.0
    %3388 = vmatprep.subr.mxu0 0.0
    %3389 = vmatpush1.msra.mxu0 0.0
    %3390 = vmatprep.subr.mxu0 0.0
    %3391 = vmatpush1.msra.mxu0 0.0
    %3392 = vmatprep.subr.mxu0 0.0
    %3393 = vmatpush1.msra.mxu0 0.0
    %3394 = vmatprep.subr.mxu0 0.0
    %3395 = vmatpush1.msra.mxu0 0.0
    %3396 = vmatprep.subr.mxu0 0.0
    %3397 = vmatpush1.msra.mxu0 0.0
    %3398 = vmatprep.subr.mxu0 0.0
    %3399 = vmatpush1.msra.mxu0 0.0
    %3400 = vmatprep.subr.mxu0 0.0
    %3401 = vmatpush1.msra.mxu0 0.0
    %3402 = vmatprep.subr.mxu0 0.0
    %3403 = vmatpush1.msra.mxu0 0.0
    %3404 = vmatprep.subr.mxu0 0.0
    %3405 = vmatpush1.msra.mxu0 0.0
    %3406 = vmatprep.subr.mxu0 0.0
    %3407 = vmatpush1.msra.mxu0 0.0
    %3408 = vmatprep.subr.mxu0 0.0
    %3409 = vmatpush1.msra.mxu0 0.0
    %3410 = vmatprep.subr.mxu0 0.0
    %3411 = vmatpush1.msra.mxu0 0.0
    %3412 = vmatprep.subr.mxu0 0.0
    %3413 = vmatpush1.msra.mxu0 0.0
    %3414 = vmatprep.subr.mxu0 0.0
    %3415 = vmatpush1.msra.mxu0 0.0
    %3416 = vmatprep.subr.mxu0 0.0
    %3417 = vmatpush1.msra.mxu0 0.0
    %3418 = vmatprep.subr.mxu0 0.0
    %3419 = vmatpush1.msra.mxu0 0.0
    %3420 = vmatprep.mubr.f32.mxu0 0.0
    %3421 = vmatmul.mubr.f32.gmra.mrb[0].mxu0 %v3354
    %v3422 = vpop.f32.mrb[0].mxu0
    %v3423 = vadd.f32 0.0, %v3422
    %v3424 = vpop.f32.mrb[0].mxu0
    %3425 = vdwg.mxu0
    %3426 = vrot.lane.b32.xlu0 %v1774, 112
    %v3427 = vpop.permute.xlu0 %3426
    %v3430 = vsel %vm1930, %v3349, 0
    %3432 = vmatprep.subr.mxu0 0.0
    %3433 = vmatpush1.msra.mxu0 %v3427
    %3434 = vmatprep.subr.mxu0 0.0
    %3435 = vmatpush1.msra.mxu0 0.0
    %3436 = vmatprep.subr.mxu0 0.0
    %3437 = vmatpush1.msra.mxu0 0.0
    %3438 = vmatprep.subr.mxu0 0.0
    %3439 = vmatpush1.msra.mxu0 0.0
    %3440 = vmatprep.subr.mxu0 0.0
    %3441 = vmatpush1.msra.mxu0 0.0
    %3442 = vmatprep.subr.mxu0 0.0
    %3443 = vmatpush1.msra.mxu0 0.0
    %3444 = vmatprep.subr.mxu0 0.0
    %3445 = vmatpush1.msra.mxu0 0.0
    %3446 = vmatprep.subr.mxu0 0.0
    %3447 = vmatpush1.msra.mxu0 0.0
    %3448 = vmatprep.subr.mxu0 0.0
    %3449 = vmatpush1.msra.mxu0 0.0
    %3450 = vmatprep.subr.mxu0 0.0
    %3451 = vmatpush1.msra.mxu0 0.0
    %3452 = vmatprep.subr.mxu0 0.0
    %3453 = vmatpush1.msra.mxu0 0.0
    %3454 = vmatprep.subr.mxu0 0.0
    %3455 = vmatpush1.msra.mxu0 0.0
    %3456 = vmatprep.subr.mxu0 0.0
    %3457 = vmatpush1.msra.mxu0 0.0
    %3458 = vmatprep.subr.mxu0 0.0
    %3459 = vmatpush1.msra.mxu0 0.0
    %3460 = vmatprep.subr.mxu0 0.0
    %3461 = vmatpush1.msra.mxu0 0.0
    %3462 = vmatprep.subr.mxu0 0.0
    %3463 = vmatpush1.msra.mxu0 0.0
    %3464 = vmatprep.subr.mxu0 0.0
    %3465 = vmatpush1.msra.mxu0 0.0
    %3466 = vmatprep.subr.mxu0 0.0
    %3467 = vmatpush1.msra.mxu0 0.0
    %3468 = vmatprep.subr.mxu0 0.0
    %3469 = vmatpush1.msra.mxu0 0.0
    %3470 = vmatprep.subr.mxu0 0.0
    %3471 = vmatpush1.msra.mxu0 0.0
    %3472 = vmatprep.subr.mxu0 0.0
    %3473 = vmatpush1.msra.mxu0 0.0
    %3474 = vmatprep.subr.mxu0 0.0
    %3475 = vmatpush1.msra.mxu0 0.0
    %3476 = vmatprep.subr.mxu0 0.0
    %3477 = vmatpush1.msra.mxu0 0.0
    %3478 = vmatprep.subr.mxu0 0.0
    %3479 = vmatpush1.msra.mxu0 0.0
    %3480 = vmatprep.subr.mxu0 0.0
    %3481 = vmatpush1.msra.mxu0 0.0
    %3482 = vmatprep.subr.mxu0 0.0
    %3483 = vmatpush1.msra.mxu0 0.0
    %3484 = vmatprep.subr.mxu0 0.0
    %3485 = vmatpush1.msra.mxu0 0.0
    %3486 = vmatprep.subr.mxu0 0.0
    %3487 = vmatpush1.msra.mxu0 0.0
    %3488 = vmatprep.subr.mxu0 0.0
    %3489 = vmatpush1.msra.mxu0 0.0
    %3490 = vmatprep.subr.mxu0 0.0
    %3491 = vmatpush1.msra.mxu0 0.0
    %3492 = vmatprep.subr.mxu0 0.0
    %3493 = vmatpush1.msra.mxu0 0.0
    %3494 = vmatprep.subr.mxu0 0.0
    %3495 = vmatpush1.msra.mxu0 0.0
    %3496 = vmatprep.mubr.f32.mxu0 0.0
    %3497 = vmatmul.mubr.f32.gmra.mrb[0].mxu0 %v3430
    %v3498 = vpop.f32.mrb[0].mxu0
    %v3499 = vadd.f32 0.0, %v3498
    %v3500 = vpop.f32.mrb[0].mxu0
    %3501 = vdwg.mxu0
    %3502 = vrot.lane.b32.xlu0 %v1603, 108
    %v3503 = vpop.permute.xlu0 %3502
    %3504 = vrot.lane.b32.xlu0 %v1683, 108
    %v3505 = vpop.permute.xlu0 %3504
    %v3506 = vsel %vm1777, %v3503, 0
    %v3508 = vsel %vm1777, %v3505, 0
    %3510 = vmatprep.subr.mxu0 0.0
    %3511 = vmatpush1.xpose.msra.mxu0 %v3508
    %3512 = vmatprep.subr.mxu0 0.0
    %3513 = vmatpush1.xpose.msra.mxu0 0.0
    %3514 = vmatprep.subr.mxu0 0.0
    %3515 = vmatpush1.xpose.msra.mxu0 0.0
    %3516 = vmatprep.subr.mxu0 0.0
    %3517 = vmatpush1.xpose.msra.mxu0 0.0
    %3518 = vmatprep.subr.mxu0 0.0
    %3519 = vmatpush1.xpose.msra.mxu0 0.0
    %3520 = vmatprep.subr.mxu0 0.0
    %3521 = vmatpush1.xpose.msra.mxu0 0.0
    %3522 = vmatprep.subr.mxu0 0.0
    %3523 = vmatpush1.xpose.msra.mxu0 0.0
    %3524 = vmatprep.subr.mxu0 0.0
    %3525 = vmatpush1.xpose.msra.mxu0 0.0
    %3526 = vmatprep.subr.mxu0 0.0
    %3527 = vmatpush1.xpose.msra.mxu0 0.0
    %3528 = vmatprep.subr.mxu0 0.0
    %3529 = vmatpush1.xpose.msra.mxu0 0.0
    %3530 = vmatprep.subr.mxu0 0.0
    %3531 = vmatpush1.xpose.msra.mxu0 0.0
    %3532 = vmatprep.subr.mxu0 0.0
    %3533 = vmatpush1.xpose.msra.mxu0 0.0
    %3534 = vmatprep.subr.mxu0 0.0
    %3535 = vmatpush1.xpose.msra.mxu0 0.0
    %3536 = vmatprep.subr.mxu0 0.0
    %3537 = vmatpush1.xpose.msra.mxu0 0.0
    %3538 = vmatprep.subr.mxu0 0.0
    %3539 = vmatpush1.xpose.msra.mxu0 0.0
    %3540 = vmatprep.subr.mxu0 0.0
    %3541 = vmatpush1.xpose.msra.mxu0 0.0
    %3542 = vmatprep.subr.mxu0 0.0
    %3543 = vmatpush1.xpose.msra.mxu0 0.0
    %3544 = vmatprep.subr.mxu0 0.0
    %3545 = vmatpush1.xpose.msra.mxu0 0.0
    %3546 = vmatprep.subr.mxu0 0.0
    %3547 = vmatpush1.xpose.msra.mxu0 0.0
    %3548 = vmatprep.subr.mxu0 0.0
    %3549 = vmatpush1.xpose.msra.mxu0 0.0
    %3550 = vmatprep.subr.mxu0 0.0
    %3551 = vmatpush1.xpose.msra.mxu0 0.0
    %3552 = vmatprep.subr.mxu0 0.0
    %3553 = vmatpush1.xpose.msra.mxu0 0.0
    %3554 = vmatprep.subr.mxu0 0.0
    %3555 = vmatpush1.xpose.msra.mxu0 0.0
    %3556 = vmatprep.subr.mxu0 0.0
    %3557 = vmatpush1.xpose.msra.mxu0 0.0
    %3558 = vmatprep.subr.mxu0 0.0
    %3559 = vmatpush1.xpose.msra.mxu0 0.0
    %3560 = vmatprep.subr.mxu0 0.0
    %3561 = vmatpush1.xpose.msra.mxu0 0.0
    %3562 = vmatprep.subr.mxu0 0.0
    %3563 = vmatpush1.xpose.msra.mxu0 0.0
    %3564 = vmatprep.subr.mxu0 0.0
    %3565 = vmatpush1.xpose.msra.mxu0 0.0
    %3566 = vmatprep.subr.mxu0 0.0
    %3567 = vmatpush1.xpose.msra.mxu0 0.0
    %3568 = vmatprep.subr.mxu0 0.0
    %3569 = vmatpush1.xpose.msra.mxu0 0.0
    %3570 = vmatprep.subr.mxu0 0.0
    %3571 = vmatpush1.xpose.msra.mxu0 0.0
    %3572 = vmatprep.subr.mxu0 0.0
    %3573 = vmatpush1.xpose.msra.mxu0 0.0
    %3574 = vmatprep.mubr.f32.mxu0 0.0
    %3575 = vmatmul.mubr.f32.gmra.mrb[0].mxu0 %v3506
    %v3576 = vpop.f32.mrb[0].mxu0
    %v3577 = vadd.f32 0.0, %v3576
    %v3578 = vpop.f32.mrb[0].mxu0
    %3579 = vdwg.mxu0
    %3580 = vrot.lane.b32.xlu0 %v1604, 108
    %v3581 = vpop.permute.xlu0 %3580
    %3582 = vrot.lane.b32.xlu0 %v1688, 108
    %v3583 = vpop.permute.xlu0 %3582
    %v3584 = vsel %vm1777, %v3581, 0
    %v3586 = vsel %vm1777, %v3583, 0
    %3588 = vmatprep.subr.mxu0 0.0
    %3589 = vmatpush1.xpose.msra.mxu0 %v3586
    %3590 = vmatprep.subr.mxu0 0.0
    %3591 = vmatpush1.xpose.msra.mxu0 0.0
    %3592 = vmatprep.subr.mxu0 0.0
    %3593 = vmatpush1.xpose.msra.mxu0 0.0
    %3594 = vmatprep.subr.mxu0 0.0
    %3595 = vmatpush1.xpose.msra.mxu0 0.0
    %3596 = vmatprep.subr.mxu0 0.0
    %3597 = vmatpush1.xpose.msra.mxu0 0.0
    %3598 = vmatprep.subr.mxu0 0.0
    %3599 = vmatpush1.xpose.msra.mxu0 0.0
    %3600 = vmatprep.subr.mxu0 0.0
    %3601 = vmatpush1.xpose.msra.mxu0 0.0
    %3602 = vmatprep.subr.mxu0 0.0
    %3603 = vmatpush1.xpose.msra.mxu0 0.0
    %3604 = vmatprep.subr.mxu0 0.0
    %3605 = vmatpush1.xpose.msra.mxu0 0.0
    %3606 = vmatprep.subr.mxu0 0.0
    %3607 = vmatpush1.xpose.msra.mxu0 0.0
    %3608 = vmatprep.subr.mxu0 0.0
    %3609 = vmatpush1.xpose.msra.mxu0 0.0
    %3610 = vmatprep.subr.mxu0 0.0
    %3611 = vmatpush1.xpose.msra.mxu0 0.0
    %3612 = vmatprep.subr.mxu0 0.0
    %3613 = vmatpush1.xpose.msra.mxu0 0.0
    %3614 = vmatprep.subr.mxu0 0.0
    %3615 = vmatpush1.xpose.msra.mxu0 0.0
    %3616 = vmatprep.subr.mxu0 0.0
    %3617 = vmatpush1.xpose.msra.mxu0 0.0
    %3618 = vmatprep.subr.mxu0 0.0
    %3619 = vmatpush1.xpose.msra.mxu0 0.0
    %3620 = vmatprep.subr.mxu0 0.0
    %3621 = vmatpush1.xpose.msra.mxu0 0.0
    %3622 = vmatprep.subr.mxu0 0.0
    %3623 = vmatpush1.xpose.msra.mxu0 0.0
    %3624 = vmatprep.subr.mxu0 0.0
    %3625 = vmatpush1.xpose.msra.mxu0 0.0
    %3626 = vmatprep.subr.mxu0 0.0
    %3627 = vmatpush1.xpose.msra.mxu0 0.0
    %3628 = vmatprep.subr.mxu0 0.0
    %3629 = vmatpush1.xpose.msra.mxu0 0.0
    %3630 = vmatprep.subr.mxu0 0.0
    %3631 = vmatpush1.xpose.msra.mxu0 0.0
    %3632 = vmatprep.subr.mxu0 0.0
    %3633 = vmatpush1.xpose.msra.mxu0 0.0
    %3634 = vmatprep.subr.mxu0 0.0
    %3635 = vmatpush1.xpose.msra.mxu0 0.0
    %3636 = vmatprep.subr.mxu0 0.0
    %3637 = vmatpush1.xpose.msra.mxu0 0.0
    %3638 = vmatprep.subr.mxu0 0.0
    %3639 = vmatpush1.xpose.msra.mxu0 0.0
    %3640 = vmatprep.subr.mxu0 0.0
    %3641 = vmatpush1.xpose.msra.mxu0 0.0
    %3642 = vmatprep.subr.mxu0 0.0
    %3643 = vmatpush1.xpose.msra.mxu0 0.0
    %3644 = vmatprep.subr.mxu0 0.0
    %3645 = vmatpush1.xpose.msra.mxu0 0.0
    %3646 = vmatprep.subr.mxu0 0.0
    %3647 = vmatpush1.xpose.msra.mxu0 0.0
    %3648 = vmatprep.subr.mxu0 0.0
    %3649 = vmatpush1.xpose.msra.mxu0 0.0
    %3650 = vmatprep.subr.mxu0 0.0
    %3651 = vmatpush1.xpose.msra.mxu0 0.0
    %3652 = vmatprep.mubr.f32.mxu0 0.0
    %3653 = vmatmul.mubr.f32.gmra.mrb[0].mxu0 %v3584
    %v3654 = vpop.f32.mrb[0].mxu0
    %v3655 = vadd.f32 0.0, %v3654
    %v3656 = vpop.f32.mrb[0].mxu0
    %3657 = vdwg.mxu0
    %v3658 = vsel %vm1930, %v3577, -inf
    %3659 = vmax.xlane.f32.xlu0 %v3658
    %v3660 = vpop.xlane.xlu0 %3659
    %v3661 = vsel %vm1930, %v3655, -inf
    %3662 = vmax.xlane.f32.xlu0 %v3661
    %v3663 = vpop.xlane.xlu0 %3662
    %v3664 = vsub.f32 %v3577, %v3660
    %v3665 = vsub.f32 %v3655, %v3663
    %v3666 = vmul.f32 %v3664, 1.442695
    %v3667 = vpow.pop %v3666
    %v3668 = vmul.f32 %v3665, 1.442695
    %v3669 = vpow.pop %v3668
    %v3670 = vsel %vm1930, %v3667, 0.0
    %3671 = vadd.xlane.f32.xlu0 %v3670
    %v3672 = vpop.xlane.xlu0 %3671
    %v3673 = vsel %vm1930, %v3669, 0.0
    %3674 = vadd.xlane.f32.xlu0 %v3673
    %v3675 = vpop.xlane.xlu0 %3674
    %v3676 = vrcp.pop %v3672
    %v3677 = vmul.f32 %v3667, %v3676
    %v3678 = vrcp.pop %v3675
    %v3679 = vmul.f32 %v3669, %v3678
    %v3680 = vsel %vm1930, %v3677, 0.0
    %v3681 = vrot.slane %v3680, 4
    %v3682 = vadd.f32 %v3680, %v3681
    %v3683 = vrot.slane %v3682, 2
    %v3684 = vadd.f32 %v3682, %v3683
    %v3685 = vrot.slane %v3684, 1
    %v3686 = vadd.f32 %v3684, %v3685
    %v3687 = vsel %vm1930, %v3679, 0.0
    %v3688 = vrot.slane %v3687, 4
    %v3689 = vadd.f32 %v3687, %v3688
    %v3690 = vrot.slane %v3689, 2
    %v3691 = vadd.f32 %v3689, %v3690
    %v3692 = vrot.slane %v3691, 1
    %v3693 = vadd.f32 %v3691, %v3692
    %v3694 = vmul.f32 %v3686, %v1967
    %v3695 = vmul.f32 %v3693, %v1967
    %3696 = vrot.lane.b32.xlu0 %v1769, 108
    %v3697 = vpop.permute.xlu0 %3696
    %v3700 = vsel %vm1930, %v3694, 0
    %3702 = vmatprep.subr.mxu0 0.0
    %3703 = vmatpush1.msra.mxu0 %v3697
    %3704 = vmatprep.subr.mxu0 0.0
    %3705 = vmatpush1.msra.mxu0 0.0
    %3706 = vmatprep.subr.mxu0 0.0
    %3707 = vmatpush1.msra.mxu0 0.0
    %3708 = vmatprep.subr.mxu0 0.0
    %3709 = vmatpush1.msra.mxu0 0.0
    %3710 = vmatprep.subr.mxu0 0.0
    %3711 = vmatpush1.msra.mxu0 0.0
    %3712 = vmatprep.subr.mxu0 0.0
    %3713 = vmatpush1.msra.mxu0 0.0
    %3714 = vmatprep.subr.mxu0 0.0
    %3715 = vmatpush1.msra.mxu0 0.0
    %3716 = vmatprep.subr.mxu0 0.0
    %3717 = vmatpush1.msra.mxu0 0.0
    %3718 = vmatprep.subr.mxu0 0.0
    %3719 = vmatpush1.msra.mxu0 0.0
    %3720 = vmatprep.subr.mxu0 0.0
    %3721 = vmatpush1.msra.mxu0 0.0
    %3722 = vmatprep.subr.mxu0 0.0
    %3723 = vmatpush1.msra.mxu0 0.0
    %3724 = vmatprep.subr.mxu0 0.0
    %3725 = vmatpush1.msra.mxu0 0.0
    %3726 = vmatprep.subr.mxu0 0.0
    %3727 = vmatpush1.msra.mxu0 0.0
    %3728 = vmatprep.subr.mxu0 0.0
    %3729 = vmatpush1.msra.mxu0 0.0
    %3730 = vmatprep.subr.mxu0 0.0
    %3731 = vmatpush1.msra.mxu0 0.0
    %3732 = vmatprep.subr.mxu0 0.0
    %3733 = vmatpush1.msra.mxu0 0.0
    %3734 = vmatprep.subr.mxu0 0.0
    %3735 = vmatpush1.msra.mxu0 0.0
    %3736 = vmatprep.subr.mxu0 0.0
    %3737 = vmatpush1.msra.mxu0 0.0
    %3738 = vmatprep.subr.mxu0 0.0
    %3739 = vmatpush1.msra.mxu0 0.0
    %3740 = vmatprep.subr.mxu0 0.0
    %3741 = vmatpush1.msra.mxu0 0.0
    %3742 = vmatprep.subr.mxu0 0.0
    %3743 = vmatpush1.msra.mxu0 0.0
    %3744 = vmatprep.subr.mxu0 0.0
    %3745 = vmatpush1.msra.mxu0 0.0
    %3746 = vmatprep.subr.mxu0 0.0
    %3747 = vmatpush1.msra.mxu0 0.0
    %3748 = vmatprep.subr.mxu0 0.0
    %3749 = vmatpush1.msra.mxu0 0.0
    %3750 = vmatprep.subr.mxu0 0.0
    %3751 = vmatpush1.msra.mxu0 0.0
    %3752 = vmatprep.subr.mxu0 0.0
    %3753 = vmatpush1.msra.mxu0 0.0
    %3754 = vmatprep.subr.mxu0 0.0
    %3755 = vmatpush1.msra.mxu0 0.0
    %3756 = vmatprep.subr.mxu0 0.0
    %3757 = vmatpush1.msra.mxu0 0.0
    %3758 = vmatprep.subr.mxu0 0.0
    %3759 = vmatpush1.msra.mxu0 0.0
    %3760 = vmatprep.subr.mxu0 0.0
    %3761 = vmatpush1.msra.mxu0 0.0
    %3762 = vmatprep.subr.mxu0 0.0
    %3763 = vmatpush1.msra.mxu0 0.0
    %3764 = vmatprep.subr.mxu0 0.0
    %3765 = vmatpush1.msra.mxu0 0.0
    %3766 = vmatprep.mubr.f32.mxu0 0.0
    %3767 = vmatmul.mubr.f32.gmra.mrb[0].mxu0 %v3700
    %v3768 = vpop.f32.mrb[0].mxu0
    %v3769 = vadd.f32 0.0, %v3768
    %v3770 = vpop.f32.mrb[0].mxu0
    %3771 = vdwg.mxu0
    %3772 = vrot.lane.b32.xlu0 %v1774, 108
    %v3773 = vpop.permute.xlu0 %3772
    %v3776 = vsel %vm1930, %v3695, 0
    %3778 = vmatprep.subr.mxu0 0.0
    %3779 = vmatpush1.msra.mxu0 %v3773
    %3780 = vmatprep.subr.mxu0 0.0
    %3781 = vmatpush1.msra.mxu0 0.0
    %3782 = vmatprep.subr.mxu0 0.0
    %3783 = vmatpush1.msra.mxu0 0.0
    %3784 = vmatprep.subr.mxu0 0.0
    %3785 = vmatpush1.msra.mxu0 0.0
    %3786 = vmatprep.subr.mxu0 0.0
    %3787 = vmatpush1.msra.mxu0 0.0
    %3788 = vmatprep.subr.mxu0 0.0
    %3789 = vmatpush1.msra.mxu0 0.0
    %3790 = vmatprep.subr.mxu0 0.0
    %3791 = vmatpush1.msra.mxu0 0.0
    %3792 = vmatprep.subr.mxu0 0.0
    %3793 = vmatpush1.msra.mxu0 0.0
    %3794 = vmatprep.subr.mxu0 0.0
    %3795 = vmatpush1.msra.mxu0 0.0
    %3796 = vmatprep.subr.mxu0 0.0
    %3797 = vmatpush1.msra.mxu0 0.0
    %3798 = vmatprep.subr.mxu0 0.0
    %3799 = vmatpush1.msra.mxu0 0.0
    %3800 = vmatprep.subr.mxu0 0.0
    %3801 = vmatpush1.msra.mxu0 0.0
    %3802 = vmatprep.subr.mxu0 0.0
    %3803 = vmatpush1.msra.mxu0 0.0
    %3804 = vmatprep.subr.mxu0 0.0
    %3805 = vmatpush1.msra.mxu0 0.0
    %3806 = vmatprep.subr.mxu0 0.0
    %3807 = vmatpush1.msra.mxu0 0.0
    %3808 = vmatprep.subr.mxu0 0.0
    %3809 = vmatpush1.msra.mxu0 0.0
    %3810 = vmatprep.subr.mxu0 0.0
    %3811 = vmatpush1.msra.mxu0 0.0
    %3812 = vmatprep.subr.mxu0 0.0
    %3813 = vmatpush1.msra.mxu0 0.0
    %3814 = vmatprep.subr.mxu0 0.0
    %3815 = vmatpush1.msra.mxu0 0.0
    %3816 = vmatprep.subr.mxu0 0.0
    %3817 = vmatpush1.msra.mxu0 0.0
    %3818 = vmatprep.subr.mxu0 0.0
    %3819 = vmatpush1.msra.mxu0 0.0
    %3820 = vmatprep.subr.mxu0 0.0
    %3821 = vmatpush1.msra.mxu0 0.0
    %3822 = vmatprep.subr.mxu0 0.0
    %3823 = vmatpush1.msra.mxu0 0.0
    %3824 = vmatprep.subr.mxu0 0.0
    %3825 = vmatpush1.msra.mxu0 0.0
    %3826 = vmatprep.subr.mxu0 0.0
    %3827 = vmatpush1.msra.mxu0 0.0
    %3828 = vmatprep.subr.mxu0 0.0
    %3829 = vmatpush1.msra.mxu0 0.0
    %3830 = vmatprep.subr.mxu0 0.0
    %3831 = vmatpush1.msra.mxu0 0.0
    %3832 = vmatprep.subr.mxu0 0.0
    %3833 = vmatpush1.msra.mxu0 0.0
    %3834 = vmatprep.subr.mxu0 0.0
    %3835 = vmatpush1.msra.mxu0 0.0
    %3836 = vmatprep.subr.mxu0 0.0
    %3837 = vmatpush1.msra.mxu0 0.0
    %3838 = vmatprep.subr.mxu0 0.0
    %3839 = vmatpush1.msra.mxu0 0.0
    %3840 = vmatprep.subr.mxu0 0.0
    %3841 = vmatpush1.msra.mxu0 0.0
    %3842 = vmatprep.mubr.f32.mxu0 0.0
    %3843 = vmatmul.mubr.f32.gmra.mrb[0].mxu0 %v3776
    %v3844 = vpop.f32.mrb[0].mxu0
    %v3845 = vadd.f32 0.0, %v3844
    %v3846 = vpop.f32.mrb[0].mxu0
    %3847 = vdwg.mxu0
    %3848 = vrot.lane.b32.xlu0 %v1603, 104
    %v3849 = vpop.permute.xlu0 %3848
    %3850 = vrot.lane.b32.xlu0 %v1683, 104
    %v3851 = vpop.permute.xlu0 %3850
    %v3852 = vsel %vm1777, %v3849, 0
    %v3854 = vsel %vm1777, %v3851, 0
    %3856 = vmatprep.subr.mxu0 0.0
    %3857 = vmatpush1.xpose.msra.mxu0 %v3854
    %3858 = vmatprep.subr.mxu0 0.0
    %3859 = vmatpush1.xpose.msra.mxu0 0.0
    %3860 = vmatprep.subr.mxu0 0.0
    %3861 = vmatpush1.xpose.msra.mxu0 0.0
    %3862 = vmatprep.subr.mxu0 0.0
    %3863 = vmatpush1.xpose.msra.mxu0 0.0
    %3864 = vmatprep.subr.mxu0 0.0
    %3865 = vmatpush1.xpose.msra.mxu0 0.0
    %3866 = vmatprep.subr.mxu0 0.0
    %3867 = vmatpush1.xpose.msra.mxu0 0.0
    %3868 = vmatprep.subr.mxu0 0.0
    %3869 = vmatpush1.xpose.msra.mxu0 0.0
    %3870 = vmatprep.subr.mxu0 0.0
    %3871 = vmatpush1.xpose.msra.mxu0 0.0
    %3872 = vmatprep.subr.mxu0 0.0
    %3873 = vmatpush1.xpose.msra.mxu0 0.0
    %3874 = vmatprep.subr.mxu0 0.0
    %3875 = vmatpush1.xpose.msra.mxu0 0.0
    %3876 = vmatprep.subr.mxu0 0.0
    %3877 = vmatpush1.xpose.msra.mxu0 0.0
    %3878 = vmatprep.subr.mxu0 0.0
    %3879 = vmatpush1.xpose.msra.mxu0 0.0
    %3880 = vmatprep.subr.mxu0 0.0
    %3881 = vmatpush1.xpose.msra.mxu0 0.0
    %3882 = vmatprep.subr.mxu0 0.0
    %3883 = vmatpush1.xpose.msra.mxu0 0.0
    %3884 = vmatprep.subr.mxu0 0.0
    %3885 = vmatpush1.xpose.msra.mxu0 0.0
    %3886 = vmatprep.subr.mxu0 0.0
    %3887 = vmatpush1.xpose.msra.mxu0 0.0
    %3888 = vmatprep.subr.mxu0 0.0
    %3889 = vmatpush1.xpose.msra.mxu0 0.0
    %3890 = vmatprep.subr.mxu0 0.0
    %3891 = vmatpush1.xpose.msra.mxu0 0.0
    %3892 = vmatprep.subr.mxu0 0.0
    %3893 = vmatpush1.xpose.msra.mxu0 0.0
    %3894 = vmatprep.subr.mxu0 0.0
    %3895 = vmatpush1.xpose.msra.mxu0 0.0
    %3896 = vmatprep.subr.mxu0 0.0
    %3897 = vmatpush1.xpose.msra.mxu0 0.0
    %3898 = vmatprep.subr.mxu0 0.0
    %3899 = vmatpush1.xpose.msra.mxu0 0.0
    %3900 = vmatprep.subr.mxu0 0.0
    %3901 = vmatpush1.xpose.msra.mxu0 0.0
    %3902 = vmatprep.subr.mxu0 0.0
    %3903 = vmatpush1.xpose.msra.mxu0 0.0
    %3904 = vmatprep.subr.mxu0 0.0
    %3905 = vmatpush1.xpose.msra.mxu0 0.0
    %3906 = vmatprep.subr.mxu0 0.0
    %3907 = vmatpush1.xpose.msra.mxu0 0.0
    %3908 = vmatprep.subr.mxu0 0.0
    %3909 = vmatpush1.xpose.msra.mxu0 0.0
    %3910 = vmatprep.subr.mxu0 0.0
    %3911 = vmatpush1.xpose.msra.mxu0 0.0
    %3912 = vmatprep.subr.mxu0 0.0
    %3913 = vmatpush1.xpose.msra.mxu0 0.0
    %3914 = vmatprep.subr.mxu0 0.0
    %3915 = vmatpush1.xpose.msra.mxu0 0.0
    %3916 = vmatprep.subr.mxu0 0.0
    %3917 = vmatpush1.xpose.msra.mxu0 0.0
    %3918 = vmatprep.subr.mxu0 0.0
    %3919 = vmatpush1.xpose.msra.mxu0 0.0
    %3920 = vmatprep.mubr.f32.mxu0 0.0
    %3921 = vmatmul.mubr.f32.gmra.mrb[0].mxu0 %v3852
    %v3922 = vpop.f32.mrb[0].mxu0
    %v3923 = vadd.f32 0.0, %v3922
    %v3924 = vpop.f32.mrb[0].mxu0
    %3925 = vdwg.mxu0
    %3926 = vrot.lane.b32.xlu0 %v1604, 104
    %v3927 = vpop.permute.xlu0 %3926
    %3928 = vrot.lane.b32.xlu0 %v1688, 104
    %v3929 = vpop.permute.xlu0 %3928
    %v3930 = vsel %vm1777, %v3927, 0
    %v3932 = vsel %vm1777, %v3929, 0
    %3934 = vmatprep.subr.mxu0 0.0
    %3935 = vmatpush1.xpose.msra.mxu0 %v3932
    %3936 = vmatprep.subr.mxu0 0.0
    %3937 = vmatpush1.xpose.msra.mxu0 0.0
    %3938 = vmatprep.subr.mxu0 0.0
    %3939 = vmatpush1.xpose.msra.mxu0 0.0
    %3940 = vmatprep.subr.mxu0 0.0
    %3941 = vmatpush1.xpose.msra.mxu0 0.0
    %3942 = vmatprep.subr.mxu0 0.0
    %3943 = vmatpush1.xpose.msra.mxu0 0.0
    %3944 = vmatprep.subr.mxu0 0.0
    %3945 = vmatpush1.xpose.msra.mxu0 0.0
    %3946 = vmatprep.subr.mxu0 0.0
    %3947 = vmatpush1.xpose.msra.mxu0 0.0
    %3948 = vmatprep.subr.mxu0 0.0
    %3949 = vmatpush1.xpose.msra.mxu0 0.0
    %3950 = vmatprep.subr.mxu0 0.0
    %3951 = vmatpush1.xpose.msra.mxu0 0.0
    %3952 = vmatprep.subr.mxu0 0.0
    %3953 = vmatpush1.xpose.msra.mxu0 0.0
    %3954 = vmatprep.subr.mxu0 0.0
    %3955 = vmatpush1.xpose.msra.mxu0 0.0
    %3956 = vmatprep.subr.mxu0 0.0
    %3957 = vmatpush1.xpose.msra.mxu0 0.0
    %3958 = vmatprep.subr.mxu0 0.0
    %3959 = vmatpush1.xpose.msra.mxu0 0.0
    %3960 = vmatprep.subr.mxu0 0.0
    %3961 = vmatpush1.xpose.msra.mxu0 0.0
    %3962 = vmatprep.subr.mxu0 0.0
    %3963 = vmatpush1.xpose.msra.mxu0 0.0
    %3964 = vmatprep.subr.mxu0 0.0
    %3965 = vmatpush1.xpose.msra.mxu0 0.0
    %3966 = vmatprep.subr.mxu0 0.0
    %3967 = vmatpush1.xpose.msra.mxu0 0.0
    %3968 = vmatprep.subr.mxu0 0.0
    %3969 = vmatpush1.xpose.msra.mxu0 0.0
    %3970 = vmatprep.subr.mxu0 0.0
    %3971 = vmatpush1.xpose.msra.mxu0 0.0
    %3972 = vmatprep.subr.mxu0 0.0
    %3973 = vmatpush1.xpose.msra.mxu0 0.0
    %3974 = vmatprep.subr.mxu0 0.0
    %3975 = vmatpush1.xpose.msra.mxu0 0.0
    %3976 = vmatprep.subr.mxu0 0.0
    %3977 = vmatpush1.xpose.msra.mxu0 0.0
    %3978 = vmatprep.subr.mxu0 0.0
    %3979 = vmatpush1.xpose.msra.mxu0 0.0
    %3980 = vmatprep.subr.mxu0 0.0
    %3981 = vmatpush1.xpose.msra.mxu0 0.0
    %3982 = vmatprep.subr.mxu0 0.0
    %3983 = vmatpush1.xpose.msra.mxu0 0.0
    %3984 = vmatprep.subr.mxu0 0.0
    %3985 = vmatpush1.xpose.msra.mxu0 0.0
    %3986 = vmatprep.subr.mxu0 0.0
    %3987 = vmatpush1.xpose.msra.mxu0 0.0
    %3988 = vmatprep.subr.mxu0 0.0
    %3989 = vmatpush1.xpose.msra.mxu0 0.0
    %3990 = vmatprep.subr.mxu0 0.0
    %3991 = vmatpush1.xpose.msra.mxu0 0.0
    %3992 = vmatprep.subr.mxu0 0.0
    %3993 = vmatpush1.xpose.msra.mxu0 0.0
    %3994 = vmatprep.subr.mxu0 0.0
    %3995 = vmatpush1.xpose.msra.mxu0 0.0
    %3996 = vmatprep.subr.mxu0 0.0
    %3997 = vmatpush1.xpose.msra.mxu0 0.0
    %3998 = vmatprep.mubr.f32.mxu0 0.0
    %3999 = vmatmul.mubr.f32.gmra.mrb[0].mxu0 %v3930
    %v4000 = vpop.f32.mrb[0].mxu0
    %v4001 = vadd.f32 0.0, %v4000
    %v4002 = vpop.f32.mrb[0].mxu0
    %4003 = vdwg.mxu0
    %v4004 = vsel %vm1930, %v3923, -inf
    %4005 = vmax.xlane.f32.xlu0 %v4004
    %v4006 = vpop.xlane.xlu0 %4005
    %v4007 = vsel %vm1930, %v4001, -inf
    %4008 = vmax.xlane.f32.xlu0 %v4007
    %v4009 = vpop.xlane.xlu0 %4008
    %v4010 = vsub.f32 %v3923, %v4006
    %v4011 = vsub.f32 %v4001, %v4009
    %v4012 = vmul.f32 %v4010, 1.442695
    %v4013 = vpow.pop %v4012
    %v4014 = vmul.f32 %v4011, 1.442695
    %v4015 = vpow.pop %v4014
    %v4016 = vsel %vm1930, %v4013, 0.0
    %4017 = vadd.xlane.f32.xlu0 %v4016
    %v4018 = vpop.xlane.xlu0 %4017
    %v4019 = vsel %vm1930, %v4015, 0.0
    %4020 = vadd.xlane.f32.xlu0 %v4019
    %v4021 = vpop.xlane.xlu0 %4020
    %v4022 = vrcp.pop %v4018
    %v4023 = vmul.f32 %v4013, %v4022
    %v4024 = vrcp.pop %v4021
    %v4025 = vmul.f32 %v4015, %v4024
    %v4026 = vsel %vm1930, %v4023, 0.0
    %v4027 = vrot.slane %v4026, 4
    %v4028 = vadd.f32 %v4026, %v4027
    %v4029 = vrot.slane %v4028, 2
    %v4030 = vadd.f32 %v4028, %v4029
    %v4031 = vrot.slane %v4030, 1
    %v4032 = vadd.f32 %v4030, %v4031
    %v4033 = vsel %vm1930, %v4025, 0.0
    %v4034 = vrot.slane %v4033, 4
    %v4035 = vadd.f32 %v4033, %v4034
    %v4036 = vrot.slane %v4035, 2
    %v4037 = vadd.f32 %v4035, %v4036
    %v4038 = vrot.slane %v4037, 1
    %v4039 = vadd.f32 %v4037, %v4038
    %v4040 = vmul.f32 %v4032, %v1967
    %v4041 = vmul.f32 %v4039, %v1967
    %4042 = vrot.lane.b32.xlu0 %v1769, 104
    %v4043 = vpop.permute.xlu0 %4042
    %v4046 = vsel %vm1930, %v4040, 0
    %4048 = vmatprep.subr.mxu0 0.0
    %4049 = vmatpush1.msra.mxu0 %v4043
    %4050 = vmatprep.subr.mxu0 0.0
    %4051 = vmatpush1.msra.mxu0 0.0
    %4052 = vmatprep.subr.mxu0 0.0
    %4053 = vmatpush1.msra.mxu0 0.0
    %4054 = vmatprep.subr.mxu0 0.0
    %4055 = vmatpush1.msra.mxu0 0.0
    %4056 = vmatprep.subr.mxu0 0.0
    %4057 = vmatpush1.msra.mxu0 0.0
    %4058 = vmatprep.subr.mxu0 0.0
    %4059 = vmatpush1.msra.mxu0 0.0
    %4060 = vmatprep.subr.mxu0 0.0
    %4061 = vmatpush1.msra.mxu0 0.0
    %4062 = vmatprep.subr.mxu0 0.0
    %4063 = vmatpush1.msra.mxu0 0.0
    %4064 = vmatprep.subr.mxu0 0.0
    %4065 = vmatpush1.msra.mxu0 0.0
    %4066 = vmatprep.subr.mxu0 0.0
    %4067 = vmatpush1.msra.mxu0 0.0
    %4068 = vmatprep.subr.mxu0 0.0
    %4069 = vmatpush1.msra.mxu0 0.0
    %4070 = vmatprep.subr.mxu0 0.0
    %4071 = vmatpush1.msra.mxu0 0.0
    %4072 = vmatprep.subr.mxu0 0.0
    %4073 = vmatpush1.msra.mxu0 0.0
    %4074 = vmatprep.subr.mxu0 0.0
    %4075 = vmatpush1.msra.mxu0 0.0
    %4076 = vmatprep.subr.mxu0 0.0
    %4077 = vmatpush1.msra.mxu0 0.0
    %4078 = vmatprep.subr.mxu0 0.0
    %4079 = vmatpush1.msra.mxu0 0.0
    %4080 = vmatprep.subr.mxu0 0.0
    %4081 = vmatpush1.msra.mxu0 0.0
    %4082 = vmatprep.subr.mxu0 0.0
    %4083 = vmatpush1.msra.mxu0 0.0
    %4084 = vmatprep.subr.mxu0 0.0
    %4085 = vmatpush1.msra.mxu0 0.0
    %4086 = vmatprep.subr.mxu0 0.0
    %4087 = vmatpush1.msra.mxu0 0.0
    %4088 = vmatprep.subr.mxu0 0.0
    %4089 = vmatpush1.msra.mxu0 0.0
    %4090 = vmatprep.subr.mxu0 0.0
    %4091 = vmatpush1.msra.mxu0 0.0
    %4092 = vmatprep.subr.mxu0 0.0
    %4093 = vmatpush1.msra.mxu0 0.0
    %4094 = vmatprep.subr.mxu0 0.0
    %4095 = vmatpush1.msra.mxu0 0.0
    %4096 = vmatprep.subr.mxu0 0.0
    %4097 = vmatpush1.msra.mxu0 0.0
    %4098 = vmatprep.subr.mxu0 0.0
    %4099 = vmatpush1.msra.mxu0 0.0
    %4100 = vmatprep.subr.mxu0 0.0
    %4101 = vmatpush1.msra.mxu0 0.0
    %4102 = vmatprep.subr.mxu0 0.0
    %4103 = vmatpush1.msra.mxu0 0.0
    %4104 = vmatprep.subr.mxu0 0.0
    %4105 = vmatpush1.msra.mxu0 0.0
    %4106 = vmatprep.subr.mxu0 0.0
    %4107 = vmatpush1.msra.mxu0 0.0
    %4108 = vmatprep.subr.mxu0 0.0
    %4109 = vmatpush1.msra.mxu0 0.0
    %4110 = vmatprep.subr.mxu0 0.0
    %4111 = vmatpush1.msra.mxu0 0.0
    %4112 = vmatprep.mubr.f32.mxu0 0.0
    %4113 = vmatmul.mubr.f32.gmra.mrb[0].mxu0 %v4046
    %v4114 = vpop.f32.mrb[0].mxu0
    %v4115 = vadd.f32 0.0, %v4114
    %v4116 = vpop.f32.mrb[0].mxu0
    %4117 = vdwg.mxu0
    %4118 = vrot.lane.b32.xlu0 %v1774, 104
    %v4119 = vpop.permute.xlu0 %4118
    %v4122 = vsel %vm1930, %v4041, 0
    %4124 = vmatprep.subr.mxu0 0.0
    %4125 = vmatpush1.msra.mxu0 %v4119
    %4126 = vmatprep.subr.mxu0 0.0
    %4127 = vmatpush1.msra.mxu0 0.0
    %4128 = vmatprep.subr.mxu0 0.0
    %4129 = vmatpush1.msra.mxu0 0.0
    %4130 = vmatprep.subr.mxu0 0.0
    %4131 = vmatpush1.msra.mxu0 0.0
    %4132 = vmatprep.subr.mxu0 0.0
    %4133 = vmatpush1.msra.mxu0 0.0
    %4134 = vmatprep.subr.mxu0 0.0
    %4135 = vmatpush1.msra.mxu0 0.0
    %4136 = vmatprep.subr.mxu0 0.0
    %4137 = vmatpush1.msra.mxu0 0.0
    %4138 = vmatprep.subr.mxu0 0.0
    %4139 = vmatpush1.msra.mxu0 0.0
    %4140 = vmatprep.subr.mxu0 0.0
    %4141 = vmatpush1.msra.mxu0 0.0
    %4142 = vmatprep.subr.mxu0 0.0
    %4143 = vmatpush1.msra.mxu0 0.0
    %4144 = vmatprep.subr.mxu0 0.0
    %4145 = vmatpush1.msra.mxu0 0.0
    %4146 = vmatprep.subr.mxu0 0.0
    %4147 = vmatpush1.msra.mxu0 0.0
    %4148 = vmatprep.subr.mxu0 0.0
    %4149 = vmatpush1.msra.mxu0 0.0
    %4150 = vmatprep.subr.mxu0 0.0
    %4151 = vmatpush1.msra.mxu0 0.0
    %4152 = vmatprep.subr.mxu0 0.0
    %4153 = vmatpush1.msra.mxu0 0.0
    %4154 = vmatprep.subr.mxu0 0.0
    %4155 = vmatpush1.msra.mxu0 0.0
    %4156 = vmatprep.subr.mxu0 0.0
    %4157 = vmatpush1.msra.mxu0 0.0
    %4158 = vmatprep.subr.mxu0 0.0
    %4159 = vmatpush1.msra.mxu0 0.0
    %4160 = vmatprep.subr.mxu0 0.0
    %4161 = vmatpush1.msra.mxu0 0.0
    %4162 = vmatprep.subr.mxu0 0.0
    %4163 = vmatpush1.msra.mxu0 0.0
    %4164 = vmatprep.subr.mxu0 0.0
    %4165 = vmatpush1.msra.mxu0 0.0
    %4166 = vmatprep.subr.mxu0 0.0
    %4167 = vmatpush1.msra.mxu0 0.0
    %4168 = vmatprep.subr.mxu0 0.0
    %4169 = vmatpush1.msra.mxu0 0.0
    %4170 = vmatprep.subr.mxu0 0.0
    %4171 = vmatpush1.msra.mxu0 0.0
    %4172 = vmatprep.subr.mxu0 0.0
    %4173 = vmatpush1.msra.mxu0 0.0
    %4174 = vmatprep.subr.mxu0 0.0
    %4175 = vmatpush1.msra.mxu0 0.0
    %4176 = vmatprep.subr.mxu0 0.0
    %4177 = vmatpush1.msra.mxu0 0.0
    %4178 = vmatprep.subr.mxu0 0.0
    %4179 = vmatpush1.msra.mxu0 0.0
    %4180 = vmatprep.subr.mxu0 0.0
    %4181 = vmatpush1.msra.mxu0 0.0
    %4182 = vmatprep.subr.mxu0 0.0
    %4183 = vmatpush1.msra.mxu0 0.0
    %4184 = vmatprep.subr.mxu0 0.0
    %4185 = vmatpush1.msra.mxu0 0.0
    %4186 = vmatprep.subr.mxu0 0.0
    %4187 = vmatpush1.msra.mxu0 0.0
    %4188 = vmatprep.mubr.f32.mxu0 0.0
    %4189 = vmatmul.mubr.f32.gmra.mrb[0].mxu0 %v4122
    %v4190 = vpop.f32.mrb[0].mxu0
    %v4191 = vadd.f32 0.0, %v4190
    %v4192 = vpop.f32.mrb[0].mxu0
    %4193 = vdwg.mxu0
    %4194 = vrot.lane.b32.xlu0 %v1603, 100
    %v4195 = vpop.permute.xlu0 %4194
    %4196 = vrot.lane.b32.xlu0 %v1683, 100
    %v4197 = vpop.permute.xlu0 %4196
    %v4198 = vsel %vm1777, %v4195, 0
    %v4200 = vsel %vm1777, %v4197, 0
    %4202 = vmatprep.subr.mxu0 0.0
    %4203 = vmatpush1.xpose.msra.mxu0 %v4200
    %4204 = vmatprep.subr.mxu0 0.0
    %4205 = vmatpush1.xpose.msra.mxu0 0.0
    %4206 = vmatprep.subr.mxu0 0.0
    %4207 = vmatpush1.xpose.msra.mxu0 0.0
    %4208 = vmatprep.subr.mxu0 0.0
    %4209 = vmatpush1.xpose.msra.mxu0 0.0
    %4210 = vmatprep.subr.mxu0 0.0
    %4211 = vmatpush1.xpose.msra.mxu0 0.0
    %4212 = vmatprep.subr.mxu0 0.0
    %4213 = vmatpush1.xpose.msra.mxu0 0.0
    %4214 = vmatprep.subr.mxu0 0.0
    %4215 = vmatpush1.xpose.msra.mxu0 0.0
    %4216 = vmatprep.subr.mxu0 0.0
    %4217 = vmatpush1.xpose.msra.mxu0 0.0
    %4218 = vmatprep.subr.mxu0 0.0
    %4219 = vmatpush1.xpose.msra.mxu0 0.0
    %4220 = vmatprep.subr.mxu0 0.0
    %4221 = vmatpush1.xpose.msra.mxu0 0.0
    %4222 = vmatprep.subr.mxu0 0.0
    %4223 = vmatpush1.xpose.msra.mxu0 0.0
    %4224 = vmatprep.subr.mxu0 0.0
    %4225 = vmatpush1.xpose.msra.mxu0 0.0
    %4226 = vmatprep.subr.mxu0 0.0
    %4227 = vmatpush1.xpose.msra.mxu0 0.0
    %4228 = vmatprep.subr.mxu0 0.0
    %4229 = vmatpush1.xpose.msra.mxu0 0.0
    %4230 = vmatprep.subr.mxu0 0.0
    %4231 = vmatpush1.xpose.msra.mxu0 0.0
    %4232 = vmatprep.subr.mxu0 0.0
    %4233 = vmatpush1.xpose.msra.mxu0 0.0
    %4234 = vmatprep.subr.mxu0 0.0
    %4235 = vmatpush1.xpose.msra.mxu0 0.0
    %4236 = vmatprep.subr.mxu0 0.0
    %4237 = vmatpush1.xpose.msra.mxu0 0.0
    %4238 = vmatprep.subr.mxu0 0.0
    %4239 = vmatpush1.xpose.msra.mxu0 0.0
    %4240 = vmatprep.subr.mxu0 0.0
    %4241 = vmatpush1.xpose.msra.mxu0 0.0
    %4242 = vmatprep.subr.mxu0 0.0
    %4243 = vmatpush1.xpose.msra.mxu0 0.0
    %4244 = vmatprep.subr.mxu0 0.0
    %4245 = vmatpush1.xpose.msra.mxu0 0.0
    %4246 = vmatprep.subr.mxu0 0.0
    %4247 = vmatpush1.xpose.msra.mxu0 0.0
    %4248 = vmatprep.subr.mxu0 0.0
    %4249 = vmatpush1.xpose.msra.mxu0 0.0
    %4250 = vmatprep.subr.mxu0 0.0
    %4251 = vmatpush1.xpose.msra.mxu0 0.0
    %4252 = vmatprep.subr.mxu0 0.0
    %4253 = vmatpush1.xpose.msra.mxu0 0.0
    %4254 = vmatprep.subr.mxu0 0.0
    %4255 = vmatpush1.xpose.msra.mxu0 0.0
    %4256 = vmatprep.subr.mxu0 0.0
    %4257 = vmatpush1.xpose.msra.mxu0 0.0
    %4258 = vmatprep.subr.mxu0 0.0
    %4259 = vmatpush1.xpose.msra.mxu0 0.0
    %4260 = vmatprep.subr.mxu0 0.0
    %4261 = vmatpush1.xpose.msra.mxu0 0.0
    %4262 = vmatprep.subr.mxu0 0.0
    %4263 = vmatpush1.xpose.msra.mxu0 0.0
    %4264 = vmatprep.subr.mxu0 0.0
    %4265 = vmatpush1.xpose.msra.mxu0 0.0
    %4266 = vmatprep.mubr.f32.mxu0 0.0
    %4267 = vmatmul.mubr.f32.gmra.mrb[0].mxu0 %v4198
    %v4268 = vpop.f32.mrb[0].mxu0
    %v4269 = vadd.f32 0.0, %v4268
    %v4270 = vpop.f32.mrb[0].mxu0
    %4271 = vdwg.mxu0
    %4272 = vrot.lane.b32.xlu0 %v1604, 100
    %v4273 = vpop.permute.xlu0 %4272
    %4274 = vrot.lane.b32.xlu0 %v1688, 100
    %v4275 = vpop.permute.xlu0 %4274
    %v4276 = vsel %vm1777, %v4273, 0
    %v4278 = vsel %vm1777, %v4275, 0
    %4280 = vmatprep.subr.mxu0 0.0
    %4281 = vmatpush1.xpose.msra.mxu0 %v4278
    %4282 = vmatprep.subr.mxu0 0.0
    %4283 = vmatpush1.xpose.msra.mxu0 0.0
    %4284 = vmatprep.subr.mxu0 0.0
    %4285 = vmatpush1.xpose.msra.mxu0 0.0
    %4286 = vmatprep.subr.mxu0 0.0
    %4287 = vmatpush1.xpose.msra.mxu0 0.0
    %4288 = vmatprep.subr.mxu0 0.0
    %4289 = vmatpush1.xpose.msra.mxu0 0.0
    %4290 = vmatprep.subr.mxu0 0.0
    %4291 = vmatpush1.xpose.msra.mxu0 0.0
    %4292 = vmatprep.subr.mxu0 0.0
    %4293 = vmatpush1.xpose.msra.mxu0 0.0
    %4294 = vmatprep.subr.mxu0 0.0
    %4295 = vmatpush1.xpose.msra.mxu0 0.0
    %4296 = vmatprep.subr.mxu0 0.0
    %4297 = vmatpush1.xpose.msra.mxu0 0.0
    %4298 = vmatprep.subr.mxu0 0.0
    %4299 = vmatpush1.xpose.msra.mxu0 0.0
    %4300 = vmatprep.subr.mxu0 0.0
    %4301 = vmatpush1.xpose.msra.mxu0 0.0
    %4302 = vmatprep.subr.mxu0 0.0
    %4303 = vmatpush1.xpose.msra.mxu0 0.0
    %4304 = vmatprep.subr.mxu0 0.0
    %4305 = vmatpush1.xpose.msra.mxu0 0.0
    %4306 = vmatprep.subr.mxu0 0.0
    %4307 = vmatpush1.xpose.msra.mxu0 0.0
    %4308 = vmatprep.subr.mxu0 0.0
    %4309 = vmatpush1.xpose.msra.mxu0 0.0
    %4310 = vmatprep.subr.mxu0 0.0
    %4311 = vmatpush1.xpose.msra.mxu0 0.0
    %4312 = vmatprep.subr.mxu0 0.0
    %4313 = vmatpush1.xpose.msra.mxu0 0.0
    %4314 = vmatprep.subr.mxu0 0.0
    %4315 = vmatpush1.xpose.msra.mxu0 0.0
    %4316 = vmatprep.subr.mxu0 0.0
    %4317 = vmatpush1.xpose.msra.mxu0 0.0
    %4318 = vmatprep.subr.mxu0 0.0
    %4319 = vmatpush1.xpose.msra.mxu0 0.0
    %4320 = vmatprep.subr.mxu0 0.0
    %4321 = vmatpush1.xpose.msra.mxu0 0.0
    %4322 = vmatprep.subr.mxu0 0.0
    %4323 = vmatpush1.xpose.msra.mxu0 0.0
    %4324 = vmatprep.subr.mxu0 0.0
    %4325 = vmatpush1.xpose.msra.mxu0 0.0
    %4326 = vmatprep.subr.mxu0 0.0
    %4327 = vmatpush1.xpose.msra.mxu0 0.0
    %4328 = vmatprep.subr.mxu0 0.0
    %4329 = vmatpush1.xpose.msra.mxu0 0.0
    %4330 = vmatprep.subr.mxu0 0.0
    %4331 = vmatpush1.xpose.msra.mxu0 0.0
    %4332 = vmatprep.subr.mxu0 0.0
    %4333 = vmatpush1.xpose.msra.mxu0 0.0
    %4334 = vmatprep.subr.mxu0 0.0
    %4335 = vmatpush1.xpose.msra.mxu0 0.0
    %4336 = vmatprep.subr.mxu0 0.0
    %4337 = vmatpush1.xpose.msra.mxu0 0.0
    %4338 = vmatprep.subr.mxu0 0.0
    %4339 = vmatpush1.xpose.msra.mxu0 0.0
    %4340 = vmatprep.subr.mxu0 0.0
    %4341 = vmatpush1.xpose.msra.mxu0 0.0
    %4342 = vmatprep.subr.mxu0 0.0
    %4343 = vmatpush1.xpose.msra.mxu0 0.0
    %4344 = vmatprep.mubr.f32.mxu0 0.0
    %4345 = vmatmul.mubr.f32.gmra.mrb[0].mxu0 %v4276
    %v4346 = vpop.f32.mrb[0].mxu0
    %v4347 = vadd.f32 0.0, %v4346
    %v4348 = vpop.f32.mrb[0].mxu0
    %4349 = vdwg.mxu0
    %v4350 = vsel %vm1930, %v4269, -inf
    %4351 = vmax.xlane.f32.xlu0 %v4350
    %v4352 = vpop.xlane.xlu0 %4351
    %v4353 = vsel %vm1930, %v4347, -inf
    %4354 = vmax.xlane.f32.xlu0 %v4353
    %v4355 = vpop.xlane.xlu0 %4354
    %v4356 = vsub.f32 %v4269, %v4352
    %v4357 = vsub.f32 %v4347, %v4355
    %v4358 = vmul.f32 %v4356, 1.442695
    %v4359 = vpow.pop %v4358
    %v4360 = vmul.f32 %v4357, 1.442695
    %v4361 = vpow.pop %v4360
    %v4362 = vsel %vm1930, %v4359, 0.0
    %4363 = vadd.xlane.f32.xlu0 %v4362
    %v4364 = vpop.xlane.xlu0 %4363
    %v4365 = vsel %vm1930, %v4361, 0.0
    %4366 = vadd.xlane.f32.xlu0 %v4365
    %v4367 = vpop.xlane.xlu0 %4366
    %v4368 = vrcp.pop %v4364
    %v4369 = vmul.f32 %v4359, %v4368
    %v4370 = vrcp.pop %v4367
    %v4371 = vmul.f32 %v4361, %v4370
    %v4372 = vsel %vm1930, %v4369, 0.0
    %v4373 = vrot.slane %v4372, 4
    %v4374 = vadd.f32 %v4372, %v4373
    %v4375 = vrot.slane %v4374, 2
    %v4376 = vadd.f32 %v4374, %v4375
    %v4377 = vrot.slane %v4376, 1
    %v4378 = vadd.f32 %v4376, %v4377
    %v4379 = vsel %vm1930, %v4371, 0.0
    %v4380 = vrot.slane %v4379, 4
    %v4381 = vadd.f32 %v4379, %v4380
    %v4382 = vrot.slane %v4381, 2
    %v4383 = vadd.f32 %v4381, %v4382
    %v4384 = vrot.slane %v4383, 1
    %v4385 = vadd.f32 %v4383, %v4384
    %v4386 = vmul.f32 %v4378, %v1967
    %v4387 = vmul.f32 %v4385, %v1967
    %4388 = vrot.lane.b32.xlu0 %v1769, 100
    %v4389 = vpop.permute.xlu0 %4388
    %v4392 = vsel %vm1930, %v4386, 0
    %4394 = vmatprep.subr.mxu0 0.0
    %4395 = vmatpush1.msra.mxu0 %v4389
    %4396 = vmatprep.subr.mxu0 0.0
    %4397 = vmatpush1.msra.mxu0 0.0
    %4398 = vmatprep.subr.mxu0 0.0
    %4399 = vmatpush1.msra.mxu0 0.0
    %4400 = vmatprep.subr.mxu0 0.0
    %4401 = vmatpush1.msra.mxu0 0.0
    %4402 = vmatprep.subr.mxu0 0.0
    %4403 = vmatpush1.msra.mxu0 0.0
    %4404 = vmatprep.subr.mxu0 0.0
    %4405 = vmatpush1.msra.mxu0 0.0
    %4406 = vmatprep.subr.mxu0 0.0
    %4407 = vmatpush1.msra.mxu0 0.0
    %4408 = vmatprep.subr.mxu0 0.0
    %4409 = vmatpush1.msra.mxu0 0.0
    %4410 = vmatprep.subr.mxu0 0.0
    %4411 = vmatpush1.msra.mxu0 0.0
    %4412 = vmatprep.subr.mxu0 0.0
    %4413 = vmatpush1.msra.mxu0 0.0
    %4414 = vmatprep.subr.mxu0 0.0
    %4415 = vmatpush1.msra.mxu0 0.0
    %4416 = vmatprep.subr.mxu0 0.0
    %4417 = vmatpush1.msra.mxu0 0.0
    %4418 = vmatprep.subr.mxu0 0.0
    %4419 = vmatpush1.msra.mxu0 0.0
    %4420 = vmatprep.subr.mxu0 0.0
    %4421 = vmatpush1.msra.mxu0 0.0
    %4422 = vmatprep.subr.mxu0 0.0
    %4423 = vmatpush1.msra.mxu0 0.0
    %4424 = vmatprep.subr.mxu0 0.0
    %4425 = vmatpush1.msra.mxu0 0.0
    %4426 = vmatprep.subr.mxu0 0.0
    %4427 = vmatpush1.msra.mxu0 0.0
    %4428 = vmatprep.subr.mxu0 0.0
    %4429 = vmatpush1.msra.mxu0 0.0
    %4430 = vmatprep.subr.mxu0 0.0
    %4431 = vmatpush1.msra.mxu0 0.0
    %4432 = vmatprep.subr.mxu0 0.0
    %4433 = vmatpush1.msra.mxu0 0.0
    %4434 = vmatprep.subr.mxu0 0.0
    %4435 = vmatpush1.msra.mxu0 0.0
    %4436 = vmatprep.subr.mxu0 0.0
    %4437 = vmatpush1.msra.mxu0 0.0
    %4438 = vmatprep.subr.mxu0 0.0
    %4439 = vmatpush1.msra.mxu0 0.0
    %4440 = vmatprep.subr.mxu0 0.0
    %4441 = vmatpush1.msra.mxu0 0.0
    %4442 = vmatprep.subr.mxu0 0.0
    %4443 = vmatpush1.msra.mxu0 0.0
    %4444 = vmatprep.subr.mxu0 0.0
    %4445 = vmatpush1.msra.mxu0 0.0
    %4446 = vmatprep.subr.mxu0 0.0
    %4447 = vmatpush1.msra.mxu0 0.0
    %4448 = vmatprep.subr.mxu0 0.0
    %4449 = vmatpush1.msra.mxu0 0.0
    %4450 = vmatprep.subr.mxu0 0.0
    %4451 = vmatpush1.msra.mxu0 0.0
    %4452 = vmatprep.subr.mxu0 0.0
    %4453 = vmatpush1.msra.mxu0 0.0
    %4454 = vmatprep.subr.mxu0 0.0
    %4455 = vmatpush1.msra.mxu0 0.0
    %4456 = vmatprep.subr.mxu0 0.0
    %4457 = vmatpush1.msra.mxu0 0.0
    %4458 = vmatprep.mubr.f32.mxu0 0.0
    %4459 = vmatmul.mubr.f32.gmra.mrb[0].mxu0 %v4392
    %v4460 = vpop.f32.mrb[0].mxu0
    %v4461 = vadd.f32 0.0, %v4460
    %v4462 = vpop.f32.mrb[0].mxu0
    %4463 = vdwg.mxu0
    %4464 = vrot.lane.b32.xlu0 %v1774, 100
    %v4465 = vpop.permute.xlu0 %4464
    %v4468 = vsel %vm1930, %v4387, 0
    %4470 = vmatprep.subr.mxu0 0.0
    %4471 = vmatpush1.msra.mxu0 %v4465
    %4472 = vmatprep.subr.mxu0 0.0
    %4473 = vmatpush1.msra.mxu0 0.0
    %4474 = vmatprep.subr.mxu0 0.0
    %4475 = vmatpush1.msra.mxu0 0.0
    %4476 = vmatprep.subr.mxu0 0.0
    %4477 = vmatpush1.msra.mxu0 0.0
    %4478 = vmatprep.subr.mxu0 0.0
    %4479 = vmatpush1.msra.mxu0 0.0
    %4480 = vmatprep.subr.mxu0 0.0
    %4481 = vmatpush1.msra.mxu0 0.0
    %4482 = vmatprep.subr.mxu0 0.0
    %4483 = vmatpush1.msra.mxu0 0.0
    %4484 = vmatprep.subr.mxu0 0.0
    %4485 = vmatpush1.msra.mxu0 0.0
    %4486 = vmatprep.subr.mxu0 0.0
    %4487 = vmatpush1.msra.mxu0 0.0
    %4488 = vmatprep.subr.mxu0 0.0
    %4489 = vmatpush1.msra.mxu0 0.0
    %4490 = vmatprep.subr.mxu0 0.0
    %4491 = vmatpush1.msra.mxu0 0.0
    %4492 = vmatprep.subr.mxu0 0.0
    %4493 = vmatpush1.msra.mxu0 0.0
    %4494 = vmatprep.subr.mxu0 0.0
    %4495 = vmatpush1.msra.mxu0 0.0
    %4496 = vmatprep.subr.mxu0 0.0
    %4497 = vmatpush1.msra.mxu0 0.0
    %4498 = vmatprep.subr.mxu0 0.0
    %4499 = vmatpush1.msra.mxu0 0.0
    %4500 = vmatprep.subr.mxu0 0.0
    %4501 = vmatpush1.msra.mxu0 0.0
    %4502 = vmatprep.subr.mxu0 0.0
    %4503 = vmatpush1.msra.mxu0 0.0
    %4504 = vmatprep.subr.mxu0 0.0
    %4505 = vmatpush1.msra.mxu0 0.0
    %4506 = vmatprep.subr.mxu0 0.0
    %4507 = vmatpush1.msra.mxu0 0.0
    %4508 = vmatprep.subr.mxu0 0.0
    %4509 = vmatpush1.msra.mxu0 0.0
    %4510 = vmatprep.subr.mxu0 0.0
    %4511 = vmatpush1.msra.mxu0 0.0
    %4512 = vmatprep.subr.mxu0 0.0
    %4513 = vmatpush1.msra.mxu0 0.0
    %4514 = vmatprep.subr.mxu0 0.0
    %4515 = vmatpush1.msra.mxu0 0.0
    %4516 = vmatprep.subr.mxu0 0.0
    %4517 = vmatpush1.msra.mxu0 0.0
    %4518 = vmatprep.subr.mxu0 0.0
    %4519 = vmatpush1.msra.mxu0 0.0
    %4520 = vmatprep.subr.mxu0 0.0
    %4521 = vmatpush1.msra.mxu0 0.0
    %4522 = vmatprep.subr.mxu0 0.0
    %4523 = vmatpush1.msra.mxu0 0.0
    %4524 = vmatprep.subr.mxu0 0.0
    %4525 = vmatpush1.msra.mxu0 0.0
    %4526 = vmatprep.subr.mxu0 0.0
    %4527 = vmatpush1.msra.mxu0 0.0
    %4528 = vmatprep.subr.mxu0 0.0
    %4529 = vmatpush1.msra.mxu0 0.0
    %4530 = vmatprep.subr.mxu0 0.0
    %4531 = vmatpush1.msra.mxu0 0.0
    %4532 = vmatprep.subr.mxu0 0.0
    %4533 = vmatpush1.msra.mxu0 0.0
    %4534 = vmatprep.mubr.f32.mxu0 0.0
    %4535 = vmatmul.mubr.f32.gmra.mrb[0].mxu0 %v4468
    %v4536 = vpop.f32.mrb[0].mxu0
    %v4537 = vadd.f32 0.0, %v4536
    %v4538 = vpop.f32.mrb[0].mxu0
    %4539 = vdwg.mxu0
    %v4542 = vrot.slane %v2113, 7
    %v4543 = vsel %vm294, %v4542, %v2040
    %v4547 = vrot.slane %v2461, 7
    %v4548 = vsel %vm294, %v4547, %v2384
    %4549 = vrot.lane.b32.xlu0 %v4548, 4
    %v4550 = vpop.permute.xlu0 %4549
    %v4554 = vrot.slane %v2807, 7
    %v4555 = vsel %vm294, %v4554, %v2731
    %4556 = vrot.lane.b32.xlu0 %v4555, 8
    %v4557 = vpop.permute.xlu0 %4556
    %v4561 = vrot.slane %v3153, 7
    %v4562 = vsel %vm294, %v4561, %v3077
    %4563 = vrot.lane.b32.xlu0 %v4562, 12
    %v4564 = vpop.permute.xlu0 %4563
    %v4568 = vrot.slane %v3499, 7
    %v4569 = vsel %vm294, %v4568, %v3423
    %4570 = vrot.lane.b32.xlu0 %v4569, 16
    %v4571 = vpop.permute.xlu0 %4570
    %v4575 = vrot.slane %v3845, 7
    %v4576 = vsel %vm294, %v4575, %v3769
    %4577 = vrot.lane.b32.xlu0 %v4576, 20
    %v4578 = vpop.permute.xlu0 %4577
    %v4582 = vrot.slane %v4191, 7
    %v4583 = vsel %vm294, %v4582, %v4115
    %4584 = vrot.lane.b32.xlu0 %v4583, 24
    %v4585 = vpop.permute.xlu0 %4584
    %v4589 = vrot.slane %v4537, 7
    %v4590 = vsel %vm294, %v4589, %v4461
    %4591 = vrot.lane.b32.xlu0 %v4590, 28
    %v4592 = vpop.permute.xlu0 %4591
    %v4594 = vsel %vm1777, %v4543, %v4550
    %v4595 = vsel %vm1930, %v4594, %v4557
    %vm4596 = vcmask 97280
    %v4597 = vsel %vm4596, %v4595, %v4564
    %v4598 = vsel %vm72, %v4597, %v4571
    %vm4599 = vcmask 162816
    %v4600 = vsel %vm4599, %v4598, %v4578
    %vm4601 = vcmask 195584
    %v4602 = vsel %vm4601, %v4600, %v4585
    %vm4603 = vcmask 228352
    %v4604 = vsel %vm4603, %v4602, %v4592
    %v4605 = vld [vmem:[%s14] sm:$0xff]
    %v4606 = vld [vmem:[%s14 + $0x8] sm:$0xff]
    %v4607 = vld [vmem:[%s14 + $0x10] sm:$0xff]
    %v4608 = vld [vmem:[%s14 + $0x18] sm:$0xff]
    %v4609 = vld [vmem:[%s15] sm:$0x1]
    %v4611 = vlaneseq
    %v4612 = vshrl.u32 %v4611, 7
    %v4613 = vsub.s32 0, %v4612
    %v4614 = vrot.slane %v4609, %v4613
    %v4617 = vsel %vm154, %v4604, 0
    %4619 = vmatprep.subr.mxu0 0.0
    %4620 = vmatpush1.msra.mxu0 %v4605
    %4621 = vmatprep.subr.mxu0 0.0
    %4622 = vmatpush1.msra.mxu0 %v4606
    %4623 = vmatprep.subr.mxu0 0.0
    %4624 = vmatpush1.msra.mxu0 %v4607
    %4625 = vmatprep.subr.mxu0 0.0
    %4626 = vmatpush1.msra.mxu0 %v4608
    %4627 = vmatprep.subr.mxu0 0.0
    %4628 = vmatpush1.msra.mxu0 0.0
    %4629 = vmatprep.subr.mxu0 0.0
    %4630 = vmatpush1.msra.mxu0 0.0
    %4631 = vmatprep.subr.mxu0 0.0
    %4632 = vmatpush1.msra.mxu0 0.0
    %4633 = vmatprep.subr.mxu0 0.0
    %4634 = vmatpush1.msra.mxu0 0.0
    %4635 = vmatprep.subr.mxu0 0.0
    %4636 = vmatpush1.msra.mxu0 0.0
    %4637 = vmatprep.subr.mxu0 0.0
    %4638 = vmatpush1.msra.mxu0 0.0
    %4639 = vmatprep.subr.mxu0 0.0
    %4640 = vmatpush1.msra.mxu0 0.0
    %4641 = vmatprep.subr.mxu0 0.0
    %4642 = vmatpush1.msra.mxu0 0.0
    %4643 = vmatprep.subr.mxu0 0.0
    %4644 = vmatpush1.msra.mxu0 0.0
    %4645 = vmatprep.subr.mxu0 0.0
    %4646 = vmatpush1.msra.mxu0 0.0
    %4647 = vmatprep.subr.mxu0 0.0
    %4648 = vmatpush1.msra.mxu0 0.0
    %4649 = vmatprep.subr.mxu0 0.0
    %4650 = vmatpush1.msra.mxu0 0.0
    %4651 = vmatprep.subr.mxu0 0.0
    %4652 = vmatpush1.msra.mxu0 0.0
    %4653 = vmatprep.subr.mxu0 0.0
    %4654 = vmatpush1.msra.mxu0 0.0
    %4655 = vmatprep.subr.mxu0 0.0
    %4656 = vmatpush1.msra.mxu0 0.0
    %4657 = vmatprep.subr.mxu0 0.0
    %4658 = vmatpush1.msra.mxu0 0.0
    %4659 = vmatprep.subr.mxu0 0.0
    %4660 = vmatpush1.msra.mxu0 0.0
    %4661 = vmatprep.subr.mxu0 0.0
    %4662 = vmatpush1.msra.mxu0 0.0
    %4663 = vmatprep.subr.mxu0 0.0
    %4664 = vmatpush1.msra.mxu0 0.0
    %4665 = vmatprep.subr.mxu0 0.0
    %4666 = vmatpush1.msra.mxu0 0.0
    %4667 = vmatprep.subr.mxu0 0.0
    %4668 = vmatpush1.msra.mxu0 0.0
    %4669 = vmatprep.subr.mxu0 0.0
    %4670 = vmatpush1.msra.mxu0 0.0
    %4671 = vmatprep.subr.mxu0 0.0
    %4672 = vmatpush1.msra.mxu0 0.0
    %4673 = vmatprep.subr.mxu0 0.0
    %4674 = vmatpush1.msra.mxu0 0.0
    %4675 = vmatprep.subr.mxu0 0.0
    %4676 = vmatpush1.msra.mxu0 0.0
    %4677 = vmatprep.subr.mxu0 0.0
    %4678 = vmatpush1.msra.mxu0 0.0
    %4679 = vmatprep.subr.mxu0 0.0
    %4680 = vmatpush1.msra.mxu0 0.0
    %4681 = vmatprep.subr.mxu0 0.0
    %4682 = vmatpush1.msra.mxu0 0.0
    %4683 = vmatprep.mubr.f32.mxu0 0.0
    %4684 = vmatmul.mubr.f32.gmra.mrb[0].mxu0 %v4617
    %v4685 = vpop.f32.mrb[0].mxu0
    %v4686 = vadd.f32 %v4614, %v4685
    %v4687 = vpop.f32.mrb[0].mxu0
    %4688 = vdwg.mxu0
    %4690 = vrot.lane.b32.xlu0 %v4686, 32
    %v4691 = vpop.permute.xlu0 %4690
    %v4693 = vsel %vm154, %v1504, %v4691
    %vm4694 = vcmask 517120
    %4695 = vst.msk [vmem:[#allocation3] sm:$0x3] %vm4694, %v4693
    // Predicated region
    $region66: #{unimodal_attention_forward.1} parent=1 // pred_check
      _
    $region67: #{unimodal_attention_forward.1} parent=1 // pred_check_branch
      %4697 = sbr.rel (0) target = $region69
    $region68: #{unimodal_attention_forward.1} parent=1 // pred_region
      %s4699 = ssub.s32 32, 32
      %4700 = vsyncadd [#allocation4], %s4699
      %s4702 = sshll.u32 [#allocation3], 4
      %s4703 = int_to_ptr.vmem [resolvable:$true] %s4702
      %4705 = dma.vmem_to_hbm [thread:$0]  %s4703, 32, %s16, [#allocation4]
    $region69: #{unimodal_attention_forward.1} parent=1 // pred_fallthru
      _
    // Predicated region
    $region70: #{unimodal_attention_forward.1} parent=1 // pred_check
      _
    $region71: #{unimodal_attention_forward.1} parent=1 // pred_check_branch
      %4707 = sbr.rel (0) target = $region73
    $region72: #{unimodal_attention_forward.1} parent=1 // pred_region
      %s4709 = ssub.s32 32, 32
      %4710 = vsyncadd [#allocation6], %s4709
      %s4712 = sshll.u32 [#allocation5], 4
      %s4713 = int_to_ptr.vmem [resolvable:$true] %s4712
      %4715 = dma.vmem_to_hbm [thread:$0]  %s4713, 32, %s17, [#allocation6]
    $region73: #{unimodal_attention_forward.1} parent=1 // pred_fallthru
      _
    // Predicated region
    $region74: #{unimodal_attention_forward.1} parent=1 // pred_check
      _
    $region75: #{unimodal_attention_forward.1} parent=1 // pred_check_branch
      %4717 = sbr.rel (0) target = $region77
    $region76: #{unimodal_attention_forward.1} parent=1 // pred_region
      %4718 = dma.done [#allocation4], 32
    $region77: #{unimodal_attention_forward.1} parent=1 // pred_fallthru
      _
    // Predicated region
    $region78: #{unimodal_attention_forward.1} parent=1 // pred_check
      _
    $region79: #{unimodal_attention_forward.1} parent=1 // pred_check_branch
      %4720 = sbr.rel (0) target = $region81
    $region80: #{unimodal_attention_forward.1} parent=1 // pred_region
      %4721 = dma.done [#allocation6], 32
    $region81: #{unimodal_attention_forward.1} parent=1 // pred_fallthru
      _
    %4722 = vsyncpa [#allocation4], 1
    %4723 = vsyncpa [#allocation6], 1

</llo_original>
